<compile_context>
chip_gen: v6e
topology: v6e:2x2x1
jax: 0.10.0
libtpu: 0.0.40
codegen_flags: <defaults>
</compile_context>

<pallas_src>
import functools

import jax
import jax.numpy as jnp
from jax import lax
from jax.experimental import pallas as pl
from jax.experimental.pallas import tpu as pltpu

LEAKY_ALPHA = 0.2            # leaky-relu slope used by SpGAT (alpha=0.2)
_MASKED = -1e30              # "minus infinity" for non-edge logits


@functools.lru_cache(maxsize=None)
def _vmem_limit_bytes():
    """~75% of the chip's VMEM: ~48 MiB on v7x (64 MiB), ~96 MiB on v5e/v6e (128 MiB)."""
    try:
        cap = getattr(pltpu.get_tpu_info(), "vmem_capacity_bytes", None)
    except Exception:
        cap = None
    if not cap:
        cap = 64 * 1024 * 1024
    return int(min(cap * 3 // 4, 96 * 1024 * 1024))


def _pick_block_rows(n):
    """Default row tile: multiple of 8, capped at 256, and >=2 row blocks when
    possible so the 'parallel' grid axis can use both v7x TensorCores."""
    if n <= 8:
        return n
    tm = min(256, (n // 8) * 8)
    if tm >= n:
        tm = max(8, ((n // 2) // 8) * 8)
    return tm


# ---------------------------------------------------------------------------
# Pallas kernels
# ---------------------------------------------------------------------------
def _gat_attention_kernel(adj_ref, f1_ref, f2t_ref, h_aug_ref, out_ref):
    """All attention heads of one Sp-GAT stage for one block of output rows.

    adj_ref:   [tm, n]            int8 edge mask for this row block
    f1_ref:    [tm, nheads]       f32   x @ (W a1)       (row block)
    f2t_ref:   [>=nheads, n]      f32   (x @ (W a2))^T   (full, grid-invariant)
    h_aug_ref: [n, nheads*h + 1]  bf16  [x @ W_all | 1]  (full, grid-invariant)
    out_ref:   [tm, nheads*h]     f32   ELU(attention output), heads concatenated
    """
    nheads = f1_ref.shape[1]
    h_dim = out_ref.shape[1] // nheads
    den_col = h_aug_ref.shape[1] - 1            # index of the appended ones column

    mask = adj_ref[...] != 0                    # [tm, n]
    f1 = f1_ref[...]                            # [tm, nheads]
    f2t = f2t_ref[...]                          # [pad, n]
    h_aug = h_aug_ref[...]                      # [n, nheads*h+1] bf16

    for hd in range(nheads):                    # static unroll (4 or 1 heads)
        logits = f1[:, hd:hd + 1] + f2t[hd:hd + 1, :]            # [tm, n]
        # -leakyrelu(x) == min(-x, -alpha*x) for 0 < alpha < 1.
        neg = jnp.minimum(-logits, -LEAKY_ALPHA * logits)
        neg = jnp.where(mask, neg, _MASKED)                      # non-edges -> exp == 0
        # No row-max shift: matches the (unshifted) PyTorch reference; logits are
        # data-bounded.  bf16 exp -> 2x EUP throughput on v6e/v7x.
        e = jnp.exp(neg.astype(jnp.bfloat16))                    # [tm, n] bf16
        # One MXU pass gives numerator AND denominator: the ones column of h_aug
        # makes the last output lane sum_j e_ij.  Extra head columns are free --
        # the whole output fits within one MXU pass width (65 <= 128/256 lanes).
        num_den = jnp.dot(e, h_aug, preferred_element_type=jnp.float32)
        den = jnp.maximum(num_den[:, den_col:den_col + 1], 1e-20)   # isolated-row guard
        h_prime = (num_den[:, hd * h_dim:(hd + 1) * h_dim]
                   * pl.reciprocal(den, approx=True))
        # ELU, stored straight into this head's lane slice (no concat shuffles).
        # TODO(synk): expm1 would be marginally more accurate for small |x|.
        out_ref[:, hd * h_dim:(hd + 1) * h_dim] = jnp.where(
            h_prime > 0, h_prime, jnp.exp(h_prime) - 1.0)


def _inner_product_decoder_kernel(zi_ref, zj_ref, out_ref):
    """sigmoid(z_i . z_j) for one (i, j) output tile; z.T is never materialised."""
    logits = lax.dot_general(zi_ref[...], zj_ref[...], (((1,), (1,)), ((), ())),
                             preferred_element_type=jnp.float32)
    out_ref[...] = jax.nn.sigmoid(logits).astype(out_ref.dtype)


# ---------------------------------------------------------------------------
# Wrappers
# ---------------------------------------------------------------------------
def gat_stage(x, adj_i8, w_all, wa1_all, wa2_all, *, block_rows=None):
    """One fused multi-head (or single out-attention) GAT stage."""
    n = x.shape[0]
    nheads = wa1_all.shape[1]
    nhh = w_all.shape[1]                       # nheads * h_dim

    # Grid-invariant projections, hoisted out of the kernel (one XLA MXU pass
    # each, not re-done per grid step).  h_aug carries an extra ones column so
    # the in-kernel aggregation matmul also yields the softmax denominator.
    h_aug = jnp.concatenate(
        [jnp.dot(x, w_all), jnp.ones((n, 1), jnp.float32)], axis=1
    ).astype(jnp.bfloat16)                                          # [n, nhh+1] bf16
    f1 = jnp.dot(x, wa1_all)                                        # [n, nheads]
    f2t = jnp.dot(x, wa2_all).T                                     # [nheads, n]
    pad = (-nheads) % 8                                             # sublane-align rows
    if pad:
        f2t = jnp.concatenate([f2t, jnp.zeros((pad, n), f2t.dtype)], axis=0)

    tm = _pick_block_rows(n) if block_rows is None else min(block_rows, n)
    grid = (pl.cdiv(n, tm),)
    return pl.pallas_call(
        _gat_attention_kernel,
        out_shape=jax.ShapeDtypeStruct((n, nhh), jnp.float32),
        grid=grid,
        in_specs=[
            pl.BlockSpec((tm, n), lambda i: (i, 0)),            # int8 adjacency row block
            pl.BlockSpec((tm, nheads), lambda i: (i, 0)),       # f1 row block
            # Grid-invariant inputs (constant block index -> DMA'd only once).
            # TODO(synk): pipeline_mode=pl.Buffered(1) would halve their VMEM
            # footprint; for very large graphs add a column-tiled online-softmax
            # grid axis instead of keeping full [tm, N] e rows resident.
            pl.BlockSpec(f2t.shape, lambda i: (0, 0)),          # (x @ W a2)^T, full
            pl.BlockSpec(h_aug.shape, lambda i: (0, 0)),        # [x @ W_all | 1], full bf16
        ],
        out_specs=pl.BlockSpec((tm, nhh), lambda i: (i, 0)),
        compiler_params=pltpu.CompilerParams(
            dimension_semantics=("parallel",),                  # both TCs on v7x
            vmem_limit_bytes=_vmem_limit_bytes(),
        ),
    )(adj_i8, f1, f2t, h_aug)


def inner_product_decoder(z, *, block_rows=256, block_cols=512,
                          out_dtype=jnp.float32):
    """sigmoid(z @ z.T) with lane-dense column tiles.  The decoder is HBM-write
    bound (K = hidden2); pass out_dtype=jnp.bfloat16 to halve writeback if the
    consumer tolerates it (kept f32 by default to match the reference)."""
    n, d = z.shape
    tm = min(block_rows, n)
    tn = min(block_cols, n)
    grid = (pl.cdiv(n, tm), pl.cdiv(n, tn))
    return pl.pallas_call(
        _inner_product_decoder_kernel,
        out_shape=jax.ShapeDtypeStruct((n, n), out_dtype),
        grid=grid,
        in_specs=[
            pl.BlockSpec((tm, d), lambda i, j: (i, 0)),
            pl.BlockSpec((tn, d), lambda i, j: (j, 0)),
        ],
        out_specs=pl.BlockSpec((tm, tn), lambda i, j: (i, j)),
        compiler_params=pltpu.CompilerParams(
            dimension_semantics=("parallel", "parallel"),
            vmem_limit_bytes=_vmem_limit_bytes(),
        ),
    )(z, z)


def spgat_forward(x, adj_i8, layer, *, block_rows=None):
    """SpGAT: fused 4-head attention (concat + ELU) then out-attention + ELU.
    Dropout layers are identity in eval mode.  # TODO(synk): training-mode dropout omitted."""
    h = gat_stage(x, adj_i8, layer["w_heads"], layer["wa1_heads"],
                  layer["wa2_heads"], block_rows=block_rows)
    return gat_stage(h, adj_i8, layer["w_out"], layer["wa1_out"],
                     layer["wa2_out"], block_rows=block_rows)


def preprocess_adjacency(adj):
    """0/1 int8 edge mask; build ONCE outside the jitted forward (4x less HBM)."""
    return (adj != 0).astype(jnp.int8)


def daegce_forward(x, adj_i8, params, *, block_rows=None):
    """DAEGCE.forward: z = gc2(gc1(x, adj), adj); return sigmoid(z z^T)."""
    h1 = spgat_forward(x, adj_i8, params["gc1"], block_rows=block_rows)
    z = spgat_forward(h1, adj_i8, params["gc2"], block_rows=block_rows)
    return inner_product_decoder(z)


# ---------------------------------------------------------------------------
# Parameter init (xavier_normal, gain=1.414 as in pyGAT) + packing for kernels
# ---------------------------------------------------------------------------
def _xavier_normal(key, shape, gain=1.414):
    fan_in, fan_out = shape[0], shape[1]
    std = gain * (2.0 / (fan_in + fan_out)) ** 0.5
    return std * jax.random.normal(key, shape, dtype=jnp.float32)


def init_attention_layer(key, in_dim, out_dim):
    kw, ka = jax.random.split(key)
    w = _xavier_normal(kw, (in_dim, out_dim))
    a = _xavier_normal(ka, (1, 2 * out_dim))     # matches nn.Parameter(1, 2*D)
    a1 = a[:, :out_dim].T                        # [D, 1]
    a2 = a[:, out_dim:].T                        # [D, 1]
    return (w, a1, a2)


def init_spgat(key, nfeat, nhid, nclass, nheads):
    keys = jax.random.split(key, nheads + 1)
    heads = [init_attention_layer(keys[i], nfeat, nhid) for i in range(nheads)]
    out = init_attention_layer(keys[-1], nhid * nheads, nclass)
    return {"heads": heads, "out": out}


def init_daegce(key, input_feat_dim, hidden_dim1, hidden_dim2, n_clusters, nheads=4):
    k1, k2, kmu = jax.random.split(key, 3)
    return {
        "gc1": init_spgat(k1, input_feat_dim, hidden_dim1, hidden_dim1, nheads),
        "gc2": init_spgat(k2, hidden_dim1, hidden_dim2, hidden_dim2, nheads),
        # mu_c is a module parameter (unused in forward)
        "mu_c": _xavier_normal(kmu, (n_clusters, hidden_dim2), gain=1.0),
    }


def _pack_spgat(raw):
    """Stack head weights and pre-fold a1/a2 (Wa1 = W@a1, Wa2 = W@a2)."""
    heads, (w_o, a1_o, a2_o) = raw["heads"], raw["out"]
    return {
        "w_heads": jnp.concatenate([w for (w, _, _) in heads], axis=1),          # [F, 4H]
        "wa1_heads": jnp.concatenate([w @ a1 for (w, a1, _) in heads], axis=1),  # [F, 4]
        "wa2_heads": jnp.concatenate([w @ a2 for (w, _, a2) in heads], axis=1),  # [F, 4]
        "w_out": w_o,
        "wa1_out": w_o @ a1_o,
        "wa2_out": w_o @ a2_o,
    }


def pack_daegce_params(raw):
    return {"gc1": _pack_spgat(raw["gc1"]), "gc2": _pack_spgat(raw["gc2"])}


# ---------------------------------------------------------------------------
if __name__ == "__main__":
    key = jax.random.PRNGKey(0)
    kx, kadj, kparams = jax.random.split(key, 3)

    # small graph: 64 nodes, 32 input features, hidden1=16, hidden2=8, 4 heads
    N, F_IN, H1, H2, NHEADS, NCLUSTERS = 64, 32, 16, 8, 4, 5

    x = jax.random.normal(kx, (N, F_IN), dtype=jnp.float32)

    # random symmetric sparse adjacency with self-loops
    adj = (jax.random.uniform(kadj, (N, N)) < 0.1).astype(jnp.float32)
    adj = jnp.maximum(adj, adj.T)
    adj = adj.at[jnp.arange(N), jnp.arange(N)].set(1.0)

    raw_params = init_daegce(kparams, F_IN, H1, H2, NCLUSTERS, NHEADS)
    packed = pack_daegce_params(raw_params)

    adj_i8 = preprocess_adjacency(adj)           # int8 mask built once, outside the jit

    # block_rows=32 -> 2 row blocks per GAT stage (exercises the parallel grid).
    fwd = jax.jit(functools.partial(daegce_forward, params=packed, block_rows=32))
    pred_adj = fwd(x, adj_i8)
    jax.block_until_ready(pred_adj)

    assert pred_adj.shape == (N, N)
    assert bool(jnp.all(jnp.isfinite(pred_adj)))
    print("KERNEL_OK")
</pallas_src>

<mosaic_0001>
module attributes {stable_mosaic.version = 11 : i64} {
  func.func @_gat_attention_kernel(%arg0: i32, %arg1: memref<32x64xi8, #tpu.memory_space<vmem>>, %arg2: memref<32x4xf32, #tpu.memory_space<vmem>>, %arg3: memref<8x64xf32, #tpu.memory_space<vmem>>, %arg4: memref<64x65xbf16, #tpu.memory_space<vmem>>, %arg5: memref<32x64xf32, #tpu.memory_space<vmem>>) attributes {dimension_semantics = [#tpu.dimension_semantics<parallel>], iteration_bounds = array<i64: 2>, scalar_prefetch = 0 : i64, scratch_operands = 0 : i64, tpu.core_type = #tpu.core_type<tc>, window_params = [{transform_indices = @transform_0, window_bounds = array<i64: 32, 64>}, {transform_indices = @transform_1, window_bounds = array<i64: 32, 4>}, {pipeline_mode = #tpu.pipeline_mode<synchronous>, transform_indices = @transform_2, window_bounds = array<i64: 8, 64>}, {pipeline_mode = #tpu.pipeline_mode<synchronous>, transform_indices = @transform_3, window_bounds = array<i64: 64, 65>}, {transform_indices = @transform_4, window_bounds = array<i64: 32, 64>}]} {
    %c0 = arith.constant 0 : index
    %c0_0 = arith.constant 0 : index
    %0 = vector.load %arg1[%c0, %c0_0] : memref<32x64xi8, #tpu.memory_space<vmem>>, vector<32x64xi8>
    %c0_i8 = arith.constant 0 : i8
    %1 = vector.broadcast %c0_i8 : i8 to vector<32x64xi8>
    %2 = arith.cmpi ne, %0, %1 : vector<32x64xi8>
    %c0_1 = arith.constant 0 : index
    %c0_2 = arith.constant 0 : index
    %3 = vector.load %arg2[%c0_1, %c0_2] : memref<32x4xf32, #tpu.memory_space<vmem>>, vector<32x4xf32>
    %c0_3 = arith.constant 0 : index
    %c0_4 = arith.constant 0 : index
    %4 = vector.load %arg3[%c0_3, %c0_4] : memref<8x64xf32, #tpu.memory_space<vmem>>, vector<8x64xf32>
    %c0_5 = arith.constant 0 : index
    %c0_6 = arith.constant 0 : index
    %5 = vector.load %arg4[%c0_5, %c0_6] : memref<64x65xbf16, #tpu.memory_space<vmem>>, vector<64x65xbf16>
    %6 = vector.extract_strided_slice %3 {offsets = [0, 0], sizes = [32, 1], strides = [1, 1]} : vector<32x4xf32> to vector<32x1xf32>
    %7 = vector.extract_strided_slice %4 {offsets = [0, 0], sizes = [1, 64], strides = [1, 1]} : vector<8x64xf32> to vector<1x64xf32>
    %8 = vector.broadcast %6 : vector<32x1xf32> to vector<32x64xf32>
    %9 = vector.broadcast %7 : vector<1x64xf32> to vector<32x64xf32>
    %10 = arith.addf %8, %9 : vector<32x64xf32>
    %cst = arith.constant 0.000000e+00 : f32
    %11 = vector.broadcast %cst : f32 to vector<32x64xf32>
    %12 = arith.subf %11, %10 : vector<32x64xf32>
    %cst_7 = arith.constant -2.000000e-01 : f32
    %13 = vector.broadcast %cst_7 : f32 to vector<32x64xf32>
    %14 = arith.mulf %13, %10 : vector<32x64xf32>
    %15 = arith.minimumf %12, %14 : vector<32x64xf32>
    %cst_8 = arith.constant -1.000000e+30 : f32
    %16 = vector.broadcast %cst_8 : f32 to vector<32x64xf32>
    %17 = arith.select %2, %15, %16 : vector<32x64xi1>, vector<32x64xf32>
    %18 = arith.truncf %17 : vector<32x64xf32> to vector<32x64xbf16>
    %19 = math.exp %18 : vector<32x64xbf16>
    %cst_9 = arith.constant dense<0.000000e+00> : vector<32x65xf32>
    %20 = tpu.matmul %19, %5, %cst_9 {dimension_numbers = #tpu.dot_dimension_numbers<[1], [0], [0], [1], [0, 0, 1, 1], [], []>} : vector<32x64xbf16>, vector<64x65xbf16>, vector<32x65xf32> -> vector<32x65xf32>
    %21 = vector.extract_strided_slice %20 {offsets = [0, 64], sizes = [32, 1], strides = [1, 1]} : vector<32x65xf32> to vector<32x1xf32>
    %cst_10 = arith.constant 9.99999968E-21 : f32
    %22 = vector.broadcast %cst_10 : f32 to vector<32x1xf32>
    %23 = arith.maximumf %21, %22 : vector<32x1xf32>
    %24 = vector.extract_strided_slice %20 {offsets = [0, 0], sizes = [32, 16], strides = [1, 1]} : vector<32x65xf32> to vector<32x16xf32>
    %25 = tpu.reciprocal %23 {approx = true} : vector<32x1xf32> -> vector<32x1xf32>
    %26 = vector.broadcast %25 : vector<32x1xf32> to vector<32x16xf32>
    %27 = arith.mulf %24, %26 : vector<32x16xf32>
    %cst_11 = arith.constant 0.000000e+00 : f32
    %28 = vector.broadcast %cst_11 : f32 to vector<32x16xf32>
    %29 = arith.cmpf ogt, %27, %28 : vector<32x16xf32>
    %30 = math.exp %27 : vector<32x16xf32>
    %cst_12 = arith.constant 1.000000e+00 : f32
    %31 = vector.broadcast %cst_12 : f32 to vector<32x16xf32>
    %32 = arith.subf %30, %31 : vector<32x16xf32>
    %33 = arith.select %29, %27, %32 : vector<32x16xi1>, vector<32x16xf32>
    %c0_13 = arith.constant 0 : index
    %c0_14 = arith.constant 0 : index
    %34 = vector.load %arg5[%c0_13, %c0_14] : memref<32x64xf32, #tpu.memory_space<vmem>>, vector<32x16xf32>
    tpu.vector_store %arg5[%c0_13, %c0_14], %33 {strides = array<i32>} : memref<32x64xf32, #tpu.memory_space<vmem>>, vector<32x16xf32>,
    %35 = vector.extract_strided_slice %3 {offsets = [0, 1], sizes = [32, 1], strides = [1, 1]} : vector<32x4xf32> to vector<32x1xf32>
    %36 = vector.extract_strided_slice %4 {offsets = [1, 0], sizes = [1, 64], strides = [1, 1]} : vector<8x64xf32> to vector<1x64xf32>
    %37 = vector.broadcast %35 : vector<32x1xf32> to vector<32x64xf32>
    %38 = vector.broadcast %36 : vector<1x64xf32> to vector<32x64xf32>
    %39 = arith.addf %37, %38 : vector<32x64xf32>
    %cst_15 = arith.constant 0.000000e+00 : f32
    %40 = vector.broadcast %cst_15 : f32 to vector<32x64xf32>
    %41 = arith.subf %40, %39 : vector<32x64xf32>
    %cst_16 = arith.constant -2.000000e-01 : f32
    %42 = vector.broadcast %cst_16 : f32 to vector<32x64xf32>
    %43 = arith.mulf %42, %39 : vector<32x64xf32>
    %44 = arith.minimumf %41, %43 : vector<32x64xf32>
    %cst_17 = arith.constant -1.000000e+30 : f32
    %45 = vector.broadcast %cst_17 : f32 to vector<32x64xf32>
    %46 = arith.select %2, %44, %45 : vector<32x64xi1>, vector<32x64xf32>
    %47 = arith.truncf %46 : vector<32x64xf32> to vector<32x64xbf16>
    %48 = math.exp %47 : vector<32x64xbf16>
    %cst_18 = arith.constant dense<0.000000e+00> : vector<32x65xf32>
    %49 = tpu.matmul %48, %5, %cst_18 {dimension_numbers = #tpu.dot_dimension_numbers<[1], [0], [0], [1], [0, 0, 1, 1], [], []>} : vector<32x64xbf16>, vector<64x65xbf16>, vector<32x65xf32> -> vector<32x65xf32>
    %50 = vector.extract_strided_slice %49 {offsets = [0, 64], sizes = [32, 1], strides = [1, 1]} : vector<32x65xf32> to vector<32x1xf32>
    %cst_19 = arith.constant 9.99999968E-21 : f32
    %51 = vector.broadcast %cst_19 : f32 to vector<32x1xf32>
    %52 = arith.maximumf %50, %51 : vector<32x1xf32>
    %53 = vector.extract_strided_slice %49 {offsets = [0, 16], sizes = [32, 16], strides = [1, 1]} : vector<32x65xf32> to vector<32x16xf32>
    %54 = tpu.reciprocal %52 {approx = true} : vector<32x1xf32> -> vector<32x1xf32>
    %55 = vector.broadcast %54 : vector<32x1xf32> to vector<32x16xf32>
    %56 = arith.mulf %53, %55 : vector<32x16xf32>
    %cst_20 = arith.constant 0.000000e+00 : f32
    %57 = vector.broadcast %cst_20 : f32 to vector<32x16xf32>
    %58 = arith.cmpf ogt, %56, %57 : vector<32x16xf32>
    %59 = math.exp %56 : vector<32x16xf32>
    %cst_21 = arith.constant 1.000000e+00 : f32
    %60 = vector.broadcast %cst_21 : f32 to vector<32x16xf32>
    %61 = arith.subf %59, %60 : vector<32x16xf32>
    %62 = arith.select %58, %56, %61 : vector<32x16xi1>, vector<32x16xf32>
    %c0_22 = arith.constant 0 : index
    %c16 = arith.constant 16 : index
    %63 = vector.load %arg5[%c0_22, %c16] : memref<32x64xf32, #tpu.memory_space<vmem>>, vector<32x16xf32>
    tpu.vector_store %arg5[%c0_22, %c16], %62 {strides = array<i32>} : memref<32x64xf32, #tpu.memory_space<vmem>>, vector<32x16xf32>,
    %64 = vector.extract_strided_slice %3 {offsets = [0, 2], sizes = [32, 1], strides = [1, 1]} : vector<32x4xf32> to vector<32x1xf32>
    %65 = vector.extract_strided_slice %4 {offsets = [2, 0], sizes = [1, 64], strides = [1, 1]} : vector<8x64xf32> to vector<1x64xf32>
    %66 = vector.broadcast %64 : vector<32x1xf32> to vector<32x64xf32>
    %67 = vector.broadcast %65 : vector<1x64xf32> to vector<32x64xf32>
    %68 = arith.addf %66, %67 : vector<32x64xf32>
    %cst_23 = arith.constant 0.000000e+00 : f32
    %69 = vector.broadcast %cst_23 : f32 to vector<32x64xf32>
    %70 = arith.subf %69, %68 : vector<32x64xf32>
    %cst_24 = arith.constant -2.000000e-01 : f32
    %71 = vector.broadcast %cst_24 : f32 to vector<32x64xf32>
    %72 = arith.mulf %71, %68 : vector<32x64xf32>
    %73 = arith.minimumf %70, %72 : vector<32x64xf32>
    %cst_25 = arith.constant -1.000000e+30 : f32
    %74 = vector.broadcast %cst_25 : f32 to vector<32x64xf32>
    %75 = arith.select %2, %73, %74 : vector<32x64xi1>, vector<32x64xf32>
    %76 = arith.truncf %75 : vector<32x64xf32> to vector<32x64xbf16>
    %77 = math.exp %76 : vector<32x64xbf16>
    %cst_26 = arith.constant dense<0.000000e+00> : vector<32x65xf32>
    %78 = tpu.matmul %77, %5, %cst_26 {dimension_numbers = #tpu.dot_dimension_numbers<[1], [0], [0], [1], [0, 0, 1, 1], [], []>} : vector<32x64xbf16>, vector<64x65xbf16>, vector<32x65xf32> -> vector<32x65xf32>
    %79 = vector.extract_strided_slice %78 {offsets = [0, 64], sizes = [32, 1], strides = [1, 1]} : vector<32x65xf32> to vector<32x1xf32>
    %cst_27 = arith.constant 9.99999968E-21 : f32
    %80 = vector.broadcast %cst_27 : f32 to vector<32x1xf32>
    %81 = arith.maximumf %79, %80 : vector<32x1xf32>
    %82 = vector.extract_strided_slice %78 {offsets = [0, 32], sizes = [32, 16], strides = [1, 1]} : vector<32x65xf32> to vector<32x16xf32>
    %83 = tpu.reciprocal %81 {approx = true} : vector<32x1xf32> -> vector<32x1xf32>
    %84 = vector.broadcast %83 : vector<32x1xf32> to vector<32x16xf32>
    %85 = arith.mulf %82, %84 : vector<32x16xf32>
    %cst_28 = arith.constant 0.000000e+00 : f32
    %86 = vector.broadcast %cst_28 : f32 to vector<32x16xf32>
    %87 = arith.cmpf ogt, %85, %86 : vector<32x16xf32>
    %88 = math.exp %85 : vector<32x16xf32>
    %cst_29 = arith.constant 1.000000e+00 : f32
    %89 = vector.broadcast %cst_29 : f32 to vector<32x16xf32>
    %90 = arith.subf %88, %89 : vector<32x16xf32>
    %91 = arith.select %87, %85, %90 : vector<32x16xi1>, vector<32x16xf32>
    %c0_30 = arith.constant 0 : index
    %c32 = arith.constant 32 : index
    %92 = vector.load %arg5[%c0_30, %c32] : memref<32x64xf32, #tpu.memory_space<vmem>>, vector<32x16xf32>
    tpu.vector_store %arg5[%c0_30, %c32], %91 {strides = array<i32>} : memref<32x64xf32, #tpu.memory_space<vmem>>, vector<32x16xf32>,
    %93 = vector.extract_strided_slice %3 {offsets = [0, 3], sizes = [32, 1], strides = [1, 1]} : vector<32x4xf32> to vector<32x1xf32>
    %94 = vector.extract_strided_slice %4 {offsets = [3, 0], sizes = [1, 64], strides = [1, 1]} : vector<8x64xf32> to vector<1x64xf32>
    %95 = vector.broadcast %93 : vector<32x1xf32> to vector<32x64xf32>
    %96 = vector.broadcast %94 : vector<1x64xf32> to vector<32x64xf32>
    %97 = arith.addf %95, %96 : vector<32x64xf32>
    %cst_31 = arith.constant 0.000000e+00 : f32
    %98 = vector.broadcast %cst_31 : f32 to vector<32x64xf32>
    %99 = arith.subf %98, %97 : vector<32x64xf32>
    %cst_32 = arith.constant -2.000000e-01 : f32
    %100 = vector.broadcast %cst_32 : f32 to vector<32x64xf32>
    %101 = arith.mulf %100, %97 : vector<32x64xf32>
    %102 = arith.minimumf %99, %101 : vector<32x64xf32>
    %cst_33 = arith.constant -1.000000e+30 : f32
    %103 = vector.broadcast %cst_33 : f32 to vector<32x64xf32>
    %104 = arith.select %2, %102, %103 : vector<32x64xi1>, vector<32x64xf32>
    %105 = arith.truncf %104 : vector<32x64xf32> to vector<32x64xbf16>
    %106 = math.exp %105 : vector<32x64xbf16>
    %cst_34 = arith.constant dense<0.000000e+00> : vector<32x65xf32>
    %107 = tpu.matmul %106, %5, %cst_34 {dimension_numbers = #tpu.dot_dimension_numbers<[1], [0], [0], [1], [0, 0, 1, 1], [], []>} : vector<32x64xbf16>, vector<64x65xbf16>, vector<32x65xf32> -> vector<32x65xf32>
    %108 = vector.extract_strided_slice %107 {offsets = [0, 64], sizes = [32, 1], strides = [1, 1]} : vector<32x65xf32> to vector<32x1xf32>
    %cst_35 = arith.constant 9.99999968E-21 : f32
    %109 = vector.broadcast %cst_35 : f32 to vector<32x1xf32>
    %110 = arith.maximumf %108, %109 : vector<32x1xf32>
    %111 = vector.extract_strided_slice %107 {offsets = [0, 48], sizes = [32, 16], strides = [1, 1]} : vector<32x65xf32> to vector<32x16xf32>
    %112 = tpu.reciprocal %110 {approx = true} : vector<32x1xf32> -> vector<32x1xf32>
    %113 = vector.broadcast %112 : vector<32x1xf32> to vector<32x16xf32>
    %114 = arith.mulf %111, %113 : vector<32x16xf32>
    %cst_36 = arith.constant 0.000000e+00 : f32
    %115 = vector.broadcast %cst_36 : f32 to vector<32x16xf32>
    %116 = arith.cmpf ogt, %114, %115 : vector<32x16xf32>
    %117 = math.exp %114 : vector<32x16xf32>
    %cst_37 = arith.constant 1.000000e+00 : f32
    %118 = vector.broadcast %cst_37 : f32 to vector<32x16xf32>
    %119 = arith.subf %117, %118 : vector<32x16xf32>
    %120 = arith.select %116, %114, %119 : vector<32x16xi1>, vector<32x16xf32>
    %c0_38 = arith.constant 0 : index
    %c48 = arith.constant 48 : index
    %121 = vector.load %arg5[%c0_38, %c48] : memref<32x64xf32, #tpu.memory_space<vmem>>, vector<32x16xf32>
    tpu.vector_store %arg5[%c0_38, %c48], %120 {strides = array<i32>} : memref<32x64xf32, #tpu.memory_space<vmem>>, vector<32x16xf32>,
    return
  }
  func.func @transform_0(%arg0: i32) -> (i32, i32) {
    %c0_i32 = arith.constant 0 : i32
    %c0_i32_0 = arith.constant 0 : i32
    return %arg0, %c0_i32 : i32, i32
  }
  func.func @transform_1(%arg0: i32) -> (i32, i32) {
    %c0_i32 = arith.constant 0 : i32
    %c0_i32_0 = arith.constant 0 : i32
    return %arg0, %c0_i32 : i32, i32
  }
  func.func @transform_2(%arg0: i32) -> (i32, i32) {
    %c0_i32 = arith.constant 0 : i32
    %c0_i32_0 = arith.constant 0 : i32
    %c0_i32_1 = arith.constant 0 : i32
    return %c0_i32, %c0_i32_0 : i32, i32
  }
  func.func @transform_3(%arg0: i32) -> (i32, i32) {
    %c0_i32 = arith.constant 0 : i32
    %c0_i32_0 = arith.constant 0 : i32
    %c0_i32_1 = arith.constant 0 : i32
    return %c0_i32, %c0_i32_0 : i32, i32
  }
  func.func @transform_4(%arg0: i32) -> (i32, i32) {
    %c0_i32 = arith.constant 0 : i32
    %c0_i32_0 = arith.constant 0 : i32
    return %arg0, %c0_i32 : i32, i32
  }
}

module attributes {stable_mosaic.version = 11 : i64} {
  func.func @_gat_attention_kernel(%arg0: i32, %arg1: memref<32x64xi8, #tpu.memory_space<vmem>>, %arg2: memref<32x1xf32, #tpu.memory_space<vmem>>, %arg3: memref<8x64xf32, #tpu.memory_space<vmem>>, %arg4: memref<64x17xbf16, #tpu.memory_space<vmem>>, %arg5: memref<32x16xf32, #tpu.memory_space<vmem>>) attributes {dimension_semantics = [#tpu.dimension_semantics<parallel>], iteration_bounds = array<i64: 2>, scalar_prefetch = 0 : i64, scratch_operands = 0 : i64, tpu.core_type = #tpu.core_type<tc>, window_params = [{transform_indices = @transform_0, window_bounds = array<i64: 32, 64>}, {transform_indices = @transform_1, window_bounds = array<i64: 32, 1>}, {pipeline_mode = #tpu.pipeline_mode<synchronous>, transform_indices = @transform_2, window_bounds = array<i64: 8, 64>}, {pipeline_mode = #tpu.pipeline_mode<synchronous>, transform_indices = @transform_3, window_bounds = array<i64: 64, 17>}, {transform_indices = @transform_4, window_bounds = array<i64: 32, 16>}]} {
    %c0 = arith.constant 0 : index
    %c0_0 = arith.constant 0 : index
    %0 = vector.load %arg1[%c0, %c0_0] : memref<32x64xi8, #tpu.memory_space<vmem>>, vector<32x64xi8>
    %c0_i8 = arith.constant 0 : i8
    %1 = vector.broadcast %c0_i8 : i8 to vector<32x64xi8>
    %2 = arith.cmpi ne, %0, %1 : vector<32x64xi8>
    %c0_1 = arith.constant 0 : index
    %c0_2 = arith.constant 0 : index
    %3 = vector.load %arg2[%c0_1, %c0_2] : memref<32x1xf32, #tpu.memory_space<vmem>>, vector<32x1xf32>
    %c0_3 = arith.constant 0 : index
    %c0_4 = arith.constant 0 : index
    %4 = vector.load %arg3[%c0_3, %c0_4] : memref<8x64xf32, #tpu.memory_space<vmem>>, vector<8x64xf32>
    %c0_5 = arith.constant 0 : index
    %c0_6 = arith.constant 0 : index
    %5 = vector.load %arg4[%c0_5, %c0_6] : memref<64x17xbf16, #tpu.memory_space<vmem>>, vector<64x17xbf16>
    %6 = vector.extract_strided_slice %4 {offsets = [0, 0], sizes = [1, 64], strides = [1, 1]} : vector<8x64xf32> to vector<1x64xf32>
    %7 = vector.broadcast %3 : vector<32x1xf32> to vector<32x64xf32>
    %8 = vector.broadcast %6 : vector<1x64xf32> to vector<32x64xf32>
    %9 = arith.addf %7, %8 : vector<32x64xf32>
    %cst = arith.constant 0.000000e+00 : f32
    %10 = vector.broadcast %cst : f32 to vector<32x64xf32>
    %11 = arith.subf %10, %9 : vector<32x64xf32>
    %cst_7 = arith.constant -2.000000e-01 : f32
    %12 = vector.broadcast %cst_7 : f32 to vector<32x64xf32>
    %13 = arith.mulf %12, %9 : vector<32x64xf32>
    %14 = arith.minimumf %11, %13 : vector<32x64xf32>
    %cst_8 = arith.constant -1.000000e+30 : f32
    %15 = vector.broadcast %cst_8 : f32 to vector<32x64xf32>
    %16 = arith.select %2, %14, %15 : vector<32x64xi1>, vector<32x64xf32>
    %17 = arith.truncf %16 : vector<32x64xf32> to vector<32x64xbf16>
    %18 = math.exp %17 : vector<32x64xbf16>
    %cst_9 = arith.constant dense<0.000000e+00> : vector<32x17xf32>
    %19 = tpu.matmul %18, %5, %cst_9 {dimension_numbers = #tpu.dot_dimension_numbers<[1], [0], [0], [1], [0, 0, 1, 1], [], []>} : vector<32x64xbf16>, vector<64x17xbf16>, vector<32x17xf32> -> vector<32x17xf32>
    %20 = vector.extract_strided_slice %19 {offsets = [0, 16], sizes = [32, 1], strides = [1, 1]} : vector<32x17xf32> to vector<32x1xf32>
    %cst_10 = arith.constant 9.99999968E-21 : f32
    %21 = vector.broadcast %cst_10 : f32 to vector<32x1xf32>
    %22 = arith.maximumf %20, %21 : vector<32x1xf32>
    %23 = vector.extract_strided_slice %19 {offsets = [0, 0], sizes = [32, 16], strides = [1, 1]} : vector<32x17xf32> to vector<32x16xf32>
    %24 = tpu.reciprocal %22 {approx = true} : vector<32x1xf32> -> vector<32x1xf32>
    %25 = vector.broadcast %24 : vector<32x1xf32> to vector<32x16xf32>
    %26 = arith.mulf %23, %25 : vector<32x16xf32>
    %cst_11 = arith.constant 0.000000e+00 : f32
    %27 = vector.broadcast %cst_11 : f32 to vector<32x16xf32>
    %28 = arith.cmpf ogt, %26, %27 : vector<32x16xf32>
    %29 = math.exp %26 : vector<32x16xf32>
    %cst_12 = arith.constant 1.000000e+00 : f32
    %30 = vector.broadcast %cst_12 : f32 to vector<32x16xf32>
    %31 = arith.subf %29, %30 : vector<32x16xf32>
    %32 = arith.select %28, %26, %31 : vector<32x16xi1>, vector<32x16xf32>
    %c0_13 = arith.constant 0 : index
    %c0_14 = arith.constant 0 : index
    %33 = vector.load %arg5[%c0_13, %c0_14] : memref<32x16xf32, #tpu.memory_space<vmem>>, vector<32x16xf32>
    tpu.vector_store %arg5[%c0_13, %c0_14], %32 {strides = array<i32>} : memref<32x16xf32, #tpu.memory_space<vmem>>, vector<32x16xf32>,
    return
  }
  func.func @transform_0(%arg0: i32) -> (i32, i32) {
    %c0_i32 = arith.constant 0 : i32
    %c0_i32_0 = arith.constant 0 : i32
    return %arg0, %c0_i32 : i32, i32
  }
  func.func @transform_1(%arg0: i32) -> (i32, i32) {
    %c0_i32 = arith.constant 0 : i32
    %c0_i32_0 = arith.constant 0 : i32
    return %arg0, %c0_i32 : i32, i32
  }
  func.func @transform_2(%arg0: i32) -> (i32, i32) {
    %c0_i32 = arith.constant 0 : i32
    %c0_i32_0 = arith.constant 0 : i32
    %c0_i32_1 = arith.constant 0 : i32
    return %c0_i32, %c0_i32_0 : i32, i32
  }
  func.func @transform_3(%arg0: i32) -> (i32, i32) {
    %c0_i32 = arith.constant 0 : i32
    %c0_i32_0 = arith.constant 0 : i32
    %c0_i32_1 = arith.constant 0 : i32
    return %c0_i32, %c0_i32_0 : i32, i32
  }
  func.func @transform_4(%arg0: i32) -> (i32, i32) {
    %c0_i32 = arith.constant 0 : i32
    %c0_i32_0 = arith.constant 0 : i32
    return %arg0, %c0_i32 : i32, i32
  }
}

module attributes {stable_mosaic.version = 11 : i64} {
  func.func @_gat_attention_kernel(%arg0: i32, %arg1: memref<32x64xi8, #tpu.memory_space<vmem>>, %arg2: memref<32x4xf32, #tpu.memory_space<vmem>>, %arg3: memref<8x64xf32, #tpu.memory_space<vmem>>, %arg4: memref<64x33xbf16, #tpu.memory_space<vmem>>, %arg5: memref<32x32xf32, #tpu.memory_space<vmem>>) attributes {dimension_semantics = [#tpu.dimension_semantics<parallel>], iteration_bounds = array<i64: 2>, scalar_prefetch = 0 : i64, scratch_operands = 0 : i64, tpu.core_type = #tpu.core_type<tc>, window_params = [{transform_indices = @transform_0, window_bounds = array<i64: 32, 64>}, {transform_indices = @transform_1, window_bounds = array<i64: 32, 4>}, {pipeline_mode = #tpu.pipeline_mode<synchronous>, transform_indices = @transform_2, window_bounds = array<i64: 8, 64>}, {pipeline_mode = #tpu.pipeline_mode<synchronous>, transform_indices = @transform_3, window_bounds = array<i64: 64, 33>}, {transform_indices = @transform_4, window_bounds = array<i64: 32, 32>}]} {
    %c0 = arith.constant 0 : index
    %c0_0 = arith.constant 0 : index
    %0 = vector.load %arg1[%c0, %c0_0] : memref<32x64xi8, #tpu.memory_space<vmem>>, vector<32x64xi8>
    %c0_i8 = arith.constant 0 : i8
    %1 = vector.broadcast %c0_i8 : i8 to vector<32x64xi8>
    %2 = arith.cmpi ne, %0, %1 : vector<32x64xi8>
    %c0_1 = arith.constant 0 : index
    %c0_2 = arith.constant 0 : index
    %3 = vector.load %arg2[%c0_1, %c0_2] : memref<32x4xf32, #tpu.memory_space<vmem>>, vector<32x4xf32>
    %c0_3 = arith.constant 0 : index
    %c0_4 = arith.constant 0 : index
    %4 = vector.load %arg3[%c0_3, %c0_4] : memref<8x64xf32, #tpu.memory_space<vmem>>, vector<8x64xf32>
    %c0_5 = arith.constant 0 : index
    %c0_6 = arith.constant 0 : index
    %5 = vector.load %arg4[%c0_5, %c0_6] : memref<64x33xbf16, #tpu.memory_space<vmem>>, vector<64x33xbf16>
    %6 = vector.extract_strided_slice %3 {offsets = [0, 0], sizes = [32, 1], strides = [1, 1]} : vector<32x4xf32> to vector<32x1xf32>
    %7 = vector.extract_strided_slice %4 {offsets = [0, 0], sizes = [1, 64], strides = [1, 1]} : vector<8x64xf32> to vector<1x64xf32>
    %8 = vector.broadcast %6 : vector<32x1xf32> to vector<32x64xf32>
    %9 = vector.broadcast %7 : vector<1x64xf32> to vector<32x64xf32>
    %10 = arith.addf %8, %9 : vector<32x64xf32>
    %cst = arith.constant 0.000000e+00 : f32
    %11 = vector.broadcast %cst : f32 to vector<32x64xf32>
    %12 = arith.subf %11, %10 : vector<32x64xf32>
    %cst_7 = arith.constant -2.000000e-01 : f32
    %13 = vector.broadcast %cst_7 : f32 to vector<32x64xf32>
    %14 = arith.mulf %13, %10 : vector<32x64xf32>
    %15 = arith.minimumf %12, %14 : vector<32x64xf32>
    %cst_8 = arith.constant -1.000000e+30 : f32
    %16 = vector.broadcast %cst_8 : f32 to vector<32x64xf32>
    %17 = arith.select %2, %15, %16 : vector<32x64xi1>, vector<32x64xf32>
    %18 = arith.truncf %17 : vector<32x64xf32> to vector<32x64xbf16>
    %19 = math.exp %18 : vector<32x64xbf16>
    %cst_9 = arith.constant dense<0.000000e+00> : vector<32x33xf32>
    %20 = tpu.matmul %19, %5, %cst_9 {dimension_numbers = #tpu.dot_dimension_numbers<[1], [0], [0], [1], [0, 0, 1, 1], [], []>} : vector<32x64xbf16>, vector<64x33xbf16>, vector<32x33xf32> -> vector<32x33xf32>
    %21 = vector.extract_strided_slice %20 {offsets = [0, 32], sizes = [32, 1], strides = [1, 1]} : vector<32x33xf32> to vector<32x1xf32>
    %cst_10 = arith.constant 9.99999968E-21 : f32
    %22 = vector.broadcast %cst_10 : f32 to vector<32x1xf32>
    %23 = arith.maximumf %21, %22 : vector<32x1xf32>
    %24 = vector.extract_strided_slice %20 {offsets = [0, 0], sizes = [32, 8], strides = [1, 1]} : vector<32x33xf32> to vector<32x8xf32>
    %25 = tpu.reciprocal %23 {approx = true} : vector<32x1xf32> -> vector<32x1xf32>
    %26 = vector.broadcast %25 : vector<32x1xf32> to vector<32x8xf32>
    %27 = arith.mulf %24, %26 : vector<32x8xf32>
    %cst_11 = arith.constant 0.000000e+00 : f32
    %28 = vector.broadcast %cst_11 : f32 to vector<32x8xf32>
    %29 = arith.cmpf ogt, %27, %28 : vector<32x8xf32>
    %30 = math.exp %27 : vector<32x8xf32>
    %cst_12 = arith.constant 1.000000e+00 : f32
    %31 = vector.broadcast %cst_12 : f32 to vector<32x8xf32>
    %32 = arith.subf %30, %31 : vector<32x8xf32>
    %33 = arith.select %29, %27, %32 : vector<32x8xi1>, vector<32x8xf32>
    %c0_13 = arith.constant 0 : index
    %c0_14 = arith.constant 0 : index
    %34 = vector.load %arg5[%c0_13, %c0_14] : memref<32x32xf32, #tpu.memory_space<vmem>>, vector<32x8xf32>
    tpu.vector_store %arg5[%c0_13, %c0_14], %33 {strides = array<i32>} : memref<32x32xf32, #tpu.memory_space<vmem>>, vector<32x8xf32>,
    %35 = vector.extract_strided_slice %3 {offsets = [0, 1], sizes = [32, 1], strides = [1, 1]} : vector<32x4xf32> to vector<32x1xf32>
    %36 = vector.extract_strided_slice %4 {offsets = [1, 0], sizes = [1, 64], strides = [1, 1]} : vector<8x64xf32> to vector<1x64xf32>
    %37 = vector.broadcast %35 : vector<32x1xf32> to vector<32x64xf32>
    %38 = vector.broadcast %36 : vector<1x64xf32> to vector<32x64xf32>
    %39 = arith.addf %37, %38 : vector<32x64xf32>
    %cst_15 = arith.constant 0.000000e+00 : f32
    %40 = vector.broadcast %cst_15 : f32 to vector<32x64xf32>
    %41 = arith.subf %40, %39 : vector<32x64xf32>
    %cst_16 = arith.constant -2.000000e-01 : f32
    %42 = vector.broadcast %cst_16 : f32 to vector<32x64xf32>
    %43 = arith.mulf %42, %39 : vector<32x64xf32>
    %44 = arith.minimumf %41, %43 : vector<32x64xf32>
    %cst_17 = arith.constant -1.000000e+30 : f32
    %45 = vector.broadcast %cst_17 : f32 to vector<32x64xf32>
    %46 = arith.select %2, %44, %45 : vector<32x64xi1>, vector<32x64xf32>
    %47 = arith.truncf %46 : vector<32x64xf32> to vector<32x64xbf16>
    %48 = math.exp %47 : vector<32x64xbf16>
    %cst_18 = arith.constant dense<0.000000e+00> : vector<32x33xf32>
    %49 = tpu.matmul %48, %5, %cst_18 {dimension_numbers = #tpu.dot_dimension_numbers<[1], [0], [0], [1], [0, 0, 1, 1], [], []>} : vector<32x64xbf16>, vector<64x33xbf16>, vector<32x33xf32> -> vector<32x33xf32>
    %50 = vector.extract_strided_slice %49 {offsets = [0, 32], sizes = [32, 1], strides = [1, 1]} : vector<32x33xf32> to vector<32x1xf32>
    %cst_19 = arith.constant 9.99999968E-21 : f32
    %51 = vector.broadcast %cst_19 : f32 to vector<32x1xf32>
    %52 = arith.maximumf %50, %51 : vector<32x1xf32>
    %53 = vector.extract_strided_slice %49 {offsets = [0, 8], sizes = [32, 8], strides = [1, 1]} : vector<32x33xf32> to vector<32x8xf32>
    %54 = tpu.reciprocal %52 {approx = true} : vector<32x1xf32> -> vector<32x1xf32>
    %55 = vector.broadcast %54 : vector<32x1xf32> to vector<32x8xf32>
    %56 = arith.mulf %53, %55 : vector<32x8xf32>
    %cst_20 = arith.constant 0.000000e+00 : f32
    %57 = vector.broadcast %cst_20 : f32 to vector<32x8xf32>
    %58 = arith.cmpf ogt, %56, %57 : vector<32x8xf32>
    %59 = math.exp %56 : vector<32x8xf32>
    %cst_21 = arith.constant 1.000000e+00 : f32
    %60 = vector.broadcast %cst_21 : f32 to vector<32x8xf32>
    %61 = arith.subf %59, %60 : vector<32x8xf32>
    %62 = arith.select %58, %56, %61 : vector<32x8xi1>, vector<32x8xf32>
    %c0_22 = arith.constant 0 : index
    %c8 = arith.constant 8 : index
    %63 = vector.load %arg5[%c0_22, %c8] : memref<32x32xf32, #tpu.memory_space<vmem>>, vector<32x8xf32>
    tpu.vector_store %arg5[%c0_22, %c8], %62 {strides = array<i32>} : memref<32x32xf32, #tpu.memory_space<vmem>>, vector<32x8xf32>,
    %64 = vector.extract_strided_slice %3 {offsets = [0, 2], sizes = [32, 1], strides = [1, 1]} : vector<32x4xf32> to vector<32x1xf32>
    %65 = vector.extract_strided_slice %4 {offsets = [2, 0], sizes = [1, 64], strides = [1, 1]} : vector<8x64xf32> to vector<1x64xf32>
    %66 = vector.broadcast %64 : vector<32x1xf32> to vector<32x64xf32>
    %67 = vector.broadcast %65 : vector<1x64xf32> to vector<32x64xf32>
    %68 = arith.addf %66, %67 : vector<32x64xf32>
    %cst_23 = arith.constant 0.000000e+00 : f32
    %69 = vector.broadcast %cst_23 : f32 to vector<32x64xf32>
    %70 = arith.subf %69, %68 : vector<32x64xf32>
    %cst_24 = arith.constant -2.000000e-01 : f32
    %71 = vector.broadcast %cst_24 : f32 to vector<32x64xf32>
    %72 = arith.mulf %71, %68 : vector<32x64xf32>
    %73 = arith.minimumf %70, %72 : vector<32x64xf32>
    %cst_25 = arith.constant -1.000000e+30 : f32
    %74 = vector.broadcast %cst_25 : f32 to vector<32x64xf32>
    %75 = arith.select %2, %73, %74 : vector<32x64xi1>, vector<32x64xf32>
    %76 = arith.truncf %75 : vector<32x64xf32> to vector<32x64xbf16>
    %77 = math.exp %76 : vector<32x64xbf16>
    %cst_26 = arith.constant dense<0.000000e+00> : vector<32x33xf32>
    %78 = tpu.matmul %77, %5, %cst_26 {dimension_numbers = #tpu.dot_dimension_numbers<[1], [0], [0], [1], [0, 0, 1, 1], [], []>} : vector<32x64xbf16>, vector<64x33xbf16>, vector<32x33xf32> -> vector<32x33xf32>
    %79 = vector.extract_strided_slice %78 {offsets = [0, 32], sizes = [32, 1], strides = [1, 1]} : vector<32x33xf32> to vector<32x1xf32>
    %cst_27 = arith.constant 9.99999968E-21 : f32
    %80 = vector.broadcast %cst_27 : f32 to vector<32x1xf32>
    %81 = arith.maximumf %79, %80 : vector<32x1xf32>
    %82 = vector.extract_strided_slice %78 {offsets = [0, 16], sizes = [32, 8], strides = [1, 1]} : vector<32x33xf32> to vector<32x8xf32>
    %83 = tpu.reciprocal %81 {approx = true} : vector<32x1xf32> -> vector<32x1xf32>
    %84 = vector.broadcast %83 : vector<32x1xf32> to vector<32x8xf32>
    %85 = arith.mulf %82, %84 : vector<32x8xf32>
    %cst_28 = arith.constant 0.000000e+00 : f32
    %86 = vector.broadcast %cst_28 : f32 to vector<32x8xf32>
    %87 = arith.cmpf ogt, %85, %86 : vector<32x8xf32>
    %88 = math.exp %85 : vector<32x8xf32>
    %cst_29 = arith.constant 1.000000e+00 : f32
    %89 = vector.broadcast %cst_29 : f32 to vector<32x8xf32>
    %90 = arith.subf %88, %89 : vector<32x8xf32>
    %91 = arith.select %87, %85, %90 : vector<32x8xi1>, vector<32x8xf32>
    %c0_30 = arith.constant 0 : index
    %c16 = arith.constant 16 : index
    %92 = vector.load %arg5[%c0_30, %c16] : memref<32x32xf32, #tpu.memory_space<vmem>>, vector<32x8xf32>
    tpu.vector_store %arg5[%c0_30, %c16], %91 {strides = array<i32>} : memref<32x32xf32, #tpu.memory_space<vmem>>, vector<32x8xf32>,
    %93 = vector.extract_strided_slice %3 {offsets = [0, 3], sizes = [32, 1], strides = [1, 1]} : vector<32x4xf32> to vector<32x1xf32>
    %94 = vector.extract_strided_slice %4 {offsets = [3, 0], sizes = [1, 64], strides = [1, 1]} : vector<8x64xf32> to vector<1x64xf32>
    %95 = vector.broadcast %93 : vector<32x1xf32> to vector<32x64xf32>
    %96 = vector.broadcast %94 : vector<1x64xf32> to vector<32x64xf32>
    %97 = arith.addf %95, %96 : vector<32x64xf32>
    %cst_31 = arith.constant 0.000000e+00 : f32
    %98 = vector.broadcast %cst_31 : f32 to vector<32x64xf32>
    %99 = arith.subf %98, %97 : vector<32x64xf32>
    %cst_32 = arith.constant -2.000000e-01 : f32
    %100 = vector.broadcast %cst_32 : f32 to vector<32x64xf32>
    %101 = arith.mulf %100, %97 : vector<32x64xf32>
    %102 = arith.minimumf %99, %101 : vector<32x64xf32>
    %cst_33 = arith.constant -1.000000e+30 : f32
    %103 = vector.broadcast %cst_33 : f32 to vector<32x64xf32>
    %104 = arith.select %2, %102, %103 : vector<32x64xi1>, vector<32x64xf32>
    %105 = arith.truncf %104 : vector<32x64xf32> to vector<32x64xbf16>
    %106 = math.exp %105 : vector<32x64xbf16>
    %cst_34 = arith.constant dense<0.000000e+00> : vector<32x33xf32>
    %107 = tpu.matmul %106, %5, %cst_34 {dimension_numbers = #tpu.dot_dimension_numbers<[1], [0], [0], [1], [0, 0, 1, 1], [], []>} : vector<32x64xbf16>, vector<64x33xbf16>, vector<32x33xf32> -> vector<32x33xf32>
    %108 = vector.extract_strided_slice %107 {offsets = [0, 32], sizes = [32, 1], strides = [1, 1]} : vector<32x33xf32> to vector<32x1xf32>
    %cst_35 = arith.constant 9.99999968E-21 : f32
    %109 = vector.broadcast %cst_35 : f32 to vector<32x1xf32>
    %110 = arith.maximumf %108, %109 : vector<32x1xf32>
    %111 = vector.extract_strided_slice %107 {offsets = [0, 24], sizes = [32, 8], strides = [1, 1]} : vector<32x33xf32> to vector<32x8xf32>
    %112 = tpu.reciprocal %110 {approx = true} : vector<32x1xf32> -> vector<32x1xf32>
    %113 = vector.broadcast %112 : vector<32x1xf32> to vector<32x8xf32>
    %114 = arith.mulf %111, %113 : vector<32x8xf32>
    %cst_36 = arith.constant 0.000000e+00 : f32
    %115 = vector.broadcast %cst_36 : f32 to vector<32x8xf32>
    %116 = arith.cmpf ogt, %114, %115 : vector<32x8xf32>
    %117 = math.exp %114 : vector<32x8xf32>
    %cst_37 = arith.constant 1.000000e+00 : f32
    %118 = vector.broadcast %cst_37 : f32 to vector<32x8xf32>
    %119 = arith.subf %117, %118 : vector<32x8xf32>
    %120 = arith.select %116, %114, %119 : vector<32x8xi1>, vector<32x8xf32>
    %c0_38 = arith.constant 0 : index
    %c24 = arith.constant 24 : index
    %121 = vector.load %arg5[%c0_38, %c24] : memref<32x32xf32, #tpu.memory_space<vmem>>, vector<32x8xf32>
    tpu.vector_store %arg5[%c0_38, %c24], %120 {strides = array<i32>} : memref<32x32xf32, #tpu.memory_space<vmem>>, vector<32x8xf32>,
    return
  }
  func.func @transform_0(%arg0: i32) -> (i32, i32) {
    %c0_i32 = arith.constant 0 : i32
    %c0_i32_0 = arith.constant 0 : i32
    return %arg0, %c0_i32 : i32, i32
  }
  func.func @transform_1(%arg0: i32) -> (i32, i32) {
    %c0_i32 = arith.constant 0 : i32
    %c0_i32_0 = arith.constant 0 : i32
    return %arg0, %c0_i32 : i32, i32
  }
  func.func @transform_2(%arg0: i32) -> (i32, i32) {
    %c0_i32 = arith.constant 0 : i32
    %c0_i32_0 = arith.constant 0 : i32
    %c0_i32_1 = arith.constant 0 : i32
    return %c0_i32, %c0_i32_0 : i32, i32
  }
  func.func @transform_3(%arg0: i32) -> (i32, i32) {
    %c0_i32 = arith.constant 0 : i32
    %c0_i32_0 = arith.constant 0 : i32
    %c0_i32_1 = arith.constant 0 : i32
    return %c0_i32, %c0_i32_0 : i32, i32
  }
  func.func @transform_4(%arg0: i32) -> (i32, i32) {
    %c0_i32 = arith.constant 0 : i32
    %c0_i32_0 = arith.constant 0 : i32
    return %arg0, %c0_i32 : i32, i32
  }
}

module attributes {stable_mosaic.version = 11 : i64} {
  func.func @_gat_attention_kernel(%arg0: i32, %arg1: memref<32x64xi8, #tpu.memory_space<vmem>>, %arg2: memref<32x1xf32, #tpu.memory_space<vmem>>, %arg3: memref<8x64xf32, #tpu.memory_space<vmem>>, %arg4: memref<64x9xbf16, #tpu.memory_space<vmem>>, %arg5: memref<32x8xf32, #tpu.memory_space<vmem>>) attributes {dimension_semantics = [#tpu.dimension_semantics<parallel>], iteration_bounds = array<i64: 2>, scalar_prefetch = 0 : i64, scratch_operands = 0 : i64, tpu.core_type = #tpu.core_type<tc>, window_params = [{transform_indices = @transform_0, window_bounds = array<i64: 32, 64>}, {transform_indices = @transform_1, window_bounds = array<i64: 32, 1>}, {pipeline_mode = #tpu.pipeline_mode<synchronous>, transform_indices = @transform_2, window_bounds = array<i64: 8, 64>}, {pipeline_mode = #tpu.pipeline_mode<synchronous>, transform_indices = @transform_3, window_bounds = array<i64: 64, 9>}, {transform_indices = @transform_4, window_bounds = array<i64: 32, 8>}]} {
    %c0 = arith.constant 0 : index
    %c0_0 = arith.constant 0 : index
    %0 = vector.load %arg1[%c0, %c0_0] : memref<32x64xi8, #tpu.memory_space<vmem>>, vector<32x64xi8>
    %c0_i8 = arith.constant 0 : i8
    %1 = vector.broadcast %c0_i8 : i8 to vector<32x64xi8>
    %2 = arith.cmpi ne, %0, %1 : vector<32x64xi8>
    %c0_1 = arith.constant 0 : index
    %c0_2 = arith.constant 0 : index
    %3 = vector.load %arg2[%c0_1, %c0_2] : memref<32x1xf32, #tpu.memory_space<vmem>>, vector<32x1xf32>
    %c0_3 = arith.constant 0 : index
    %c0_4 = arith.constant 0 : index
    %4 = vector.load %arg3[%c0_3, %c0_4] : memref<8x64xf32, #tpu.memory_space<vmem>>, vector<8x64xf32>
    %c0_5 = arith.constant 0 : index
    %c0_6 = arith.constant 0 : index
    %5 = vector.load %arg4[%c0_5, %c0_6] : memref<64x9xbf16, #tpu.memory_space<vmem>>, vector<64x9xbf16>
    %6 = vector.extract_strided_slice %4 {offsets = [0, 0], sizes = [1, 64], strides = [1, 1]} : vector<8x64xf32> to vector<1x64xf32>
    %7 = vector.broadcast %3 : vector<32x1xf32> to vector<32x64xf32>
    %8 = vector.broadcast %6 : vector<1x64xf32> to vector<32x64xf32>
    %9 = arith.addf %7, %8 : vector<32x64xf32>
    %cst = arith.constant 0.000000e+00 : f32
    %10 = vector.broadcast %cst : f32 to vector<32x64xf32>
    %11 = arith.subf %10, %9 : vector<32x64xf32>
    %cst_7 = arith.constant -2.000000e-01 : f32
    %12 = vector.broadcast %cst_7 : f32 to vector<32x64xf32>
    %13 = arith.mulf %12, %9 : vector<32x64xf32>
    %14 = arith.minimumf %11, %13 : vector<32x64xf32>
    %cst_8 = arith.constant -1.000000e+30 : f32
    %15 = vector.broadcast %cst_8 : f32 to vector<32x64xf32>
    %16 = arith.select %2, %14, %15 : vector<32x64xi1>, vector<32x64xf32>
    %17 = arith.truncf %16 : vector<32x64xf32> to vector<32x64xbf16>
    %18 = math.exp %17 : vector<32x64xbf16>
    %cst_9 = arith.constant dense<0.000000e+00> : vector<32x9xf32>
    %19 = tpu.matmul %18, %5, %cst_9 {dimension_numbers = #tpu.dot_dimension_numbers<[1], [0], [0], [1], [0, 0, 1, 1], [], []>} : vector<32x64xbf16>, vector<64x9xbf16>, vector<32x9xf32> -> vector<32x9xf32>
    %20 = vector.extract_strided_slice %19 {offsets = [0, 8], sizes = [32, 1], strides = [1, 1]} : vector<32x9xf32> to vector<32x1xf32>
    %cst_10 = arith.constant 9.99999968E-21 : f32
    %21 = vector.broadcast %cst_10 : f32 to vector<32x1xf32>
    %22 = arith.maximumf %20, %21 : vector<32x1xf32>
    %23 = vector.extract_strided_slice %19 {offsets = [0, 0], sizes = [32, 8], strides = [1, 1]} : vector<32x9xf32> to vector<32x8xf32>
    %24 = tpu.reciprocal %22 {approx = true} : vector<32x1xf32> -> vector<32x1xf32>
    %25 = vector.broadcast %24 : vector<32x1xf32> to vector<32x8xf32>
    %26 = arith.mulf %23, %25 : vector<32x8xf32>
    %cst_11 = arith.constant 0.000000e+00 : f32
    %27 = vector.broadcast %cst_11 : f32 to vector<32x8xf32>
    %28 = arith.cmpf ogt, %26, %27 : vector<32x8xf32>
    %29 = math.exp %26 : vector<32x8xf32>
    %cst_12 = arith.constant 1.000000e+00 : f32
    %30 = vector.broadcast %cst_12 : f32 to vector<32x8xf32>
    %31 = arith.subf %29, %30 : vector<32x8xf32>
    %32 = arith.select %28, %26, %31 : vector<32x8xi1>, vector<32x8xf32>
    %c0_13 = arith.constant 0 : index
    %c0_14 = arith.constant 0 : index
    %33 = vector.load %arg5[%c0_13, %c0_14] : memref<32x8xf32, #tpu.memory_space<vmem>>, vector<32x8xf32>
    tpu.vector_store %arg5[%c0_13, %c0_14], %32 {strides = array<i32>} : memref<32x8xf32, #tpu.memory_space<vmem>>, vector<32x8xf32>,
    return
  }
  func.func @transform_0(%arg0: i32) -> (i32, i32) {
    %c0_i32 = arith.constant 0 : i32
    %c0_i32_0 = arith.constant 0 : i32
    return %arg0, %c0_i32 : i32, i32
  }
  func.func @transform_1(%arg0: i32) -> (i32, i32) {
    %c0_i32 = arith.constant 0 : i32
    %c0_i32_0 = arith.constant 0 : i32
    return %arg0, %c0_i32 : i32, i32
  }
  func.func @transform_2(%arg0: i32) -> (i32, i32) {
    %c0_i32 = arith.constant 0 : i32
    %c0_i32_0 = arith.constant 0 : i32
    %c0_i32_1 = arith.constant 0 : i32
    return %c0_i32, %c0_i32_0 : i32, i32
  }
  func.func @transform_3(%arg0: i32) -> (i32, i32) {
    %c0_i32 = arith.constant 0 : i32
    %c0_i32_0 = arith.constant 0 : i32
    %c0_i32_1 = arith.constant 0 : i32
    return %c0_i32, %c0_i32_0 : i32, i32
  }
  func.func @transform_4(%arg0: i32) -> (i32, i32) {
    %c0_i32 = arith.constant 0 : i32
    %c0_i32_0 = arith.constant 0 : i32
    return %arg0, %c0_i32 : i32, i32
  }
}

module attributes {stable_mosaic.version = 11 : i64} {
  func.func @_inner_product_decoder_kernel(%arg0: i32, %arg1: i32, %arg2: memref<64x8xf32, #tpu.memory_space<vmem>>, %arg3: memref<64x8xf32, #tpu.memory_space<vmem>>, %arg4: memref<64x64xf32, #tpu.memory_space<vmem>>) attributes {dimension_semantics = [#tpu.dimension_semantics<parallel>, #tpu.dimension_semantics<parallel>], iteration_bounds = array<i64: 1, 1>, scalar_prefetch = 0 : i64, scratch_operands = 0 : i64, tpu.core_type = #tpu.core_type<tc>, window_params = [{transform_indices = @transform_0, window_bounds = array<i64: 64, 8>}, {transform_indices = @transform_1, window_bounds = array<i64: 64, 8>}, {transform_indices = @transform_2, window_bounds = array<i64: 64, 64>}]} {
    %c0 = arith.constant 0 : index
    %c0_0 = arith.constant 0 : index
    %0 = vector.load %arg2[%c0, %c0_0] : memref<64x8xf32, #tpu.memory_space<vmem>>, vector<64x8xf32>
    %c0_1 = arith.constant 0 : index
    %c0_2 = arith.constant 0 : index
    %1 = vector.load %arg3[%c0_1, %c0_2] : memref<64x8xf32, #tpu.memory_space<vmem>>, vector<64x8xf32>
    %cst = arith.constant dense<0.000000e+00> : vector<64x64xf32>
    %2 = tpu.matmul %0, %1, %cst {dimension_numbers = #tpu.dot_dimension_numbers<[1], [1], [0], [0], [0, 0, 1, 0], [], []>} : vector<64x8xf32>, vector<64x8xf32>, vector<64x64xf32> -> vector<64x64xf32>
    %3 = arith.negf %2 : vector<64x64xf32>
    %4 = math.exp %3 : vector<64x64xf32>
    %cst_3 = arith.constant 1.000000e+00 : f32
    %5 = vector.broadcast %cst_3 : f32 to vector<64x64xf32>
    %6 = arith.addf %5, %4 : vector<64x64xf32>
    %7 = arith.divf %5, %6 : vector<64x64xf32>
    %c0_4 = arith.constant 0 : index
    %c0_5 = arith.constant 0 : index
    %8 = vector.load %arg4[%c0_4, %c0_5] : memref<64x64xf32, #tpu.memory_space<vmem>>, vector<64x64xf32>
    tpu.vector_store %arg4[%c0_4, %c0_5], %7 {strides = array<i32>} : memref<64x64xf32, #tpu.memory_space<vmem>>, vector<64x64xf32>,
    return
  }
  func.func @transform_0(%arg0: i32, %arg1: i32) -> (i32, i32) {
    %c0_i32 = arith.constant 0 : i32
    %c0_i32_0 = arith.constant 0 : i32
    return %arg0, %c0_i32 : i32, i32
  }
  func.func @transform_1(%arg0: i32, %arg1: i32) -> (i32, i32) {
    %c0_i32 = arith.constant 0 : i32
    %c0_i32_0 = arith.constant 0 : i32
    return %arg1, %c0_i32 : i32, i32
  }
  func.func @transform_2(%arg0: i32, %arg1: i32) -> (i32, i32) {
    %c0_i32 = arith.constant 0 : i32
    return %arg0, %arg1 : i32, i32
  }
}

</mosaic_0001>

<llo_original>
// kernel: daegce_forward.6
$region0: #{daegce_forward.6}
  #allocation0 [shape = 'u32[]', space=smem, size = 0x4, offset = 0x4, fixed_abs, tag = 'smem constant byte address 0x4 - core index']
  #allocation1 [shape = 'u32[144,128]{1,0:T(1,128)}', space=vmem, size = 0x12000, scoped, tag = 'internal scratch']
  %s0 = inlined_call_operand.vmem [shape: s8[64,64], index: 0, kind: input, shape index: {}]
  %s1 = inlined_call_operand.vmem [shape: f32[64,1], index: 1, kind: input, shape index: {}]
  %s2 = inlined_call_operand.vmem [shape: f32[8,64], index: 2, kind: input, shape index: {}]
  %s3 = inlined_call_operand.vmem [shape: bf16[64,17], index: 3, kind: input, shape index: {}]
  %s4 = inlined_call_operand.vmem [shape: f32[64,16], index: 4, kind: output, shape index: {}]
  %s5 = sld [smem:[#allocation0]]
  $region49: #{daegce_forward.6} parent=0
    _
  %s7 = ssub.s32 1, %s5
  %s8 = scalar_select 0, %s7, %s5
  loop: start=0, step=1, limit=4
  $region2: #{daegce_forward.6} parent=0 // loop_pre_header
    _
  $region3: #{daegce_forward.6} parent=0 // loop_header
    %s10 = sphi 0, %s14
    %p11 = scmp.ge.s32.totalorder %s10, 4
    %s20 = sphi 0, %s22
    %s23 = sphi 0, %s20
    %s24 = sphi 0, %s23
    %s40 = sphi 0, %s24
    %s46 = sphi 0, %s48
    %s49 = sphi 0, %s46
    %s50 = sphi 0, %s49
    %s66 = sphi 0, %s50
    %s70 = sphi 0, %s70
    %s72 = sphi 0, %s70
    %s73 = sphi 0, %s72
    %s87 = sphi 0, %s73
    %s91 = sphi 0, %s91
    %s93 = sphi 0, %s91
    %s94 = sphi 0, %s93
    %s108 = sphi 0, %s94
    %s114 = sphi 0, %s116
    %s117 = sphi 0, %s114
    %s118 = sphi 0, %s117
    %s134 = sphi 0, %s118
  $region4: #{daegce_forward.6} parent=0 // loop_header_branch
    %13 = sbr.rel (%p11) target = $region8
  $region5: #{daegce_forward.6} parent=0 // loop_body
    %s15 = ssub.s32 %s10, 1
    %s16 = ssub.s32 %s10, 2
    %s17 = sadd.s32 %s10, 1
    %s18 = ssub.s32 %s10, %s17
    %p19 = scmp.eq.s32.totalorder %s18, 0
    %s21 = sadd.s32 %s20, 1
    %s22 = scalar_select %p19, %s20, %s21
    %p25 = pneg %p19
    %p26 = scmp.eq.s32.totalorder %s10, 1
    %p27 = por %p25, %p26
    %p28 = scmp.ne.s32.totalorder %s20, %s23
    %p29 = scmp.eq.s32.totalorder %s10, 0
    %p30 = por %p28, %p29
    %p31 = scmp.ne.s32.totalorder %s20, %s23
    %p32 = scmp.eq.s32.totalorder %s15, 1
    %p33 = por %p31, %p32
    %p34 = scmp.ne.s32.totalorder %s23, %s24
    %p35 = scmp.eq.s32.totalorder %s15, 0
    %p36 = por %p34, %p35
    %p37 = scmp.ne.s32.totalorder %s23, %s24
    %p38 = scmp.eq.s32.totalorder %s16, 1
    %p39 = por %p37, %p38
    %p41 = scmp.ne.s32.totalorder %s24, %s40
    %p42 = scmp.eq.s32.totalorder %s16, 0
    %p43 = por %p41, %p42
    %s44 = ssub.s32 %s10, %s17
    %p45 = scmp.eq.s32.totalorder %s44, 0
    %s47 = sadd.s32 %s46, 1
    %s48 = scalar_select %p45, %s46, %s47
    %p51 = pneg %p45
    %p52 = scmp.eq.s32.totalorder %s10, 1
    %p53 = por %p51, %p52
    %p54 = scmp.ne.s32.totalorder %s46, %s49
    %p55 = scmp.eq.s32.totalorder %s10, 0
    %p56 = por %p54, %p55
    %p57 = scmp.ne.s32.totalorder %s46, %s49
    %p58 = scmp.eq.s32.totalorder %s15, 1
    %p59 = por %p57, %p58
    %p60 = scmp.ne.s32.totalorder %s49, %s50
    %p61 = scmp.eq.s32.totalorder %s15, 0
    %p62 = por %p60, %p61
    %p63 = scmp.ne.s32.totalorder %s49, %s50
    %p64 = scmp.eq.s32.totalorder %s16, 1
    %p65 = por %p63, %p64
    %p67 = scmp.ne.s32.totalorder %s50, %s66
    %p68 = scmp.eq.s32.totalorder %s16, 0
    %p69 = por %p67, %p68
    %s71 = sadd.s32 %s70, 1
    %p74 = scmp.eq.s32.totalorder %s10, 1
    %p75 = scmp.ne.s32.totalorder %s70, %s72
    %p76 = scmp.eq.s32.totalorder %s10, 0
    %p77 = por %p75, %p76
    %p78 = scmp.ne.s32.totalorder %s70, %s72
    %p79 = scmp.eq.s32.totalorder %s15, 1
    %p80 = por %p78, %p79
    %p81 = scmp.ne.s32.totalorder %s72, %s73
    %p82 = scmp.eq.s32.totalorder %s15, 0
    %p83 = por %p81, %p82
    %p84 = scmp.ne.s32.totalorder %s72, %s73
    %p85 = scmp.eq.s32.totalorder %s16, 1
    %p86 = por %p84, %p85
    %p88 = scmp.ne.s32.totalorder %s73, %s87
    %p89 = scmp.eq.s32.totalorder %s16, 0
    %p90 = por %p88, %p89
    %s92 = sadd.s32 %s91, 1
    %p95 = scmp.eq.s32.totalorder %s10, 1
    %p96 = scmp.ne.s32.totalorder %s91, %s93
    %p97 = scmp.eq.s32.totalorder %s10, 0
    %p98 = por %p96, %p97
    %p99 = scmp.ne.s32.totalorder %s91, %s93
    %p100 = scmp.eq.s32.totalorder %s15, 1
    %p101 = por %p99, %p100
    %p102 = scmp.ne.s32.totalorder %s93, %s94
    %p103 = scmp.eq.s32.totalorder %s15, 0
    %p104 = por %p102, %p103
    %p105 = scmp.ne.s32.totalorder %s93, %s94
    %p106 = scmp.eq.s32.totalorder %s16, 1
    %p107 = por %p105, %p106
    %p109 = scmp.ne.s32.totalorder %s94, %s108
    %p110 = scmp.eq.s32.totalorder %s16, 0
    %p111 = por %p109, %p110
    %s112 = ssub.s32 %s10, %s17
    %p113 = scmp.eq.s32.totalorder %s112, 0
    %s115 = sadd.s32 %s114, 1
    %s116 = scalar_select %p113, %s114, %s115
    %p119 = pneg %p113
    %p120 = scmp.eq.s32.totalorder %s10, 1
    %p121 = por %p119, %p120
    %p122 = scmp.ne.s32.totalorder %s114, %s117
    %p123 = scmp.eq.s32.totalorder %s10, 0
    %p124 = por %p122, %p123
    %p125 = scmp.ne.s32.totalorder %s114, %s117
    %p126 = scmp.eq.s32.totalorder %s15, 1
    %p127 = por %p125, %p126
    %p128 = scmp.ne.s32.totalorder %s117, %s118
    %p129 = scmp.eq.s32.totalorder %s15, 0
    %p130 = por %p128, %p129
    %p131 = scmp.ne.s32.totalorder %s117, %s118
    %p132 = scmp.eq.s32.totalorder %s16, 1
    %p133 = por %p131, %p132
    %p135 = scmp.ne.s32.totalorder %s118, %s134
    %p136 = scmp.eq.s32.totalorder %s16, 0
    %p137 = por %p135, %p136
    %p138 = scmp.le.s32.totalorder 1, %s10
    %p139 = scmp.lt.s32.totalorder %s10, 3
    %p140 = pnand %p138, %p139
    %p141 = pneg %p140
    // Predicated region
    $region9: #{daegce_forward.6} parent=5 // pred_check
      _
    $region10: #{daegce_forward.6} parent=5 // pred_check_branch
      %143 = sbr.rel (%p140) target = $region12
    $region11: #{daegce_forward.6} parent=5 // pred_region
      %s144 = ssub.s32 %s10, 1
      // Predicated region
      $region13: #{daegce_forward.6} parent=11 // pred_check
        %p145 = pneg %p83
      $region14: #{daegce_forward.6} parent=11 // pred_check_branch
        %147 = sbr.rel (%p145) target = $region16
      $region15: #{daegce_forward.6} parent=11 // pred_region
        _
      $region16: #{daegce_forward.6} parent=11 // pred_fallthru
        _
      // Predicated region
      $region17: #{daegce_forward.6} parent=11 // pred_check
        %p148 = pneg %p104
      $region18: #{daegce_forward.6} parent=11 // pred_check_branch
        %150 = sbr.rel (%p148) target = $region20
      $region19: #{daegce_forward.6} parent=11 // pred_region
        _
      $region20: #{daegce_forward.6} parent=11 // pred_fallthru
        _
    $region12: #{daegce_forward.6} parent=5 // pred_fallthru
      _
    %p151 = scmp.lt.s32.totalorder %s10, 2
    // Predicated region
    $region21: #{daegce_forward.6} parent=5 // pred_check
      %p152 = pneg %p151
    $region22: #{daegce_forward.6} parent=5 // pred_check_branch
      %154 = sbr.rel (%p152) target = $region24
    $region23: #{daegce_forward.6} parent=5 // pred_region
      // Predicated region
      $region25: #{daegce_forward.6} parent=23 // pred_check
        %p155 = pneg %p30
      $region26: #{daegce_forward.6} parent=23 // pred_check_branch
        %157 = sbr.rel (%p155) target = $region28
      $region27: #{daegce_forward.6} parent=23 // pred_region
        %p158 = scmp.lt.s32.totalorder %s10, 1
        %s159 = scalar_select %p158, %s10, 1
        %s160 = smul.addr %s159, 8
        %s161 = scalar_lea.vmem %s0, %s160
      $region28: #{daegce_forward.6} parent=23 // pred_fallthru
        _
      // Predicated region
      $region29: #{daegce_forward.6} parent=23 // pred_check
        %p162 = pneg %p56
      $region30: #{daegce_forward.6} parent=23 // pred_check_branch
        %164 = sbr.rel (%p162) target = $region32
      $region31: #{daegce_forward.6} parent=23 // pred_region
        %s165 = smul.u32 4, %s10
        %p166 = scmp.lt.s32.totalorder %s165, 7
        %s167 = scalar_select %p166, %s165, 7
        %s168 = smul.addr %s167, 8
        %s169 = scalar_lea.vmem %s1, %s168
        %s170 = smul.u32 4, %s10
      $region32: #{daegce_forward.6} parent=23 // pred_fallthru
        _
    $region24: #{daegce_forward.6} parent=5 // pred_fallthru
      _
    %p171 = scmp.le.s32.totalorder 1, %s10
    %p172 = scmp.lt.s32.totalorder %s10, 3
    %p173 = pnand %p171, %p172
    %p174 = pneg %p173
    // Predicated region
    $region33: #{daegce_forward.6} parent=5 // pred_check
      _
    $region34: #{daegce_forward.6} parent=5 // pred_check_branch
      %176 = sbr.rel (%p173) target = $region36
    $region35: #{daegce_forward.6} parent=5 // pred_region
      %s177 = ssub.s32 %s10, 1
      %p178 = scmp.lt.s32.totalorder %s15, 1
      %s179 = scalar_select %p178, %s15, 1
      %s180 = smul.addr %s179, 8
      %s181 = scalar_lea.vmem %s0, %s180
      %p182 = pneg %p36
      %p183 = pneg %p33
      %s184 = smul.u32 4, %s15
      %p185 = scmp.lt.s32.totalorder %s184, 7
      %s186 = scalar_select %p185, %s184, 7
      %s187 = smul.addr %s186, 8
      %s188 = scalar_lea.vmem %s1, %s187
      %p189 = pneg %p62
      %p190 = pneg %p59
      %p191 = pneg %p83
      %p192 = pneg %p80
      %p193 = pneg %p104
      %p194 = pneg %p101
      %p195 = pneg %p130
      %p196 = pneg %p127
      %s197 = smul.u32 4, %s15
      %p198 = scmp.lt.s32.totalorder %s197, 7
      %s199 = scalar_select %p198, %s197, 7
      %s200 = smul.addr %s199, 8
      %s201 = scalar_lea.vmem %s4, %s200
      %p202 = scmp.lt.s32.totalorder %s15, 1
      %s203 = scalar_select %p202, %s15, 1
      %s204 = smul.addr %s203, 8
      %s205 = scalar_lea.vmem %s0, %s204
      %s206 = smul.u32 4, %s15
      %p207 = scmp.lt.s32.totalorder %s206, 7
      %s208 = scalar_select %p207, %s206, 7
      %s209 = smul.addr %s208, 8
      %s210 = scalar_lea.vmem %s1, %s209
      %s211 = smul.u32 4, %s15
      %s212 = smul.u32 4, %s15
      %p213 = scmp.lt.s32.totalorder %s212, 7
      %s214 = scalar_select %p213, %s212, 7
      %s215 = smul.addr %s214, 8
      %s216 = scalar_lea.vmem %s4, %s215
      %s217 = smul.u32 4, %s15
      %v221 = vld [vmem:[%s205] sm:$0xff]
      %vm222 = vnez %v221
      %v223 = vld [vmem:[%s210] sm:$0xff]
      %v224 = vld [vmem:[%s210 + $0x8] sm:$0xff]
      %v225 = vld [vmem:[%s210 + $0x10] sm:$0xff]
      %v226 = vld [vmem:[%s210 + $0x18] sm:$0xff]
      %v227 = vld [vmem:[%s2] sm:$0xff]
      %v228 = vld [vmem:[%s3] sm:$0xf]
      %v229 = vld [vmem:[%s3 + $0x4] sm:$0xf]
      %v230 = vld [vmem:[%s3 + $0x8] sm:$0xf]
      %v231 = vld [vmem:[%s3 + $0xc] sm:$0xf]
      %v232 = vld [vmem:[%s3 + $0x10] sm:$0xf]
      %v233 = vld [vmem:[%s3 + $0x14] sm:$0xf]
      %v234 = vld [vmem:[%s3 + $0x18] sm:$0xf]
      %v235 = vld [vmem:[%s3 + $0x1c] sm:$0xf]
      %237 = vset.pattern.permute.xlu0 0
      %238 = vperm.xlu0 %237, %v223
      %v239 = vpop.permute.xlu0 %238
      %242 = vset.pattern.permute.xlu0 0
      %243 = vperm.xlu0 %242, %v224
      %v244 = vpop.permute.xlu0 %243
      %247 = vset.pattern.permute.xlu0 0
      %248 = vperm.xlu0 %247, %v225
      %v249 = vpop.permute.xlu0 %248
      %252 = vset.pattern.permute.xlu0 0
      %253 = vperm.xlu0 %252, %v226
      %v254 = vpop.permute.xlu0 %253
      %v256 = vlaneseq
      %v257 = vshrl.u32 %v256, 7
      %v258 = vsub.s32 0, %v257
      %v259 = vrot.slane %v227, %v258
      %v260 = vadd.f32 %v239, %v259
      %v261 = vadd.f32 %v244, %v259
      %v262 = vadd.f32 %v249, %v259
      %v263 = vadd.f32 %v254, %v259
      %v264 = vsub.f32 0.0, %v260
      %v265 = vsub.f32 0.0, %v261
      %v266 = vsub.f32 0.0, %v262
      %v267 = vsub.f32 0.0, %v263
      %v268 = vmul.f32 %v260, -0.2
      %v269 = vmul.f32 %v261, -0.2
      %v270 = vmul.f32 %v262, -0.2
      %v271 = vmul.f32 %v263, -0.2
      %v272 = vmin.f32 %v264, %v268
      %v273 = vmin.f32 %v265, %v269
      %v274 = vmin.f32 %v266, %v270
      %v275 = vmin.f32 %v267, %v271
      %v276 = vsel %vm222, 16843009, 0
      %v277 = vunpack.c.0.s8 %v276
      %v278 = vunpack.c.1.s8 %v276
      %v279 = vunpack.c.2.s8 %v276
      %v280 = vunpack.c.3.s8 %v276
      %v281 = vpack.c.b16 %v277, %v277
      %v282 = vpack.c.b8 %v281, %v281
      %v283 = vpack.c.b16 %v278, %v278
      %v284 = vpack.c.b8 %v283, %v283
      %v285 = vpack.c.b16 %v279, %v279
      %v286 = vpack.c.b8 %v285, %v285
      %v287 = vpack.c.b16 %v280, %v280
      %v288 = vpack.c.b8 %v287, %v287
      %vm289 = vnez %v282
      %vm290 = vnez %v284
      %vm291 = vnez %v286
      %vm292 = vnez %v288
      %v293 = vsel %vm289, 16843009, 0
      %v294 = vsel %vm290, 16843009, 0
      %v295 = vsel %vm291, 16843009, 0
      %v296 = vsel %vm292, 16843009, 0
      %v297 = vunpack.c.0.s8 %v293
      %v298 = vunpack.c.0.s8 %v294
      %v299 = vunpack.c.0.s8 %v295
      %v300 = vunpack.c.0.s8 %v296
      %vm301 = vcmp.ne.s32.totalorder %v297, 0
      %vm302 = vcmp.ne.s32.totalorder %v298, 0
      %vm303 = vcmp.ne.s32.totalorder %v299, 0
      %vm304 = vcmp.ne.s32.totalorder %v300, 0
      %v305 = vsel %vm301, %v272, -1e+30
      %v306 = vsel %vm302, %v273, -1e+30
      %v307 = vsel %vm303, %v274, -1e+30
      %v308 = vsel %vm304, %v275, -1e+30
      %v309 = vpack.c.bf16 %v306, %v305
      %v310 = vpack.c.bf16 %v308, %v307
      %v312 = vmul.bf16 %v309, 1069105081
      %v313 = vpow.bf16.pop %v312
      %v315 = vmul.bf16 %v310, 1069105081
      %v316 = vpow.bf16.pop %v315
      %v325 = vunpack.c.l.b16 %v228
      %v326 = vunpack.c.l.b16 %v229
      %v327 = vunpack.c.l.b16 %v230
      %v328 = vunpack.c.l.b16 %v231
      %v329 = vunpack.c.l.b16 %v232
      %v330 = vunpack.c.l.b16 %v233
      %v331 = vunpack.c.l.b16 %v234
      %v332 = vunpack.c.l.b16 %v235
      %v333 = vpack.c.b16 %v326, %v325
      %v334 = vpack.c.b16 %v328, %v327
      %v335 = vpack.c.b16 %v330, %v329
      %v336 = vpack.c.b16 %v332, %v331
      %vm341 = vcmask 523264
      %v343 = vsel %vm341, %v313, 0
      %v346 = vsel %vm341, %v316, 0
      %348 = vmatprep.subr.bf16.mxu0 0
      %349 = vmatpush1.bf16.msra.mxu0 0
      %350 = vmatprep.subr.bf16.mxu0 0
      %351 = vmatpush1.bf16.msra.mxu0 0
      %352 = vmatprep.subr.bf16.mxu0 0
      %353 = vmatpush1.bf16.msra.mxu0 0
      %354 = vmatprep.subr.bf16.mxu0 0
      %355 = vmatpush1.bf16.msra.mxu0 0
      %356 = vmatprep.subr.bf16.mxu0 0
      %357 = vmatpush1.bf16.msra.mxu0 %v336
      %358 = vmatprep.subr.bf16.mxu0 0
      %359 = vmatpush1.bf16.msra.mxu0 %v335
      %360 = vmatprep.subr.bf16.mxu0 0
      %361 = vmatpush1.bf16.msra.mxu0 %v334
      %362 = vmatprep.subr.bf16.mxu0 0
      %363 = vmatpush1.bf16.msra.mxu0 %v333
      %364 = vmatprep.subr.bf16.mxu0 0
      %365 = vmatpush2.bf16.msra.mxu0 0
      %366 = vmatprep.subr.bf16.mxu0 0
      %367 = vmatpush2.bf16.msra.mxu0 0
      %368 = vmatprep.subr.bf16.mxu0 0
      %369 = vmatpush2.bf16.msra.mxu0 0
      %370 = vmatprep.subr.bf16.mxu0 0
      %371 = vmatpush2.bf16.msra.mxu0 0
      %372 = vmatprep.subr.bf16.mxu0 0
      %373 = vmatpush2.bf16.msra.mxu0 0
      %374 = vmatprep.subr.bf16.mxu0 0
      %375 = vmatpush2.bf16.msra.mxu0 0
      %376 = vmatprep.subr.bf16.mxu0 0
      %377 = vmatpush2.bf16.msra.mxu0 0
      %378 = vmatprep.subr.bf16.mxu0 0
      %379 = vmatpush2.bf16.msra.mxu0 0
      %380 = vmatprep.mubr.bf16.mxu0 0
      %381 = vmatmul.mubr.bf16.gmra.mxu0 %v343
      %v382 = vpop.f32.mrf.mxu0
      %v383 = vadd.f32 0.0, %v382
      %v384 = vpop.f32.mrf.mxu0
      %v385 = vpop.f32.mrf.mxu0
      %v386 = vadd.f32 0.0, %v385
      %v387 = vpop.f32.mrf.mxu0
      %388 = vmatprep.mubr.bf16.mxu0 0
      %389 = vmatmul.mubr.bf16.gmra.mxu0 %v346
      %v390 = vpop.f32.mrf.mxu0
      %v391 = vadd.f32 0.0, %v390
      %v392 = vpop.f32.mrf.mxu0
      %v393 = vpop.f32.mrf.mxu0
      %v394 = vadd.f32 0.0, %v393
      %v395 = vpop.f32.mrf.mxu0
      %396 = vdwg.mxu0
      %v397 = vmax.f32 %v383, 1e-20
      %v398 = vmax.f32 %v386, 1e-20
      %v399 = vmax.f32 %v391, 1e-20
      %v400 = vmax.f32 %v394, 1e-20
      %v401 = vrcp.pop %v397
      %v402 = vrcp.pop %v398
      %v403 = vrcp.pop %v399
      %v404 = vrcp.pop %v400
      %406 = vset.pattern.permute.xlu0 16
      %407 = vperm.xlu0 %406, %v401
      %v408 = vpop.permute.xlu0 %407
      %411 = vset.pattern.permute.xlu0 16
      %412 = vperm.xlu0 %411, %v402
      %v413 = vpop.permute.xlu0 %412
      %416 = vset.pattern.permute.xlu0 16
      %417 = vperm.xlu0 %416, %v403
      %v418 = vpop.permute.xlu0 %417
      %421 = vset.pattern.permute.xlu0 16
      %422 = vperm.xlu0 %421, %v404
      %v423 = vpop.permute.xlu0 %422
      %v425 = vmul.f32 %v383, %v408
      %v426 = vmul.f32 %v386, %v413
      %v427 = vmul.f32 %v391, %v418
      %v428 = vmul.f32 %v394, %v423
      %vm429 = vcmp.gt.f32.partialorder %v425, 0.0
      %vm430 = vcmp.gt.f32.partialorder %v426, 0.0
      %vm431 = vcmp.gt.f32.partialorder %v427, 0.0
      %vm432 = vcmp.gt.f32.partialorder %v428, 0.0
      %v433 = vmul.f32 %v425, 1.442695
      %v434 = vpow.pop %v433
      %v435 = vmul.f32 %v426, 1.442695
      %v436 = vpow.pop %v435
      %v437 = vmul.f32 %v427, 1.442695
      %v438 = vpow.pop %v437
      %v439 = vmul.f32 %v428, 1.442695
      %v440 = vpow.pop %v439
      %v441 = vsub.f32 %v434, 1.0
      %v442 = vsub.f32 %v436, 1.0
      %v443 = vsub.f32 %v438, 1.0
      %v444 = vsub.f32 %v440, 1.0
      %v445 = vsel %vm429, %v425, %v441
      %v446 = vsel %vm430, %v426, %v442
      %v447 = vsel %vm431, %v427, %v443
      %v448 = vsel %vm432, %v428, %v444
      %vm449 = vcmask 130048
      %450 = vst.msk [vmem:[%s216] sm:$0xff] %vm449, %v445
      %451 = vst.msk [vmem:[%s216 + $0x8] sm:$0xff] %vm449, %v446
      %452 = vst.msk [vmem:[%s216 + $0x10] sm:$0xff] %vm449, %v447
      %453 = vst.msk [vmem:[%s216 + $0x18] sm:$0xff] %vm449, %v448
      %s454 = smul.u32 4, %s15
      %p455 = scmp.lt.s32.totalorder %s454, 7
      %s456 = scalar_select %p455, %s454, 7
      %s457 = smul.addr %s456, 8
      %s458 = scalar_lea.vmem %s4, %s457
      // Predicated region
      $region37: #{daegce_forward.6} parent=35 // pred_check
        %p459 = pneg %p127
      $region38: #{daegce_forward.6} parent=35 // pred_check_branch
        %461 = sbr.rel (%p459) target = $region40
      $region39: #{daegce_forward.6} parent=35 // pred_region
        %s462 = smul.u32 4, %s15
      $region40: #{daegce_forward.6} parent=35 // pred_fallthru
        _
    $region36: #{daegce_forward.6} parent=5 // pred_fallthru
      _
    %p463 = scmp.le.s32.totalorder 2, %s10
    // Predicated region
    $region41: #{daegce_forward.6} parent=5 // pred_check
      %p464 = pneg %p463
    $region42: #{daegce_forward.6} parent=5 // pred_check_branch
      %466 = sbr.rel (%p464) target = $region44
    $region43: #{daegce_forward.6} parent=5 // pred_region
      %s467 = ssub.s32 %s10, 2
      // Predicated region
      $region45: #{daegce_forward.6} parent=43 // pred_check
        %p468 = pneg %p133
      $region46: #{daegce_forward.6} parent=43 // pred_check_branch
        %470 = sbr.rel (%p468) target = $region48
      $region47: #{daegce_forward.6} parent=43 // pred_region
        %s471 = smul.u32 4, %s16
        %p472 = scmp.lt.s32.totalorder %s471, 7
        %s473 = scalar_select %p472, %s471, 7
        %s474 = smul.addr %s473, 8
        %s475 = scalar_lea.vmem %s4, %s474
      $region48: #{daegce_forward.6} parent=43 // pred_fallthru
        _
    $region44: #{daegce_forward.6} parent=5 // pred_fallthru
      _
  $region6: #{daegce_forward.6} parent=0 // loop_footer
    %s14 = sadd.s32 1, %s10
  $region7: #{daegce_forward.6} parent=0 // loop_footer_branch
    %9 = sbr.rel target = $region3
  $region8: #{daegce_forward.6} parent=0 // loop_exit
    _

// kernel: daegce_forward.5
$region0: #{daegce_forward.5}
  #allocation0 [shape = 'u32[]', space=smem, size = 0x4, offset = 0x4, fixed_abs, tag = 'smem constant byte address 0x4 - core index']
  #allocation1 [shape = 'u32[144,128]{1,0:T(1,128)}', space=vmem, size = 0x12000, scoped, tag = 'internal scratch']
  %s0 = inlined_call_operand.vmem [shape: s8[64,64], index: 0, kind: input, shape index: {}]
  %s1 = inlined_call_operand.vmem [shape: f32[64,4], index: 1, kind: input, shape index: {}]
  %s2 = inlined_call_operand.vmem [shape: f32[8,64], index: 2, kind: input, shape index: {}]
  %s3 = inlined_call_operand.vmem [shape: bf16[64,65], index: 3, kind: input, shape index: {}]
  %s4 = inlined_call_operand.vmem [shape: f32[64,64], index: 4, kind: output, shape index: {}]
  %s5 = sld [smem:[#allocation0]]
  $region49: #{daegce_forward.5} parent=0
    _
  %s7 = ssub.s32 1, %s5
  %s8 = scalar_select 0, %s7, %s5
  loop: start=0, step=1, limit=4
  $region2: #{daegce_forward.5} parent=0 // loop_pre_header
    _
  $region3: #{daegce_forward.5} parent=0 // loop_header
    %s10 = sphi 0, %s14
    %p11 = scmp.ge.s32.totalorder %s10, 4
    %s20 = sphi 0, %s22
    %s23 = sphi 0, %s20
    %s24 = sphi 0, %s23
    %s40 = sphi 0, %s24
    %s46 = sphi 0, %s48
    %s49 = sphi 0, %s46
    %s50 = sphi 0, %s49
    %s66 = sphi 0, %s50
    %s70 = sphi 0, %s70
    %s72 = sphi 0, %s70
    %s73 = sphi 0, %s72
    %s87 = sphi 0, %s73
    %s91 = sphi 0, %s91
    %s93 = sphi 0, %s91
    %s94 = sphi 0, %s93
    %s108 = sphi 0, %s94
    %s114 = sphi 0, %s116
    %s117 = sphi 0, %s114
    %s118 = sphi 0, %s117
    %s134 = sphi 0, %s118
  $region4: #{daegce_forward.5} parent=0 // loop_header_branch
    %13 = sbr.rel (%p11) target = $region8
  $region5: #{daegce_forward.5} parent=0 // loop_body
    %s15 = ssub.s32 %s10, 1
    %s16 = ssub.s32 %s10, 2
    %s17 = sadd.s32 %s10, 1
    %s18 = ssub.s32 %s10, %s17
    %p19 = scmp.eq.s32.totalorder %s18, 0
    %s21 = sadd.s32 %s20, 1
    %s22 = scalar_select %p19, %s20, %s21
    %p25 = pneg %p19
    %p26 = scmp.eq.s32.totalorder %s10, 1
    %p27 = por %p25, %p26
    %p28 = scmp.ne.s32.totalorder %s20, %s23
    %p29 = scmp.eq.s32.totalorder %s10, 0
    %p30 = por %p28, %p29
    %p31 = scmp.ne.s32.totalorder %s20, %s23
    %p32 = scmp.eq.s32.totalorder %s15, 1
    %p33 = por %p31, %p32
    %p34 = scmp.ne.s32.totalorder %s23, %s24
    %p35 = scmp.eq.s32.totalorder %s15, 0
    %p36 = por %p34, %p35
    %p37 = scmp.ne.s32.totalorder %s23, %s24
    %p38 = scmp.eq.s32.totalorder %s16, 1
    %p39 = por %p37, %p38
    %p41 = scmp.ne.s32.totalorder %s24, %s40
    %p42 = scmp.eq.s32.totalorder %s16, 0
    %p43 = por %p41, %p42
    %s44 = ssub.s32 %s10, %s17
    %p45 = scmp.eq.s32.totalorder %s44, 0
    %s47 = sadd.s32 %s46, 1
    %s48 = scalar_select %p45, %s46, %s47
    %p51 = pneg %p45
    %p52 = scmp.eq.s32.totalorder %s10, 1
    %p53 = por %p51, %p52
    %p54 = scmp.ne.s32.totalorder %s46, %s49
    %p55 = scmp.eq.s32.totalorder %s10, 0
    %p56 = por %p54, %p55
    %p57 = scmp.ne.s32.totalorder %s46, %s49
    %p58 = scmp.eq.s32.totalorder %s15, 1
    %p59 = por %p57, %p58
    %p60 = scmp.ne.s32.totalorder %s49, %s50
    %p61 = scmp.eq.s32.totalorder %s15, 0
    %p62 = por %p60, %p61
    %p63 = scmp.ne.s32.totalorder %s49, %s50
    %p64 = scmp.eq.s32.totalorder %s16, 1
    %p65 = por %p63, %p64
    %p67 = scmp.ne.s32.totalorder %s50, %s66
    %p68 = scmp.eq.s32.totalorder %s16, 0
    %p69 = por %p67, %p68
    %s71 = sadd.s32 %s70, 1
    %p74 = scmp.eq.s32.totalorder %s10, 1
    %p75 = scmp.ne.s32.totalorder %s70, %s72
    %p76 = scmp.eq.s32.totalorder %s10, 0
    %p77 = por %p75, %p76
    %p78 = scmp.ne.s32.totalorder %s70, %s72
    %p79 = scmp.eq.s32.totalorder %s15, 1
    %p80 = por %p78, %p79
    %p81 = scmp.ne.s32.totalorder %s72, %s73
    %p82 = scmp.eq.s32.totalorder %s15, 0
    %p83 = por %p81, %p82
    %p84 = scmp.ne.s32.totalorder %s72, %s73
    %p85 = scmp.eq.s32.totalorder %s16, 1
    %p86 = por %p84, %p85
    %p88 = scmp.ne.s32.totalorder %s73, %s87
    %p89 = scmp.eq.s32.totalorder %s16, 0
    %p90 = por %p88, %p89
    %s92 = sadd.s32 %s91, 1
    %p95 = scmp.eq.s32.totalorder %s10, 1
    %p96 = scmp.ne.s32.totalorder %s91, %s93
    %p97 = scmp.eq.s32.totalorder %s10, 0
    %p98 = por %p96, %p97
    %p99 = scmp.ne.s32.totalorder %s91, %s93
    %p100 = scmp.eq.s32.totalorder %s15, 1
    %p101 = por %p99, %p100
    %p102 = scmp.ne.s32.totalorder %s93, %s94
    %p103 = scmp.eq.s32.totalorder %s15, 0
    %p104 = por %p102, %p103
    %p105 = scmp.ne.s32.totalorder %s93, %s94
    %p106 = scmp.eq.s32.totalorder %s16, 1
    %p107 = por %p105, %p106
    %p109 = scmp.ne.s32.totalorder %s94, %s108
    %p110 = scmp.eq.s32.totalorder %s16, 0
    %p111 = por %p109, %p110
    %s112 = ssub.s32 %s10, %s17
    %p113 = scmp.eq.s32.totalorder %s112, 0
    %s115 = sadd.s32 %s114, 1
    %s116 = scalar_select %p113, %s114, %s115
    %p119 = pneg %p113
    %p120 = scmp.eq.s32.totalorder %s10, 1
    %p121 = por %p119, %p120
    %p122 = scmp.ne.s32.totalorder %s114, %s117
    %p123 = scmp.eq.s32.totalorder %s10, 0
    %p124 = por %p122, %p123
    %p125 = scmp.ne.s32.totalorder %s114, %s117
    %p126 = scmp.eq.s32.totalorder %s15, 1
    %p127 = por %p125, %p126
    %p128 = scmp.ne.s32.totalorder %s117, %s118
    %p129 = scmp.eq.s32.totalorder %s15, 0
    %p130 = por %p128, %p129
    %p131 = scmp.ne.s32.totalorder %s117, %s118
    %p132 = scmp.eq.s32.totalorder %s16, 1
    %p133 = por %p131, %p132
    %p135 = scmp.ne.s32.totalorder %s118, %s134
    %p136 = scmp.eq.s32.totalorder %s16, 0
    %p137 = por %p135, %p136
    %p138 = scmp.le.s32.totalorder 1, %s10
    %p139 = scmp.lt.s32.totalorder %s10, 3
    %p140 = pnand %p138, %p139
    %p141 = pneg %p140
    // Predicated region
    $region9: #{daegce_forward.5} parent=5 // pred_check
      _
    $region10: #{daegce_forward.5} parent=5 // pred_check_branch
      %143 = sbr.rel (%p140) target = $region12
    $region11: #{daegce_forward.5} parent=5 // pred_region
      %s144 = ssub.s32 %s10, 1
      // Predicated region
      $region13: #{daegce_forward.5} parent=11 // pred_check
        %p145 = pneg %p83
      $region14: #{daegce_forward.5} parent=11 // pred_check_branch
        %147 = sbr.rel (%p145) target = $region16
      $region15: #{daegce_forward.5} parent=11 // pred_region
        _
      $region16: #{daegce_forward.5} parent=11 // pred_fallthru
        _
      // Predicated region
      $region17: #{daegce_forward.5} parent=11 // pred_check
        %p148 = pneg %p104
      $region18: #{daegce_forward.5} parent=11 // pred_check_branch
        %150 = sbr.rel (%p148) target = $region20
      $region19: #{daegce_forward.5} parent=11 // pred_region
        _
      $region20: #{daegce_forward.5} parent=11 // pred_fallthru
        _
    $region12: #{daegce_forward.5} parent=5 // pred_fallthru
      _
    %p151 = scmp.lt.s32.totalorder %s10, 2
    // Predicated region
    $region21: #{daegce_forward.5} parent=5 // pred_check
      %p152 = pneg %p151
    $region22: #{daegce_forward.5} parent=5 // pred_check_branch
      %154 = sbr.rel (%p152) target = $region24
    $region23: #{daegce_forward.5} parent=5 // pred_region
      // Predicated region
      $region25: #{daegce_forward.5} parent=23 // pred_check
        %p155 = pneg %p30
      $region26: #{daegce_forward.5} parent=23 // pred_check_branch
        %157 = sbr.rel (%p155) target = $region28
      $region27: #{daegce_forward.5} parent=23 // pred_region
        %p158 = scmp.lt.s32.totalorder %s10, 1
        %s159 = scalar_select %p158, %s10, 1
        %s160 = smul.addr %s159, 8
        %s161 = scalar_lea.vmem %s0, %s160
      $region28: #{daegce_forward.5} parent=23 // pred_fallthru
        _
      // Predicated region
      $region29: #{daegce_forward.5} parent=23 // pred_check
        %p162 = pneg %p56
      $region30: #{daegce_forward.5} parent=23 // pred_check_branch
        %164 = sbr.rel (%p162) target = $region32
      $region31: #{daegce_forward.5} parent=23 // pred_region
        %s165 = smul.u32 4, %s10
        %p166 = scmp.lt.s32.totalorder %s165, 7
        %s167 = scalar_select %p166, %s165, 7
        %s168 = smul.addr %s167, 8
        %s169 = scalar_lea.vmem %s1, %s168
        %s170 = smul.u32 4, %s10
      $region32: #{daegce_forward.5} parent=23 // pred_fallthru
        _
    $region24: #{daegce_forward.5} parent=5 // pred_fallthru
      _
    %p171 = scmp.le.s32.totalorder 1, %s10
    %p172 = scmp.lt.s32.totalorder %s10, 3
    %p173 = pnand %p171, %p172
    %p174 = pneg %p173
    // Predicated region
    $region33: #{daegce_forward.5} parent=5 // pred_check
      _
    $region34: #{daegce_forward.5} parent=5 // pred_check_branch
      %176 = sbr.rel (%p173) target = $region36
    $region35: #{daegce_forward.5} parent=5 // pred_region
      %s177 = ssub.s32 %s10, 1
      %p178 = scmp.lt.s32.totalorder %s15, 1
      %s179 = scalar_select %p178, %s15, 1
      %s180 = smul.addr %s179, 8
      %s181 = scalar_lea.vmem %s0, %s180
      %p182 = pneg %p36
      %p183 = pneg %p33
      %s184 = smul.u32 4, %s15
      %p185 = scmp.lt.s32.totalorder %s184, 7
      %s186 = scalar_select %p185, %s184, 7
      %s187 = smul.addr %s186, 8
      %s188 = scalar_lea.vmem %s1, %s187
      %p189 = pneg %p62
      %p190 = pneg %p59
      %p191 = pneg %p83
      %p192 = pneg %p80
      %p193 = pneg %p104
      %p194 = pneg %p101
      %p195 = pneg %p130
      %p196 = pneg %p127
      %s197 = smul.u32 4, %s15
      %p198 = scmp.lt.s32.totalorder %s197, 7
      %s199 = scalar_select %p198, %s197, 7
      %s200 = smul.addr %s199, 8
      %s201 = scalar_lea.vmem %s4, %s200
      %p202 = scmp.lt.s32.totalorder %s15, 1
      %s203 = scalar_select %p202, %s15, 1
      %s204 = smul.addr %s203, 8
      %s205 = scalar_lea.vmem %s0, %s204
      %s206 = smul.u32 4, %s15
      %p207 = scmp.lt.s32.totalorder %s206, 7
      %s208 = scalar_select %p207, %s206, 7
      %s209 = smul.addr %s208, 8
      %s210 = scalar_lea.vmem %s1, %s209
      %s211 = smul.u32 4, %s15
      %s212 = smul.u32 4, %s15
      %p213 = scmp.lt.s32.totalorder %s212, 7
      %s214 = scalar_select %p213, %s212, 7
      %s215 = smul.addr %s214, 8
      %s216 = scalar_lea.vmem %s4, %s215
      %s217 = smul.u32 4, %s15
      %v221 = vld [vmem:[%s205] sm:$0xff]
      %vm222 = vnez %v221
      %v223 = vld [vmem:[%s210] sm:$0xff]
      %v224 = vld [vmem:[%s210 + $0x8] sm:$0xff]
      %v225 = vld [vmem:[%s210 + $0x10] sm:$0xff]
      %v226 = vld [vmem:[%s210 + $0x18] sm:$0xff]
      %v227 = vld [vmem:[%s2] sm:$0xff]
      %v228 = vld [vmem:[%s3] sm:$0xf]
      %v229 = vld [vmem:[%s3 + $0x4] sm:$0xf]
      %v230 = vld [vmem:[%s3 + $0x8] sm:$0xf]
      %v231 = vld [vmem:[%s3 + $0xc] sm:$0xf]
      %v232 = vld [vmem:[%s3 + $0x10] sm:$0xf]
      %v233 = vld [vmem:[%s3 + $0x14] sm:$0xf]
      %v234 = vld [vmem:[%s3 + $0x18] sm:$0xf]
      %v235 = vld [vmem:[%s3 + $0x1c] sm:$0xf]
      %237 = vset.pattern.permute.xlu0 0
      %238 = vperm.xlu0 %237, %v223
      %v239 = vpop.permute.xlu0 %238
      %242 = vset.pattern.permute.xlu0 0
      %243 = vperm.xlu0 %242, %v224
      %v244 = vpop.permute.xlu0 %243
      %247 = vset.pattern.permute.xlu0 0
      %248 = vperm.xlu0 %247, %v225
      %v249 = vpop.permute.xlu0 %248
      %252 = vset.pattern.permute.xlu0 0
      %253 = vperm.xlu0 %252, %v226
      %v254 = vpop.permute.xlu0 %253
      %v256 = vlaneseq
      %v257 = vshrl.u32 %v256, 7
      %v258 = vsub.s32 0, %v257
      %v259 = vrot.slane %v227, %v258
      %v260 = vadd.f32 %v239, %v259
      %v261 = vadd.f32 %v244, %v259
      %v262 = vadd.f32 %v249, %v259
      %v263 = vadd.f32 %v254, %v259
      %v264 = vsub.f32 0.0, %v260
      %v265 = vsub.f32 0.0, %v261
      %v266 = vsub.f32 0.0, %v262
      %v267 = vsub.f32 0.0, %v263
      %v268 = vmul.f32 %v260, -0.2
      %v269 = vmul.f32 %v261, -0.2
      %v270 = vmul.f32 %v262, -0.2
      %v271 = vmul.f32 %v263, -0.2
      %v272 = vmin.f32 %v264, %v268
      %v273 = vmin.f32 %v265, %v269
      %v274 = vmin.f32 %v266, %v270
      %v275 = vmin.f32 %v267, %v271
      %v276 = vsel %vm222, 16843009, 0
      %v277 = vunpack.c.0.s8 %v276
      %v278 = vunpack.c.1.s8 %v276
      %v279 = vunpack.c.2.s8 %v276
      %v280 = vunpack.c.3.s8 %v276
      %v281 = vpack.c.b16 %v277, %v277
      %v282 = vpack.c.b8 %v281, %v281
      %v283 = vpack.c.b16 %v278, %v278
      %v284 = vpack.c.b8 %v283, %v283
      %v285 = vpack.c.b16 %v279, %v279
      %v286 = vpack.c.b8 %v285, %v285
      %v287 = vpack.c.b16 %v280, %v280
      %v288 = vpack.c.b8 %v287, %v287
      %vm289 = vnez %v282
      %vm290 = vnez %v284
      %vm291 = vnez %v286
      %vm292 = vnez %v288
      %v293 = vsel %vm289, 16843009, 0
      %v294 = vsel %vm290, 16843009, 0
      %v295 = vsel %vm291, 16843009, 0
      %v296 = vsel %vm292, 16843009, 0
      %v297 = vunpack.c.0.s8 %v293
      %v298 = vunpack.c.0.s8 %v294
      %v299 = vunpack.c.0.s8 %v295
      %v300 = vunpack.c.0.s8 %v296
      %vm301 = vcmp.ne.s32.totalorder %v297, 0
      %vm302 = vcmp.ne.s32.totalorder %v298, 0
      %vm303 = vcmp.ne.s32.totalorder %v299, 0
      %vm304 = vcmp.ne.s32.totalorder %v300, 0
      %v305 = vsel %vm301, %v272, -1e+30
      %v306 = vsel %vm302, %v273, -1e+30
      %v307 = vsel %vm303, %v274, -1e+30
      %v308 = vsel %vm304, %v275, -1e+30
      %v309 = vpack.c.bf16 %v306, %v305
      %v310 = vpack.c.bf16 %v308, %v307
      %v312 = vmul.bf16 %v309, 1069105081
      %v313 = vpow.bf16.pop %v312
      %v315 = vmul.bf16 %v310, 1069105081
      %v316 = vpow.bf16.pop %v315
      %v325 = vunpack.c.l.b16 %v228
      %v326 = vunpack.c.l.b16 %v229
      %v327 = vunpack.c.l.b16 %v230
      %v328 = vunpack.c.l.b16 %v231
      %v329 = vunpack.c.l.b16 %v232
      %v330 = vunpack.c.l.b16 %v233
      %v331 = vunpack.c.l.b16 %v234
      %v332 = vunpack.c.l.b16 %v235
      %v333 = vpack.c.b16 %v326, %v325
      %v334 = vpack.c.b16 %v328, %v327
      %v335 = vpack.c.b16 %v330, %v329
      %v336 = vpack.c.b16 %v332, %v331
      %vm341 = vcmask 523264
      %v343 = vsel %vm341, %v313, 0
      %v346 = vsel %vm341, %v316, 0
      %348 = vmatprep.subr.bf16.mxu0 0
      %349 = vmatpush1.bf16.msra.mxu0 0
      %350 = vmatprep.subr.bf16.mxu0 0
      %351 = vmatpush1.bf16.msra.mxu0 0
      %352 = vmatprep.subr.bf16.mxu0 0
      %353 = vmatpush1.bf16.msra.mxu0 0
      %354 = vmatprep.subr.bf16.mxu0 0
      %355 = vmatpush1.bf16.msra.mxu0 0
      %356 = vmatprep.subr.bf16.mxu0 0
      %357 = vmatpush1.bf16.msra.mxu0 %v336
      %358 = vmatprep.subr.bf16.mxu0 0
      %359 = vmatpush1.bf16.msra.mxu0 %v335
      %360 = vmatprep.subr.bf16.mxu0 0
      %361 = vmatpush1.bf16.msra.mxu0 %v334
      %362 = vmatprep.subr.bf16.mxu0 0
      %363 = vmatpush1.bf16.msra.mxu0 %v333
      %364 = vmatprep.subr.bf16.mxu0 0
      %365 = vmatpush2.bf16.msra.mxu0 0
      %366 = vmatprep.subr.bf16.mxu0 0
      %367 = vmatpush2.bf16.msra.mxu0 0
      %368 = vmatprep.subr.bf16.mxu0 0
      %369 = vmatpush2.bf16.msra.mxu0 0
      %370 = vmatprep.subr.bf16.mxu0 0
      %371 = vmatpush2.bf16.msra.mxu0 0
      %372 = vmatprep.subr.bf16.mxu0 0
      %373 = vmatpush2.bf16.msra.mxu0 0
      %374 = vmatprep.subr.bf16.mxu0 0
      %375 = vmatpush2.bf16.msra.mxu0 0
      %376 = vmatprep.subr.bf16.mxu0 0
      %377 = vmatpush2.bf16.msra.mxu0 0
      %378 = vmatprep.subr.bf16.mxu0 0
      %379 = vmatpush2.bf16.msra.mxu0 0
      %380 = vmatprep.mubr.bf16.mxu0 0
      %381 = vmatmul.mubr.bf16.gmra.mxu0 %v343
      %v382 = vpop.f32.mrf.mxu0
      %v383 = vadd.f32 0.0, %v382
      %v384 = vpop.f32.mrf.mxu0
      %v385 = vpop.f32.mrf.mxu0
      %v386 = vadd.f32 0.0, %v385
      %v387 = vpop.f32.mrf.mxu0
      %388 = vmatprep.mubr.bf16.mxu0 0
      %389 = vmatmul.mubr.bf16.gmra.mxu0 %v346
      %v390 = vpop.f32.mrf.mxu0
      %v391 = vadd.f32 0.0, %v390
      %v392 = vpop.f32.mrf.mxu0
      %v393 = vpop.f32.mrf.mxu0
      %v394 = vadd.f32 0.0, %v393
      %v395 = vpop.f32.mrf.mxu0
      %396 = vdwg.mxu0
      %v397 = vmax.f32 %v383, 1e-20
      %v398 = vmax.f32 %v386, 1e-20
      %v399 = vmax.f32 %v391, 1e-20
      %v400 = vmax.f32 %v394, 1e-20
      %v401 = vrcp.pop %v397
      %v402 = vrcp.pop %v398
      %v403 = vrcp.pop %v399
      %v404 = vrcp.pop %v400
      %406 = vset.pattern.permute.xlu0 64
      %407 = vperm.xlu0 %406, %v401
      %v408 = vpop.permute.xlu0 %407
      %411 = vset.pattern.permute.xlu0 64
      %412 = vperm.xlu0 %411, %v402
      %v413 = vpop.permute.xlu0 %412
      %416 = vset.pattern.permute.xlu0 64
      %417 = vperm.xlu0 %416, %v403
      %v418 = vpop.permute.xlu0 %417
      %421 = vset.pattern.permute.xlu0 64
      %422 = vperm.xlu0 %421, %v404
      %v423 = vpop.permute.xlu0 %422
      %v425 = vmul.f32 %v383, %v408
      %v426 = vmul.f32 %v386, %v413
      %v427 = vmul.f32 %v391, %v418
      %v428 = vmul.f32 %v394, %v423
      %vm429 = vcmp.gt.f32.partialorder %v425, 0.0
      %vm430 = vcmp.gt.f32.partialorder %v426, 0.0
      %vm431 = vcmp.gt.f32.partialorder %v427, 0.0
      %vm432 = vcmp.gt.f32.partialorder %v428, 0.0
      %v433 = vmul.f32 %v425, 1.442695
      %v434 = vpow.pop %v433
      %v435 = vmul.f32 %v426, 1.442695
      %v436 = vpow.pop %v435
      %v437 = vmul.f32 %v427, 1.442695
      %v438 = vpow.pop %v437
      %v439 = vmul.f32 %v428, 1.442695
      %v440 = vpow.pop %v439
      %v441 = vsub.f32 %v434, 1.0
      %v442 = vsub.f32 %v436, 1.0
      %v443 = vsub.f32 %v438, 1.0
      %v444 = vsub.f32 %v440, 1.0
      %v445 = vsel %vm429, %v425, %v441
      %v446 = vsel %vm430, %v426, %v442
      %v447 = vsel %vm431, %v427, %v443
      %v448 = vsel %vm432, %v428, %v444
      %vm449 = vcmask 130048
      %450 = vst.msk [vmem:[%s216] sm:$0xff] %vm449, %v445
      %451 = vst.msk [vmem:[%s216 + $0x8] sm:$0xff] %vm449, %v446
      %452 = vst.msk [vmem:[%s216 + $0x10] sm:$0xff] %vm449, %v447
      %453 = vst.msk [vmem:[%s216 + $0x18] sm:$0xff] %vm449, %v448
      %454 = vset.pattern.permute.xlu0 1
      %455 = vperm.xlu0 %454, %v223
      %v456 = vpop.permute.xlu0 %455
      %458 = vset.pattern.permute.xlu0 1
      %459 = vperm.xlu0 %458, %v224
      %v460 = vpop.permute.xlu0 %459
      %462 = vset.pattern.permute.xlu0 1
      %463 = vperm.xlu0 %462, %v225
      %v464 = vpop.permute.xlu0 %463
      %466 = vset.pattern.permute.xlu0 1
      %467 = vperm.xlu0 %466, %v226
      %v468 = vpop.permute.xlu0 %467
      %v470 = vlaneseq
      %v471 = vshrl.u32 %v470, 7
      %v472 = vsub.s32 1, %v471
      %v473 = vrot.slane %v227, %v472
      %v474 = vadd.f32 %v456, %v473
      %v475 = vadd.f32 %v460, %v473
      %v476 = vadd.f32 %v464, %v473
      %v477 = vadd.f32 %v468, %v473
      %v478 = vsub.f32 0.0, %v474
      %v479 = vsub.f32 0.0, %v475
      %v480 = vsub.f32 0.0, %v476
      %v481 = vsub.f32 0.0, %v477
      %v482 = vmul.f32 %v474, -0.2
      %v483 = vmul.f32 %v475, -0.2
      %v484 = vmul.f32 %v476, -0.2
      %v485 = vmul.f32 %v477, -0.2
      %v486 = vmin.f32 %v478, %v482
      %v487 = vmin.f32 %v479, %v483
      %v488 = vmin.f32 %v480, %v484
      %v489 = vmin.f32 %v481, %v485
      %v490 = vsel %vm301, %v486, -1e+30
      %v491 = vsel %vm302, %v487, -1e+30
      %v492 = vsel %vm303, %v488, -1e+30
      %v493 = vsel %vm304, %v489, -1e+30
      %v494 = vpack.c.bf16 %v491, %v490
      %v495 = vpack.c.bf16 %v493, %v492
      %v497 = vmul.bf16 %v494, 1069105081
      %v498 = vpow.bf16.pop %v497
      %v500 = vmul.bf16 %v495, 1069105081
      %v501 = vpow.bf16.pop %v500
      %v503 = vsel %vm341, %v498, 0
      %v506 = vsel %vm341, %v501, 0
      %508 = vmatprep.subr.bf16.mxu0 0
      %509 = vmatpush1.bf16.msra.mxu0 0
      %510 = vmatprep.subr.bf16.mxu0 0
      %511 = vmatpush1.bf16.msra.mxu0 0
      %512 = vmatprep.subr.bf16.mxu0 0
      %513 = vmatpush1.bf16.msra.mxu0 0
      %514 = vmatprep.subr.bf16.mxu0 0
      %515 = vmatpush1.bf16.msra.mxu0 0
      %516 = vmatprep.subr.bf16.mxu0 0
      %517 = vmatpush1.bf16.msra.mxu0 %v336
      %518 = vmatprep.subr.bf16.mxu0 0
      %519 = vmatpush1.bf16.msra.mxu0 %v335
      %520 = vmatprep.subr.bf16.mxu0 0
      %521 = vmatpush1.bf16.msra.mxu0 %v334
      %522 = vmatprep.subr.bf16.mxu0 0
      %523 = vmatpush1.bf16.msra.mxu0 %v333
      %524 = vmatprep.subr.bf16.mxu0 0
      %525 = vmatpush2.bf16.msra.mxu0 0
      %526 = vmatprep.subr.bf16.mxu0 0
      %527 = vmatpush2.bf16.msra.mxu0 0
      %528 = vmatprep.subr.bf16.mxu0 0
      %529 = vmatpush2.bf16.msra.mxu0 0
      %530 = vmatprep.subr.bf16.mxu0 0
      %531 = vmatpush2.bf16.msra.mxu0 0
      %532 = vmatprep.subr.bf16.mxu0 0
      %533 = vmatpush2.bf16.msra.mxu0 0
      %534 = vmatprep.subr.bf16.mxu0 0
      %535 = vmatpush2.bf16.msra.mxu0 0
      %536 = vmatprep.subr.bf16.mxu0 0
      %537 = vmatpush2.bf16.msra.mxu0 0
      %538 = vmatprep.subr.bf16.mxu0 0
      %539 = vmatpush2.bf16.msra.mxu0 0
      %540 = vmatprep.mubr.bf16.mxu0 0
      %541 = vmatmul.mubr.bf16.gmra.mxu0 %v503
      %v542 = vpop.f32.mrf.mxu0
      %v543 = vadd.f32 0.0, %v542
      %v544 = vpop.f32.mrf.mxu0
      %v545 = vpop.f32.mrf.mxu0
      %v546 = vadd.f32 0.0, %v545
      %v547 = vpop.f32.mrf.mxu0
      %548 = vmatprep.mubr.bf16.mxu0 0
      %549 = vmatmul.mubr.bf16.gmra.mxu0 %v506
      %v550 = vpop.f32.mrf.mxu0
      %v551 = vadd.f32 0.0, %v550
      %v552 = vpop.f32.mrf.mxu0
      %v553 = vpop.f32.mrf.mxu0
      %v554 = vadd.f32 0.0, %v553
      %v555 = vpop.f32.mrf.mxu0
      %556 = vdwg.mxu0
      %v557 = vmax.f32 %v543, 1e-20
      %v558 = vmax.f32 %v546, 1e-20
      %v559 = vmax.f32 %v551, 1e-20
      %v560 = vmax.f32 %v554, 1e-20
      %v561 = vrcp.pop %v557
      %v562 = vrcp.pop %v558
      %v563 = vrcp.pop %v559
      %v564 = vrcp.pop %v560
      %566 = vset.pattern.permute.xlu0 64
      %567 = vperm.xlu0 %566, %v561
      %v568 = vpop.permute.xlu0 %567
      %571 = vset.pattern.permute.xlu0 64
      %572 = vperm.xlu0 %571, %v562
      %v573 = vpop.permute.xlu0 %572
      %576 = vset.pattern.permute.xlu0 64
      %577 = vperm.xlu0 %576, %v563
      %v578 = vpop.permute.xlu0 %577
      %581 = vset.pattern.permute.xlu0 64
      %582 = vperm.xlu0 %581, %v564
      %v583 = vpop.permute.xlu0 %582
      %v585 = vmul.f32 %v543, %v568
      %v586 = vmul.f32 %v546, %v573
      %v587 = vmul.f32 %v551, %v578
      %v588 = vmul.f32 %v554, %v583
      %vm589 = vcmp.gt.f32.partialorder %v585, 0.0
      %vm590 = vcmp.gt.f32.partialorder %v586, 0.0
      %vm591 = vcmp.gt.f32.partialorder %v587, 0.0
      %vm592 = vcmp.gt.f32.partialorder %v588, 0.0
      %v593 = vmul.f32 %v585, 1.442695
      %v594 = vpow.pop %v593
      %v595 = vmul.f32 %v586, 1.442695
      %v596 = vpow.pop %v595
      %v597 = vmul.f32 %v587, 1.442695
      %v598 = vpow.pop %v597
      %v599 = vmul.f32 %v588, 1.442695
      %v600 = vpow.pop %v599
      %v601 = vsub.f32 %v594, 1.0
      %v602 = vsub.f32 %v596, 1.0
      %v603 = vsub.f32 %v598, 1.0
      %v604 = vsub.f32 %v600, 1.0
      %v605 = vsel %vm589, %v585, %v601
      %v606 = vsel %vm590, %v586, %v602
      %v607 = vsel %vm591, %v587, %v603
      %v608 = vsel %vm592, %v588, %v604
      %vm609 = vcmask 261248
      %610 = vst.msk [vmem:[%s216] sm:$0xff] %vm609, %v605
      %611 = vst.msk [vmem:[%s216 + $0x8] sm:$0xff] %vm609, %v606
      %612 = vst.msk [vmem:[%s216 + $0x10] sm:$0xff] %vm609, %v607
      %613 = vst.msk [vmem:[%s216 + $0x18] sm:$0xff] %vm609, %v608
      %614 = vset.pattern.permute.xlu0 2
      %615 = vperm.xlu0 %614, %v223
      %v616 = vpop.permute.xlu0 %615
      %618 = vset.pattern.permute.xlu0 2
      %619 = vperm.xlu0 %618, %v224
      %v620 = vpop.permute.xlu0 %619
      %622 = vset.pattern.permute.xlu0 2
      %623 = vperm.xlu0 %622, %v225
      %v624 = vpop.permute.xlu0 %623
      %626 = vset.pattern.permute.xlu0 2
      %627 = vperm.xlu0 %626, %v226
      %v628 = vpop.permute.xlu0 %627
      %v630 = vlaneseq
      %v631 = vshrl.u32 %v630, 7
      %v632 = vsub.s32 2, %v631
      %v633 = vrot.slane %v227, %v632
      %v634 = vadd.f32 %v616, %v633
      %v635 = vadd.f32 %v620, %v633
      %v636 = vadd.f32 %v624, %v633
      %v637 = vadd.f32 %v628, %v633
      %v638 = vsub.f32 0.0, %v634
      %v639 = vsub.f32 0.0, %v635
      %v640 = vsub.f32 0.0, %v636
      %v641 = vsub.f32 0.0, %v637
      %v642 = vmul.f32 %v634, -0.2
      %v643 = vmul.f32 %v635, -0.2
      %v644 = vmul.f32 %v636, -0.2
      %v645 = vmul.f32 %v637, -0.2
      %v646 = vmin.f32 %v638, %v642
      %v647 = vmin.f32 %v639, %v643
      %v648 = vmin.f32 %v640, %v644
      %v649 = vmin.f32 %v641, %v645
      %v650 = vsel %vm301, %v646, -1e+30
      %v651 = vsel %vm302, %v647, -1e+30
      %v652 = vsel %vm303, %v648, -1e+30
      %v653 = vsel %vm304, %v649, -1e+30
      %v654 = vpack.c.bf16 %v651, %v650
      %v655 = vpack.c.bf16 %v653, %v652
      %v657 = vmul.bf16 %v654, 1069105081
      %v658 = vpow.bf16.pop %v657
      %v660 = vmul.bf16 %v655, 1069105081
      %v661 = vpow.bf16.pop %v660
      %v663 = vsel %vm341, %v658, 0
      %v666 = vsel %vm341, %v661, 0
      %668 = vmatprep.subr.bf16.mxu0 0
      %669 = vmatpush1.bf16.msra.mxu0 0
      %670 = vmatprep.subr.bf16.mxu0 0
      %671 = vmatpush1.bf16.msra.mxu0 0
      %672 = vmatprep.subr.bf16.mxu0 0
      %673 = vmatpush1.bf16.msra.mxu0 0
      %674 = vmatprep.subr.bf16.mxu0 0
      %675 = vmatpush1.bf16.msra.mxu0 0
      %676 = vmatprep.subr.bf16.mxu0 0
      %677 = vmatpush1.bf16.msra.mxu0 %v336
      %678 = vmatprep.subr.bf16.mxu0 0
      %679 = vmatpush1.bf16.msra.mxu0 %v335
      %680 = vmatprep.subr.bf16.mxu0 0
      %681 = vmatpush1.bf16.msra.mxu0 %v334
      %682 = vmatprep.subr.bf16.mxu0 0
      %683 = vmatpush1.bf16.msra.mxu0 %v333
      %684 = vmatprep.subr.bf16.mxu0 0
      %685 = vmatpush2.bf16.msra.mxu0 0
      %686 = vmatprep.subr.bf16.mxu0 0
      %687 = vmatpush2.bf16.msra.mxu0 0
      %688 = vmatprep.subr.bf16.mxu0 0
      %689 = vmatpush2.bf16.msra.mxu0 0
      %690 = vmatprep.subr.bf16.mxu0 0
      %691 = vmatpush2.bf16.msra.mxu0 0
      %692 = vmatprep.subr.bf16.mxu0 0
      %693 = vmatpush2.bf16.msra.mxu0 0
      %694 = vmatprep.subr.bf16.mxu0 0
      %695 = vmatpush2.bf16.msra.mxu0 0
      %696 = vmatprep.subr.bf16.mxu0 0
      %697 = vmatpush2.bf16.msra.mxu0 0
      %698 = vmatprep.subr.bf16.mxu0 0
      %699 = vmatpush2.bf16.msra.mxu0 0
      %700 = vmatprep.mubr.bf16.mxu0 0
      %701 = vmatmul.mubr.bf16.gmra.mxu0 %v663
      %v702 = vpop.f32.mrf.mxu0
      %v703 = vadd.f32 0.0, %v702
      %v704 = vpop.f32.mrf.mxu0
      %v705 = vpop.f32.mrf.mxu0
      %v706 = vadd.f32 0.0, %v705
      %v707 = vpop.f32.mrf.mxu0
      %708 = vmatprep.mubr.bf16.mxu0 0
      %709 = vmatmul.mubr.bf16.gmra.mxu0 %v666
      %v710 = vpop.f32.mrf.mxu0
      %v711 = vadd.f32 0.0, %v710
      %v712 = vpop.f32.mrf.mxu0
      %v713 = vpop.f32.mrf.mxu0
      %v714 = vadd.f32 0.0, %v713
      %v715 = vpop.f32.mrf.mxu0
      %716 = vdwg.mxu0
      %v717 = vmax.f32 %v703, 1e-20
      %v718 = vmax.f32 %v706, 1e-20
      %v719 = vmax.f32 %v711, 1e-20
      %v720 = vmax.f32 %v714, 1e-20
      %v721 = vrcp.pop %v717
      %v722 = vrcp.pop %v718
      %v723 = vrcp.pop %v719
      %v724 = vrcp.pop %v720
      %726 = vset.pattern.permute.xlu0 64
      %727 = vperm.xlu0 %726, %v721
      %v728 = vpop.permute.xlu0 %727
      %731 = vset.pattern.permute.xlu0 64
      %732 = vperm.xlu0 %731, %v722
      %v733 = vpop.permute.xlu0 %732
      %736 = vset.pattern.permute.xlu0 64
      %737 = vperm.xlu0 %736, %v723
      %v738 = vpop.permute.xlu0 %737
      %741 = vset.pattern.permute.xlu0 64
      %742 = vperm.xlu0 %741, %v724
      %v743 = vpop.permute.xlu0 %742
      %v745 = vmul.f32 %v703, %v728
      %v746 = vmul.f32 %v706, %v733
      %v747 = vmul.f32 %v711, %v738
      %v748 = vmul.f32 %v714, %v743
      %vm749 = vcmp.gt.f32.partialorder %v745, 0.0
      %vm750 = vcmp.gt.f32.partialorder %v746, 0.0
      %vm751 = vcmp.gt.f32.partialorder %v747, 0.0
      %vm752 = vcmp.gt.f32.partialorder %v748, 0.0
      %v753 = vmul.f32 %v745, 1.442695
      %v754 = vpow.pop %v753
      %v755 = vmul.f32 %v746, 1.442695
      %v756 = vpow.pop %v755
      %v757 = vmul.f32 %v747, 1.442695
      %v758 = vpow.pop %v757
      %v759 = vmul.f32 %v748, 1.442695
      %v760 = vpow.pop %v759
      %v761 = vsub.f32 %v754, 1.0
      %v762 = vsub.f32 %v756, 1.0
      %v763 = vsub.f32 %v758, 1.0
      %v764 = vsub.f32 %v760, 1.0
      %v765 = vsel %vm749, %v745, %v761
      %v766 = vsel %vm750, %v746, %v762
      %v767 = vsel %vm751, %v747, %v763
      %v768 = vsel %vm752, %v748, %v764
      %vm769 = vcmask 392448
      %770 = vst.msk [vmem:[%s216] sm:$0xff] %vm769, %v765
      %771 = vst.msk [vmem:[%s216 + $0x8] sm:$0xff] %vm769, %v766
      %772 = vst.msk [vmem:[%s216 + $0x10] sm:$0xff] %vm769, %v767
      %773 = vst.msk [vmem:[%s216 + $0x18] sm:$0xff] %vm769, %v768
      %774 = vset.pattern.permute.xlu0 3
      %775 = vperm.xlu0 %774, %v223
      %v776 = vpop.permute.xlu0 %775
      %778 = vset.pattern.permute.xlu0 3
      %779 = vperm.xlu0 %778, %v224
      %v780 = vpop.permute.xlu0 %779
      %782 = vset.pattern.permute.xlu0 3
      %783 = vperm.xlu0 %782, %v225
      %v784 = vpop.permute.xlu0 %783
      %786 = vset.pattern.permute.xlu0 3
      %787 = vperm.xlu0 %786, %v226
      %v788 = vpop.permute.xlu0 %787
      %v790 = vlaneseq
      %v791 = vshrl.u32 %v790, 7
      %v792 = vsub.s32 3, %v791
      %v793 = vrot.slane %v227, %v792
      %v794 = vadd.f32 %v776, %v793
      %v795 = vadd.f32 %v780, %v793
      %v796 = vadd.f32 %v784, %v793
      %v797 = vadd.f32 %v788, %v793
      %v798 = vsub.f32 0.0, %v794
      %v799 = vsub.f32 0.0, %v795
      %v800 = vsub.f32 0.0, %v796
      %v801 = vsub.f32 0.0, %v797
      %v802 = vmul.f32 %v794, -0.2
      %v803 = vmul.f32 %v795, -0.2
      %v804 = vmul.f32 %v796, -0.2
      %v805 = vmul.f32 %v797, -0.2
      %v806 = vmin.f32 %v798, %v802
      %v807 = vmin.f32 %v799, %v803
      %v808 = vmin.f32 %v800, %v804
      %v809 = vmin.f32 %v801, %v805
      %v810 = vsel %vm301, %v806, -1e+30
      %v811 = vsel %vm302, %v807, -1e+30
      %v812 = vsel %vm303, %v808, -1e+30
      %v813 = vsel %vm304, %v809, -1e+30
      %v814 = vpack.c.bf16 %v811, %v810
      %v815 = vpack.c.bf16 %v813, %v812
      %v817 = vmul.bf16 %v814, 1069105081
      %v818 = vpow.bf16.pop %v817
      %v820 = vmul.bf16 %v815, 1069105081
      %v821 = vpow.bf16.pop %v820
      %v823 = vsel %vm341, %v818, 0
      %v826 = vsel %vm341, %v821, 0
      %828 = vmatprep.subr.bf16.mxu0 0
      %829 = vmatpush1.bf16.msra.mxu0 0
      %830 = vmatprep.subr.bf16.mxu0 0
      %831 = vmatpush1.bf16.msra.mxu0 0
      %832 = vmatprep.subr.bf16.mxu0 0
      %833 = vmatpush1.bf16.msra.mxu0 0
      %834 = vmatprep.subr.bf16.mxu0 0
      %835 = vmatpush1.bf16.msra.mxu0 0
      %836 = vmatprep.subr.bf16.mxu0 0
      %837 = vmatpush1.bf16.msra.mxu0 %v336
      %838 = vmatprep.subr.bf16.mxu0 0
      %839 = vmatpush1.bf16.msra.mxu0 %v335
      %840 = vmatprep.subr.bf16.mxu0 0
      %841 = vmatpush1.bf16.msra.mxu0 %v334
      %842 = vmatprep.subr.bf16.mxu0 0
      %843 = vmatpush1.bf16.msra.mxu0 %v333
      %844 = vmatprep.subr.bf16.mxu0 0
      %845 = vmatpush2.bf16.msra.mxu0 0
      %846 = vmatprep.subr.bf16.mxu0 0
      %847 = vmatpush2.bf16.msra.mxu0 0
      %848 = vmatprep.subr.bf16.mxu0 0
      %849 = vmatpush2.bf16.msra.mxu0 0
      %850 = vmatprep.subr.bf16.mxu0 0
      %851 = vmatpush2.bf16.msra.mxu0 0
      %852 = vmatprep.subr.bf16.mxu0 0
      %853 = vmatpush2.bf16.msra.mxu0 0
      %854 = vmatprep.subr.bf16.mxu0 0
      %855 = vmatpush2.bf16.msra.mxu0 0
      %856 = vmatprep.subr.bf16.mxu0 0
      %857 = vmatpush2.bf16.msra.mxu0 0
      %858 = vmatprep.subr.bf16.mxu0 0
      %859 = vmatpush2.bf16.msra.mxu0 0
      %860 = vmatprep.mubr.bf16.mxu0 0
      %861 = vmatmul.mubr.bf16.gmra.mxu0 %v823
      %v862 = vpop.f32.mrf.mxu0
      %v863 = vadd.f32 0.0, %v862
      %v864 = vpop.f32.mrf.mxu0
      %v865 = vpop.f32.mrf.mxu0
      %v866 = vadd.f32 0.0, %v865
      %v867 = vpop.f32.mrf.mxu0
      %868 = vmatprep.mubr.bf16.mxu0 0
      %869 = vmatmul.mubr.bf16.gmra.mxu0 %v826
      %v870 = vpop.f32.mrf.mxu0
      %v871 = vadd.f32 0.0, %v870
      %v872 = vpop.f32.mrf.mxu0
      %v873 = vpop.f32.mrf.mxu0
      %v874 = vadd.f32 0.0, %v873
      %v875 = vpop.f32.mrf.mxu0
      %876 = vdwg.mxu0
      %v877 = vmax.f32 %v863, 1e-20
      %v878 = vmax.f32 %v866, 1e-20
      %v879 = vmax.f32 %v871, 1e-20
      %v880 = vmax.f32 %v874, 1e-20
      %v881 = vrcp.pop %v877
      %v882 = vrcp.pop %v878
      %v883 = vrcp.pop %v879
      %v884 = vrcp.pop %v880
      %886 = vset.pattern.permute.xlu0 64
      %887 = vperm.xlu0 %886, %v881
      %v888 = vpop.permute.xlu0 %887
      %891 = vset.pattern.permute.xlu0 64
      %892 = vperm.xlu0 %891, %v882
      %v893 = vpop.permute.xlu0 %892
      %896 = vset.pattern.permute.xlu0 64
      %897 = vperm.xlu0 %896, %v883
      %v898 = vpop.permute.xlu0 %897
      %901 = vset.pattern.permute.xlu0 64
      %902 = vperm.xlu0 %901, %v884
      %v903 = vpop.permute.xlu0 %902
      %v905 = vmul.f32 %v863, %v888
      %v906 = vmul.f32 %v866, %v893
      %v907 = vmul.f32 %v871, %v898
      %v908 = vmul.f32 %v874, %v903
      %vm909 = vcmp.gt.f32.partialorder %v905, 0.0
      %vm910 = vcmp.gt.f32.partialorder %v906, 0.0
      %vm911 = vcmp.gt.f32.partialorder %v907, 0.0
      %vm912 = vcmp.gt.f32.partialorder %v908, 0.0
      %v913 = vmul.f32 %v905, 1.442695
      %v914 = vpow.pop %v913
      %v915 = vmul.f32 %v906, 1.442695
      %v916 = vpow.pop %v915
      %v917 = vmul.f32 %v907, 1.442695
      %v918 = vpow.pop %v917
      %v919 = vmul.f32 %v908, 1.442695
      %v920 = vpow.pop %v919
      %v921 = vsub.f32 %v914, 1.0
      %v922 = vsub.f32 %v916, 1.0
      %v923 = vsub.f32 %v918, 1.0
      %v924 = vsub.f32 %v920, 1.0
      %v925 = vsel %vm909, %v905, %v921
      %v926 = vsel %vm910, %v906, %v922
      %v927 = vsel %vm911, %v907, %v923
      %v928 = vsel %vm912, %v908, %v924
      %vm929 = vcmask 523648
      %930 = vst.msk [vmem:[%s216] sm:$0xff] %vm929, %v925
      %931 = vst.msk [vmem:[%s216 + $0x8] sm:$0xff] %vm929, %v926
      %932 = vst.msk [vmem:[%s216 + $0x10] sm:$0xff] %vm929, %v927
      %933 = vst.msk [vmem:[%s216 + $0x18] sm:$0xff] %vm929, %v928
      %s934 = smul.u32 4, %s15
      %p935 = scmp.lt.s32.totalorder %s934, 7
      %s936 = scalar_select %p935, %s934, 7
      %s937 = smul.addr %s936, 8
      %s938 = scalar_lea.vmem %s4, %s937
      // Predicated region
      $region37: #{daegce_forward.5} parent=35 // pred_check
        %p939 = pneg %p127
      $region38: #{daegce_forward.5} parent=35 // pred_check_branch
        %941 = sbr.rel (%p939) target = $region40
      $region39: #{daegce_forward.5} parent=35 // pred_region
        %s942 = smul.u32 4, %s15
      $region40: #{daegce_forward.5} parent=35 // pred_fallthru
        _
    $region36: #{daegce_forward.5} parent=5 // pred_fallthru
      _
    %p943 = scmp.le.s32.totalorder 2, %s10
    // Predicated region
    $region41: #{daegce_forward.5} parent=5 // pred_check
      %p944 = pneg %p943
    $region42: #{daegce_forward.5} parent=5 // pred_check_branch
      %946 = sbr.rel (%p944) target = $region44
    $region43: #{daegce_forward.5} parent=5 // pred_region
      %s947 = ssub.s32 %s10, 2
      // Predicated region
      $region45: #{daegce_forward.5} parent=43 // pred_check
        %p948 = pneg %p133
      $region46: #{daegce_forward.5} parent=43 // pred_check_branch
        %950 = sbr.rel (%p948) target = $region48
      $region47: #{daegce_forward.5} parent=43 // pred_region
        %s951 = smul.u32 4, %s16
        %p952 = scmp.lt.s32.totalorder %s951, 7
        %s953 = scalar_select %p952, %s951, 7
        %s954 = smul.addr %s953, 8
        %s955 = scalar_lea.vmem %s4, %s954
      $region48: #{daegce_forward.5} parent=43 // pred_fallthru
        _
    $region44: #{daegce_forward.5} parent=5 // pred_fallthru
      _
  $region6: #{daegce_forward.5} parent=0 // loop_footer
    %s14 = sadd.s32 1, %s10
  $region7: #{daegce_forward.5} parent=0 // loop_footer_branch
    %9 = sbr.rel target = $region3
  $region8: #{daegce_forward.5} parent=0 // loop_exit
    _

// kernel: daegce_forward.7
$region0: #{daegce_forward.7}
  #allocation0 [shape = 'u32[]', space=smem, size = 0x4, offset = 0x4, fixed_abs, tag = 'smem constant byte address 0x4 - core index']
  #allocation1 [shape = 'u32[144,128]{1,0:T(1,128)}', space=vmem, size = 0x12000, scoped, tag = 'internal scratch']
  %s0 = inlined_call_operand.vmem [shape: s8[64,64], index: 0, kind: input, shape index: {}]
  %s1 = inlined_call_operand.vmem [shape: f32[64,4], index: 1, kind: input, shape index: {}]
  %s2 = inlined_call_operand.vmem [shape: f32[8,64], index: 2, kind: input, shape index: {}]
  %s3 = inlined_call_operand.vmem [shape: bf16[64,33], index: 3, kind: input, shape index: {}]
  %s4 = inlined_call_operand.vmem [shape: f32[64,32], index: 4, kind: output, shape index: {}]
  %s5 = sld [smem:[#allocation0]]
  $region49: #{daegce_forward.7} parent=0
    _
  %s7 = ssub.s32 1, %s5
  %s8 = scalar_select 0, %s7, %s5
  loop: start=0, step=1, limit=4
  $region2: #{daegce_forward.7} parent=0 // loop_pre_header
    _
  $region3: #{daegce_forward.7} parent=0 // loop_header
    %s10 = sphi 0, %s14
    %p11 = scmp.ge.s32.totalorder %s10, 4
    %s20 = sphi 0, %s22
    %s23 = sphi 0, %s20
    %s24 = sphi 0, %s23
    %s40 = sphi 0, %s24
    %s46 = sphi 0, %s48
    %s49 = sphi 0, %s46
    %s50 = sphi 0, %s49
    %s66 = sphi 0, %s50
    %s70 = sphi 0, %s70
    %s72 = sphi 0, %s70
    %s73 = sphi 0, %s72
    %s87 = sphi 0, %s73
    %s91 = sphi 0, %s91
    %s93 = sphi 0, %s91
    %s94 = sphi 0, %s93
    %s108 = sphi 0, %s94
    %s114 = sphi 0, %s116
    %s117 = sphi 0, %s114
    %s118 = sphi 0, %s117
    %s134 = sphi 0, %s118
  $region4: #{daegce_forward.7} parent=0 // loop_header_branch
    %13 = sbr.rel (%p11) target = $region8
  $region5: #{daegce_forward.7} parent=0 // loop_body
    %s15 = ssub.s32 %s10, 1
    %s16 = ssub.s32 %s10, 2
    %s17 = sadd.s32 %s10, 1
    %s18 = ssub.s32 %s10, %s17
    %p19 = scmp.eq.s32.totalorder %s18, 0
    %s21 = sadd.s32 %s20, 1
    %s22 = scalar_select %p19, %s20, %s21
    %p25 = pneg %p19
    %p26 = scmp.eq.s32.totalorder %s10, 1
    %p27 = por %p25, %p26
    %p28 = scmp.ne.s32.totalorder %s20, %s23
    %p29 = scmp.eq.s32.totalorder %s10, 0
    %p30 = por %p28, %p29
    %p31 = scmp.ne.s32.totalorder %s20, %s23
    %p32 = scmp.eq.s32.totalorder %s15, 1
    %p33 = por %p31, %p32
    %p34 = scmp.ne.s32.totalorder %s23, %s24
    %p35 = scmp.eq.s32.totalorder %s15, 0
    %p36 = por %p34, %p35
    %p37 = scmp.ne.s32.totalorder %s23, %s24
    %p38 = scmp.eq.s32.totalorder %s16, 1
    %p39 = por %p37, %p38
    %p41 = scmp.ne.s32.totalorder %s24, %s40
    %p42 = scmp.eq.s32.totalorder %s16, 0
    %p43 = por %p41, %p42
    %s44 = ssub.s32 %s10, %s17
    %p45 = scmp.eq.s32.totalorder %s44, 0
    %s47 = sadd.s32 %s46, 1
    %s48 = scalar_select %p45, %s46, %s47
    %p51 = pneg %p45
    %p52 = scmp.eq.s32.totalorder %s10, 1
    %p53 = por %p51, %p52
    %p54 = scmp.ne.s32.totalorder %s46, %s49
    %p55 = scmp.eq.s32.totalorder %s10, 0
    %p56 = por %p54, %p55
    %p57 = scmp.ne.s32.totalorder %s46, %s49
    %p58 = scmp.eq.s32.totalorder %s15, 1
    %p59 = por %p57, %p58
    %p60 = scmp.ne.s32.totalorder %s49, %s50
    %p61 = scmp.eq.s32.totalorder %s15, 0
    %p62 = por %p60, %p61
    %p63 = scmp.ne.s32.totalorder %s49, %s50
    %p64 = scmp.eq.s32.totalorder %s16, 1
    %p65 = por %p63, %p64
    %p67 = scmp.ne.s32.totalorder %s50, %s66
    %p68 = scmp.eq.s32.totalorder %s16, 0
    %p69 = por %p67, %p68
    %s71 = sadd.s32 %s70, 1
    %p74 = scmp.eq.s32.totalorder %s10, 1
    %p75 = scmp.ne.s32.totalorder %s70, %s72
    %p76 = scmp.eq.s32.totalorder %s10, 0
    %p77 = por %p75, %p76
    %p78 = scmp.ne.s32.totalorder %s70, %s72
    %p79 = scmp.eq.s32.totalorder %s15, 1
    %p80 = por %p78, %p79
    %p81 = scmp.ne.s32.totalorder %s72, %s73
    %p82 = scmp.eq.s32.totalorder %s15, 0
    %p83 = por %p81, %p82
    %p84 = scmp.ne.s32.totalorder %s72, %s73
    %p85 = scmp.eq.s32.totalorder %s16, 1
    %p86 = por %p84, %p85
    %p88 = scmp.ne.s32.totalorder %s73, %s87
    %p89 = scmp.eq.s32.totalorder %s16, 0
    %p90 = por %p88, %p89
    %s92 = sadd.s32 %s91, 1
    %p95 = scmp.eq.s32.totalorder %s10, 1
    %p96 = scmp.ne.s32.totalorder %s91, %s93
    %p97 = scmp.eq.s32.totalorder %s10, 0
    %p98 = por %p96, %p97
    %p99 = scmp.ne.s32.totalorder %s91, %s93
    %p100 = scmp.eq.s32.totalorder %s15, 1
    %p101 = por %p99, %p100
    %p102 = scmp.ne.s32.totalorder %s93, %s94
    %p103 = scmp.eq.s32.totalorder %s15, 0
    %p104 = por %p102, %p103
    %p105 = scmp.ne.s32.totalorder %s93, %s94
    %p106 = scmp.eq.s32.totalorder %s16, 1
    %p107 = por %p105, %p106
    %p109 = scmp.ne.s32.totalorder %s94, %s108
    %p110 = scmp.eq.s32.totalorder %s16, 0
    %p111 = por %p109, %p110
    %s112 = ssub.s32 %s10, %s17
    %p113 = scmp.eq.s32.totalorder %s112, 0
    %s115 = sadd.s32 %s114, 1
    %s116 = scalar_select %p113, %s114, %s115
    %p119 = pneg %p113
    %p120 = scmp.eq.s32.totalorder %s10, 1
    %p121 = por %p119, %p120
    %p122 = scmp.ne.s32.totalorder %s114, %s117
    %p123 = scmp.eq.s32.totalorder %s10, 0
    %p124 = por %p122, %p123
    %p125 = scmp.ne.s32.totalorder %s114, %s117
    %p126 = scmp.eq.s32.totalorder %s15, 1
    %p127 = por %p125, %p126
    %p128 = scmp.ne.s32.totalorder %s117, %s118
    %p129 = scmp.eq.s32.totalorder %s15, 0
    %p130 = por %p128, %p129
    %p131 = scmp.ne.s32.totalorder %s117, %s118
    %p132 = scmp.eq.s32.totalorder %s16, 1
    %p133 = por %p131, %p132
    %p135 = scmp.ne.s32.totalorder %s118, %s134
    %p136 = scmp.eq.s32.totalorder %s16, 0
    %p137 = por %p135, %p136
    %p138 = scmp.le.s32.totalorder 1, %s10
    %p139 = scmp.lt.s32.totalorder %s10, 3
    %p140 = pnand %p138, %p139
    %p141 = pneg %p140
    // Predicated region
    $region9: #{daegce_forward.7} parent=5 // pred_check
      _
    $region10: #{daegce_forward.7} parent=5 // pred_check_branch
      %143 = sbr.rel (%p140) target = $region12
    $region11: #{daegce_forward.7} parent=5 // pred_region
      %s144 = ssub.s32 %s10, 1
      // Predicated region
      $region13: #{daegce_forward.7} parent=11 // pred_check
        %p145 = pneg %p83
      $region14: #{daegce_forward.7} parent=11 // pred_check_branch
        %147 = sbr.rel (%p145) target = $region16
      $region15: #{daegce_forward.7} parent=11 // pred_region
        _
      $region16: #{daegce_forward.7} parent=11 // pred_fallthru
        _
      // Predicated region
      $region17: #{daegce_forward.7} parent=11 // pred_check
        %p148 = pneg %p104
      $region18: #{daegce_forward.7} parent=11 // pred_check_branch
        %150 = sbr.rel (%p148) target = $region20
      $region19: #{daegce_forward.7} parent=11 // pred_region
        _
      $region20: #{daegce_forward.7} parent=11 // pred_fallthru
        _
    $region12: #{daegce_forward.7} parent=5 // pred_fallthru
      _
    %p151 = scmp.lt.s32.totalorder %s10, 2
    // Predicated region
    $region21: #{daegce_forward.7} parent=5 // pred_check
      %p152 = pneg %p151
    $region22: #{daegce_forward.7} parent=5 // pred_check_branch
      %154 = sbr.rel (%p152) target = $region24
    $region23: #{daegce_forward.7} parent=5 // pred_region
      // Predicated region
      $region25: #{daegce_forward.7} parent=23 // pred_check
        %p155 = pneg %p30
      $region26: #{daegce_forward.7} parent=23 // pred_check_branch
        %157 = sbr.rel (%p155) target = $region28
      $region27: #{daegce_forward.7} parent=23 // pred_region
        %p158 = scmp.lt.s32.totalorder %s10, 1
        %s159 = scalar_select %p158, %s10, 1
        %s160 = smul.addr %s159, 8
        %s161 = scalar_lea.vmem %s0, %s160
      $region28: #{daegce_forward.7} parent=23 // pred_fallthru
        _
      // Predicated region
      $region29: #{daegce_forward.7} parent=23 // pred_check
        %p162 = pneg %p56
      $region30: #{daegce_forward.7} parent=23 // pred_check_branch
        %164 = sbr.rel (%p162) target = $region32
      $region31: #{daegce_forward.7} parent=23 // pred_region
        %s165 = smul.u32 4, %s10
        %p166 = scmp.lt.s32.totalorder %s165, 7
        %s167 = scalar_select %p166, %s165, 7
        %s168 = smul.addr %s167, 8
        %s169 = scalar_lea.vmem %s1, %s168
        %s170 = smul.u32 4, %s10
      $region32: #{daegce_forward.7} parent=23 // pred_fallthru
        _
    $region24: #{daegce_forward.7} parent=5 // pred_fallthru
      _
    %p171 = scmp.le.s32.totalorder 1, %s10
    %p172 = scmp.lt.s32.totalorder %s10, 3
    %p173 = pnand %p171, %p172
    %p174 = pneg %p173
    // Predicated region
    $region33: #{daegce_forward.7} parent=5 // pred_check
      _
    $region34: #{daegce_forward.7} parent=5 // pred_check_branch
      %176 = sbr.rel (%p173) target = $region36
    $region35: #{daegce_forward.7} parent=5 // pred_region
      %s177 = ssub.s32 %s10, 1
      %p178 = scmp.lt.s32.totalorder %s15, 1
      %s179 = scalar_select %p178, %s15, 1
      %s180 = smul.addr %s179, 8
      %s181 = scalar_lea.vmem %s0, %s180
      %p182 = pneg %p36
      %p183 = pneg %p33
      %s184 = smul.u32 4, %s15
      %p185 = scmp.lt.s32.totalorder %s184, 7
      %s186 = scalar_select %p185, %s184, 7
      %s187 = smul.addr %s186, 8
      %s188 = scalar_lea.vmem %s1, %s187
      %p189 = pneg %p62
      %p190 = pneg %p59
      %p191 = pneg %p83
      %p192 = pneg %p80
      %p193 = pneg %p104
      %p194 = pneg %p101
      %p195 = pneg %p130
      %p196 = pneg %p127
      %s197 = smul.u32 4, %s15
      %p198 = scmp.lt.s32.totalorder %s197, 7
      %s199 = scalar_select %p198, %s197, 7
      %s200 = smul.addr %s199, 8
      %s201 = scalar_lea.vmem %s4, %s200
      %p202 = scmp.lt.s32.totalorder %s15, 1
      %s203 = scalar_select %p202, %s15, 1
      %s204 = smul.addr %s203, 8
      %s205 = scalar_lea.vmem %s0, %s204
      %s206 = smul.u32 4, %s15
      %p207 = scmp.lt.s32.totalorder %s206, 7
      %s208 = scalar_select %p207, %s206, 7
      %s209 = smul.addr %s208, 8
      %s210 = scalar_lea.vmem %s1, %s209
      %s211 = smul.u32 4, %s15
      %s212 = smul.u32 4, %s15
      %p213 = scmp.lt.s32.totalorder %s212, 7
      %s214 = scalar_select %p213, %s212, 7
      %s215 = smul.addr %s214, 8
      %s216 = scalar_lea.vmem %s4, %s215
      %s217 = smul.u32 4, %s15
      %v221 = vld [vmem:[%s205] sm:$0xff]
      %vm222 = vnez %v221
      %v223 = vld [vmem:[%s210] sm:$0xff]
      %v224 = vld [vmem:[%s210 + $0x8] sm:$0xff]
      %v225 = vld [vmem:[%s210 + $0x10] sm:$0xff]
      %v226 = vld [vmem:[%s210 + $0x18] sm:$0xff]
      %v227 = vld [vmem:[%s2] sm:$0xff]
      %v228 = vld [vmem:[%s3] sm:$0xf]
      %v229 = vld [vmem:[%s3 + $0x4] sm:$0xf]
      %v230 = vld [vmem:[%s3 + $0x8] sm:$0xf]
      %v231 = vld [vmem:[%s3 + $0xc] sm:$0xf]
      %v232 = vld [vmem:[%s3 + $0x10] sm:$0xf]
      %v233 = vld [vmem:[%s3 + $0x14] sm:$0xf]
      %v234 = vld [vmem:[%s3 + $0x18] sm:$0xf]
      %v235 = vld [vmem:[%s3 + $0x1c] sm:$0xf]
      %237 = vset.pattern.permute.xlu0 0
      %238 = vperm.xlu0 %237, %v223
      %v239 = vpop.permute.xlu0 %238
      %242 = vset.pattern.permute.xlu0 0
      %243 = vperm.xlu0 %242, %v224
      %v244 = vpop.permute.xlu0 %243
      %247 = vset.pattern.permute.xlu0 0
      %248 = vperm.xlu0 %247, %v225
      %v249 = vpop.permute.xlu0 %248
      %252 = vset.pattern.permute.xlu0 0
      %253 = vperm.xlu0 %252, %v226
      %v254 = vpop.permute.xlu0 %253
      %v256 = vlaneseq
      %v257 = vshrl.u32 %v256, 7
      %v258 = vsub.s32 0, %v257
      %v259 = vrot.slane %v227, %v258
      %v260 = vadd.f32 %v239, %v259
      %v261 = vadd.f32 %v244, %v259
      %v262 = vadd.f32 %v249, %v259
      %v263 = vadd.f32 %v254, %v259
      %v264 = vsub.f32 0.0, %v260
      %v265 = vsub.f32 0.0, %v261
      %v266 = vsub.f32 0.0, %v262
      %v267 = vsub.f32 0.0, %v263
      %v268 = vmul.f32 %v260, -0.2
      %v269 = vmul.f32 %v261, -0.2
      %v270 = vmul.f32 %v262, -0.2
      %v271 = vmul.f32 %v263, -0.2
      %v272 = vmin.f32 %v264, %v268
      %v273 = vmin.f32 %v265, %v269
      %v274 = vmin.f32 %v266, %v270
      %v275 = vmin.f32 %v267, %v271
      %v276 = vsel %vm222, 16843009, 0
      %v277 = vunpack.c.0.s8 %v276
      %v278 = vunpack.c.1.s8 %v276
      %v279 = vunpack.c.2.s8 %v276
      %v280 = vunpack.c.3.s8 %v276
      %v281 = vpack.c.b16 %v277, %v277
      %v282 = vpack.c.b8 %v281, %v281
      %v283 = vpack.c.b16 %v278, %v278
      %v284 = vpack.c.b8 %v283, %v283
      %v285 = vpack.c.b16 %v279, %v279
      %v286 = vpack.c.b8 %v285, %v285
      %v287 = vpack.c.b16 %v280, %v280
      %v288 = vpack.c.b8 %v287, %v287
      %vm289 = vnez %v282
      %vm290 = vnez %v284
      %vm291 = vnez %v286
      %vm292 = vnez %v288
      %v293 = vsel %vm289, 16843009, 0
      %v294 = vsel %vm290, 16843009, 0
      %v295 = vsel %vm291, 16843009, 0
      %v296 = vsel %vm292, 16843009, 0
      %v297 = vunpack.c.0.s8 %v293
      %v298 = vunpack.c.0.s8 %v294
      %v299 = vunpack.c.0.s8 %v295
      %v300 = vunpack.c.0.s8 %v296
      %vm301 = vcmp.ne.s32.totalorder %v297, 0
      %vm302 = vcmp.ne.s32.totalorder %v298, 0
      %vm303 = vcmp.ne.s32.totalorder %v299, 0
      %vm304 = vcmp.ne.s32.totalorder %v300, 0
      %v305 = vsel %vm301, %v272, -1e+30
      %v306 = vsel %vm302, %v273, -1e+30
      %v307 = vsel %vm303, %v274, -1e+30
      %v308 = vsel %vm304, %v275, -1e+30
      %v309 = vpack.c.bf16 %v306, %v305
      %v310 = vpack.c.bf16 %v308, %v307
      %v312 = vmul.bf16 %v309, 1069105081
      %v313 = vpow.bf16.pop %v312
      %v315 = vmul.bf16 %v310, 1069105081
      %v316 = vpow.bf16.pop %v315
      %v325 = vunpack.c.l.b16 %v228
      %v326 = vunpack.c.l.b16 %v229
      %v327 = vunpack.c.l.b16 %v230
      %v328 = vunpack.c.l.b16 %v231
      %v329 = vunpack.c.l.b16 %v232
      %v330 = vunpack.c.l.b16 %v233
      %v331 = vunpack.c.l.b16 %v234
      %v332 = vunpack.c.l.b16 %v235
      %v333 = vpack.c.b16 %v326, %v325
      %v334 = vpack.c.b16 %v328, %v327
      %v335 = vpack.c.b16 %v330, %v329
      %v336 = vpack.c.b16 %v332, %v331
      %vm341 = vcmask 523264
      %v343 = vsel %vm341, %v313, 0
      %v346 = vsel %vm341, %v316, 0
      %348 = vmatprep.subr.bf16.mxu0 0
      %349 = vmatpush1.bf16.msra.mxu0 0
      %350 = vmatprep.subr.bf16.mxu0 0
      %351 = vmatpush1.bf16.msra.mxu0 0
      %352 = vmatprep.subr.bf16.mxu0 0
      %353 = vmatpush1.bf16.msra.mxu0 0
      %354 = vmatprep.subr.bf16.mxu0 0
      %355 = vmatpush1.bf16.msra.mxu0 0
      %356 = vmatprep.subr.bf16.mxu0 0
      %357 = vmatpush1.bf16.msra.mxu0 %v336
      %358 = vmatprep.subr.bf16.mxu0 0
      %359 = vmatpush1.bf16.msra.mxu0 %v335
      %360 = vmatprep.subr.bf16.mxu0 0
      %361 = vmatpush1.bf16.msra.mxu0 %v334
      %362 = vmatprep.subr.bf16.mxu0 0
      %363 = vmatpush1.bf16.msra.mxu0 %v333
      %364 = vmatprep.subr.bf16.mxu0 0
      %365 = vmatpush2.bf16.msra.mxu0 0
      %366 = vmatprep.subr.bf16.mxu0 0
      %367 = vmatpush2.bf16.msra.mxu0 0
      %368 = vmatprep.subr.bf16.mxu0 0
      %369 = vmatpush2.bf16.msra.mxu0 0
      %370 = vmatprep.subr.bf16.mxu0 0
      %371 = vmatpush2.bf16.msra.mxu0 0
      %372 = vmatprep.subr.bf16.mxu0 0
      %373 = vmatpush2.bf16.msra.mxu0 0
      %374 = vmatprep.subr.bf16.mxu0 0
      %375 = vmatpush2.bf16.msra.mxu0 0
      %376 = vmatprep.subr.bf16.mxu0 0
      %377 = vmatpush2.bf16.msra.mxu0 0
      %378 = vmatprep.subr.bf16.mxu0 0
      %379 = vmatpush2.bf16.msra.mxu0 0
      %380 = vmatprep.mubr.bf16.mxu0 0
      %381 = vmatmul.mubr.bf16.gmra.mxu0 %v343
      %v382 = vpop.f32.mrf.mxu0
      %v383 = vadd.f32 0.0, %v382
      %v384 = vpop.f32.mrf.mxu0
      %v385 = vpop.f32.mrf.mxu0
      %v386 = vadd.f32 0.0, %v385
      %v387 = vpop.f32.mrf.mxu0
      %388 = vmatprep.mubr.bf16.mxu0 0
      %389 = vmatmul.mubr.bf16.gmra.mxu0 %v346
      %v390 = vpop.f32.mrf.mxu0
      %v391 = vadd.f32 0.0, %v390
      %v392 = vpop.f32.mrf.mxu0
      %v393 = vpop.f32.mrf.mxu0
      %v394 = vadd.f32 0.0, %v393
      %v395 = vpop.f32.mrf.mxu0
      %396 = vdwg.mxu0
      %v397 = vmax.f32 %v383, 1e-20
      %v398 = vmax.f32 %v386, 1e-20
      %v399 = vmax.f32 %v391, 1e-20
      %v400 = vmax.f32 %v394, 1e-20
      %v401 = vrcp.pop %v397
      %v402 = vrcp.pop %v398
      %v403 = vrcp.pop %v399
      %v404 = vrcp.pop %v400
      %406 = vset.pattern.permute.xlu0 32
      %407 = vperm.xlu0 %406, %v401
      %v408 = vpop.permute.xlu0 %407
      %411 = vset.pattern.permute.xlu0 32
      %412 = vperm.xlu0 %411, %v402
      %v413 = vpop.permute.xlu0 %412
      %416 = vset.pattern.permute.xlu0 32
      %417 = vperm.xlu0 %416, %v403
      %v418 = vpop.permute.xlu0 %417
      %421 = vset.pattern.permute.xlu0 32
      %422 = vperm.xlu0 %421, %v404
      %v423 = vpop.permute.xlu0 %422
      %v425 = vmul.f32 %v383, %v408
      %v426 = vmul.f32 %v386, %v413
      %v427 = vmul.f32 %v391, %v418
      %v428 = vmul.f32 %v394, %v423
      %vm429 = vcmp.gt.f32.partialorder %v425, 0.0
      %vm430 = vcmp.gt.f32.partialorder %v426, 0.0
      %vm431 = vcmp.gt.f32.partialorder %v427, 0.0
      %vm432 = vcmp.gt.f32.partialorder %v428, 0.0
      %v433 = vmul.f32 %v425, 1.442695
      %v434 = vpow.pop %v433
      %v435 = vmul.f32 %v426, 1.442695
      %v436 = vpow.pop %v435
      %v437 = vmul.f32 %v427, 1.442695
      %v438 = vpow.pop %v437
      %v439 = vmul.f32 %v428, 1.442695
      %v440 = vpow.pop %v439
      %v441 = vsub.f32 %v434, 1.0
      %v442 = vsub.f32 %v436, 1.0
      %v443 = vsub.f32 %v438, 1.0
      %v444 = vsub.f32 %v440, 1.0
      %v445 = vsel %vm429, %v425, %v441
      %v446 = vsel %vm430, %v426, %v442
      %v447 = vsel %vm431, %v427, %v443
      %v448 = vsel %vm432, %v428, %v444
      %vm449 = vcmask 64512
      %450 = vst.msk [vmem:[%s216] sm:$0xff] %vm449, %v445
      %451 = vst.msk [vmem:[%s216 + $0x8] sm:$0xff] %vm449, %v446
      %452 = vst.msk [vmem:[%s216 + $0x10] sm:$0xff] %vm449, %v447
      %453 = vst.msk [vmem:[%s216 + $0x18] sm:$0xff] %vm449, %v448
      %454 = vset.pattern.permute.xlu0 1
      %455 = vperm.xlu0 %454, %v223
      %v456 = vpop.permute.xlu0 %455
      %458 = vset.pattern.permute.xlu0 1
      %459 = vperm.xlu0 %458, %v224
      %v460 = vpop.permute.xlu0 %459
      %462 = vset.pattern.permute.xlu0 1
      %463 = vperm.xlu0 %462, %v225
      %v464 = vpop.permute.xlu0 %463
      %466 = vset.pattern.permute.xlu0 1
      %467 = vperm.xlu0 %466, %v226
      %v468 = vpop.permute.xlu0 %467
      %v470 = vlaneseq
      %v471 = vshrl.u32 %v470, 7
      %v472 = vsub.s32 1, %v471
      %v473 = vrot.slane %v227, %v472
      %v474 = vadd.f32 %v456, %v473
      %v475 = vadd.f32 %v460, %v473
      %v476 = vadd.f32 %v464, %v473
      %v477 = vadd.f32 %v468, %v473
      %v478 = vsub.f32 0.0, %v474
      %v479 = vsub.f32 0.0, %v475
      %v480 = vsub.f32 0.0, %v476
      %v481 = vsub.f32 0.0, %v477
      %v482 = vmul.f32 %v474, -0.2
      %v483 = vmul.f32 %v475, -0.2
      %v484 = vmul.f32 %v476, -0.2
      %v485 = vmul.f32 %v477, -0.2
      %v486 = vmin.f32 %v478, %v482
      %v487 = vmin.f32 %v479, %v483
      %v488 = vmin.f32 %v480, %v484
      %v489 = vmin.f32 %v481, %v485
      %v490 = vsel %vm301, %v486, -1e+30
      %v491 = vsel %vm302, %v487, -1e+30
      %v492 = vsel %vm303, %v488, -1e+30
      %v493 = vsel %vm304, %v489, -1e+30
      %v494 = vpack.c.bf16 %v491, %v490
      %v495 = vpack.c.bf16 %v493, %v492
      %v497 = vmul.bf16 %v494, 1069105081
      %v498 = vpow.bf16.pop %v497
      %v500 = vmul.bf16 %v495, 1069105081
      %v501 = vpow.bf16.pop %v500
      %v503 = vsel %vm341, %v498, 0
      %v506 = vsel %vm341, %v501, 0
      %508 = vmatprep.subr.bf16.mxu0 0
      %509 = vmatpush1.bf16.msra.mxu0 0
      %510 = vmatprep.subr.bf16.mxu0 0
      %511 = vmatpush1.bf16.msra.mxu0 0
      %512 = vmatprep.subr.bf16.mxu0 0
      %513 = vmatpush1.bf16.msra.mxu0 0
      %514 = vmatprep.subr.bf16.mxu0 0
      %515 = vmatpush1.bf16.msra.mxu0 0
      %516 = vmatprep.subr.bf16.mxu0 0
      %517 = vmatpush1.bf16.msra.mxu0 %v336
      %518 = vmatprep.subr.bf16.mxu0 0
      %519 = vmatpush1.bf16.msra.mxu0 %v335
      %520 = vmatprep.subr.bf16.mxu0 0
      %521 = vmatpush1.bf16.msra.mxu0 %v334
      %522 = vmatprep.subr.bf16.mxu0 0
      %523 = vmatpush1.bf16.msra.mxu0 %v333
      %524 = vmatprep.subr.bf16.mxu0 0
      %525 = vmatpush2.bf16.msra.mxu0 0
      %526 = vmatprep.subr.bf16.mxu0 0
      %527 = vmatpush2.bf16.msra.mxu0 0
      %528 = vmatprep.subr.bf16.mxu0 0
      %529 = vmatpush2.bf16.msra.mxu0 0
      %530 = vmatprep.subr.bf16.mxu0 0
      %531 = vmatpush2.bf16.msra.mxu0 0
      %532 = vmatprep.subr.bf16.mxu0 0
      %533 = vmatpush2.bf16.msra.mxu0 0
      %534 = vmatprep.subr.bf16.mxu0 0
      %535 = vmatpush2.bf16.msra.mxu0 0
      %536 = vmatprep.subr.bf16.mxu0 0
      %537 = vmatpush2.bf16.msra.mxu0 0
      %538 = vmatprep.subr.bf16.mxu0 0
      %539 = vmatpush2.bf16.msra.mxu0 0
      %540 = vmatprep.mubr.bf16.mxu0 0
      %541 = vmatmul.mubr.bf16.gmra.mxu0 %v503
      %v542 = vpop.f32.mrf.mxu0
      %v543 = vadd.f32 0.0, %v542
      %v544 = vpop.f32.mrf.mxu0
      %v545 = vpop.f32.mrf.mxu0
      %v546 = vadd.f32 0.0, %v545
      %v547 = vpop.f32.mrf.mxu0
      %548 = vmatprep.mubr.bf16.mxu0 0
      %549 = vmatmul.mubr.bf16.gmra.mxu0 %v506
      %v550 = vpop.f32.mrf.mxu0
      %v551 = vadd.f32 0.0, %v550
      %v552 = vpop.f32.mrf.mxu0
      %v553 = vpop.f32.mrf.mxu0
      %v554 = vadd.f32 0.0, %v553
      %v555 = vpop.f32.mrf.mxu0
      %556 = vdwg.mxu0
      %v557 = vmax.f32 %v543, 1e-20
      %v558 = vmax.f32 %v546, 1e-20
      %v559 = vmax.f32 %v551, 1e-20
      %v560 = vmax.f32 %v554, 1e-20
      %v561 = vrcp.pop %v557
      %v562 = vrcp.pop %v558
      %v563 = vrcp.pop %v559
      %v564 = vrcp.pop %v560
      %566 = vset.pattern.permute.xlu0 32
      %567 = vperm.xlu0 %566, %v561
      %v568 = vpop.permute.xlu0 %567
      %571 = vset.pattern.permute.xlu0 32
      %572 = vperm.xlu0 %571, %v562
      %v573 = vpop.permute.xlu0 %572
      %576 = vset.pattern.permute.xlu0 32
      %577 = vperm.xlu0 %576, %v563
      %v578 = vpop.permute.xlu0 %577
      %581 = vset.pattern.permute.xlu0 32
      %582 = vperm.xlu0 %581, %v564
      %v583 = vpop.permute.xlu0 %582
      %v585 = vmul.f32 %v543, %v568
      %v586 = vmul.f32 %v546, %v573
      %v587 = vmul.f32 %v551, %v578
      %v588 = vmul.f32 %v554, %v583
      %vm589 = vcmp.gt.f32.partialorder %v585, 0.0
      %vm590 = vcmp.gt.f32.partialorder %v586, 0.0
      %vm591 = vcmp.gt.f32.partialorder %v587, 0.0
      %vm592 = vcmp.gt.f32.partialorder %v588, 0.0
      %v593 = vmul.f32 %v585, 1.442695
      %v594 = vpow.pop %v593
      %v595 = vmul.f32 %v586, 1.442695
      %v596 = vpow.pop %v595
      %v597 = vmul.f32 %v587, 1.442695
      %v598 = vpow.pop %v597
      %v599 = vmul.f32 %v588, 1.442695
      %v600 = vpow.pop %v599
      %v601 = vsub.f32 %v594, 1.0
      %v602 = vsub.f32 %v596, 1.0
      %v603 = vsub.f32 %v598, 1.0
      %v604 = vsub.f32 %v600, 1.0
      %v605 = vsel %vm589, %v585, %v601
      %v606 = vsel %vm590, %v586, %v602
      %v607 = vsel %vm591, %v587, %v603
      %v608 = vsel %vm592, %v588, %v604
      %vm609 = vcmask 130112
      %610 = vst.msk [vmem:[%s216] sm:$0xff] %vm609, %v605
      %611 = vst.msk [vmem:[%s216 + $0x8] sm:$0xff] %vm609, %v606
      %612 = vst.msk [vmem:[%s216 + $0x10] sm:$0xff] %vm609, %v607
      %613 = vst.msk [vmem:[%s216 + $0x18] sm:$0xff] %vm609, %v608
      %614 = vset.pattern.permute.xlu0 2
      %615 = vperm.xlu0 %614, %v223
      %v616 = vpop.permute.xlu0 %615
      %618 = vset.pattern.permute.xlu0 2
      %619 = vperm.xlu0 %618, %v224
      %v620 = vpop.permute.xlu0 %619
      %622 = vset.pattern.permute.xlu0 2
      %623 = vperm.xlu0 %622, %v225
      %v624 = vpop.permute.xlu0 %623
      %626 = vset.pattern.permute.xlu0 2
      %627 = vperm.xlu0 %626, %v226
      %v628 = vpop.permute.xlu0 %627
      %v630 = vlaneseq
      %v631 = vshrl.u32 %v630, 7
      %v632 = vsub.s32 2, %v631
      %v633 = vrot.slane %v227, %v632
      %v634 = vadd.f32 %v616, %v633
      %v635 = vadd.f32 %v620, %v633
      %v636 = vadd.f32 %v624, %v633
      %v637 = vadd.f32 %v628, %v633
      %v638 = vsub.f32 0.0, %v634
      %v639 = vsub.f32 0.0, %v635
      %v640 = vsub.f32 0.0, %v636
      %v641 = vsub.f32 0.0, %v637
      %v642 = vmul.f32 %v634, -0.2
      %v643 = vmul.f32 %v635, -0.2
      %v644 = vmul.f32 %v636, -0.2
      %v645 = vmul.f32 %v637, -0.2
      %v646 = vmin.f32 %v638, %v642
      %v647 = vmin.f32 %v639, %v643
      %v648 = vmin.f32 %v640, %v644
      %v649 = vmin.f32 %v641, %v645
      %v650 = vsel %vm301, %v646, -1e+30
      %v651 = vsel %vm302, %v647, -1e+30
      %v652 = vsel %vm303, %v648, -1e+30
      %v653 = vsel %vm304, %v649, -1e+30
      %v654 = vpack.c.bf16 %v651, %v650
      %v655 = vpack.c.bf16 %v653, %v652
      %v657 = vmul.bf16 %v654, 1069105081
      %v658 = vpow.bf16.pop %v657
      %v660 = vmul.bf16 %v655, 1069105081
      %v661 = vpow.bf16.pop %v660
      %v663 = vsel %vm341, %v658, 0
      %v666 = vsel %vm341, %v661, 0
      %668 = vmatprep.subr.bf16.mxu0 0
      %669 = vmatpush1.bf16.msra.mxu0 0
      %670 = vmatprep.subr.bf16.mxu0 0
      %671 = vmatpush1.bf16.msra.mxu0 0
      %672 = vmatprep.subr.bf16.mxu0 0
      %673 = vmatpush1.bf16.msra.mxu0 0
      %674 = vmatprep.subr.bf16.mxu0 0
      %675 = vmatpush1.bf16.msra.mxu0 0
      %676 = vmatprep.subr.bf16.mxu0 0
      %677 = vmatpush1.bf16.msra.mxu0 %v336
      %678 = vmatprep.subr.bf16.mxu0 0
      %679 = vmatpush1.bf16.msra.mxu0 %v335
      %680 = vmatprep.subr.bf16.mxu0 0
      %681 = vmatpush1.bf16.msra.mxu0 %v334
      %682 = vmatprep.subr.bf16.mxu0 0
      %683 = vmatpush1.bf16.msra.mxu0 %v333
      %684 = vmatprep.subr.bf16.mxu0 0
      %685 = vmatpush2.bf16.msra.mxu0 0
      %686 = vmatprep.subr.bf16.mxu0 0
      %687 = vmatpush2.bf16.msra.mxu0 0
      %688 = vmatprep.subr.bf16.mxu0 0
      %689 = vmatpush2.bf16.msra.mxu0 0
      %690 = vmatprep.subr.bf16.mxu0 0
      %691 = vmatpush2.bf16.msra.mxu0 0
      %692 = vmatprep.subr.bf16.mxu0 0
      %693 = vmatpush2.bf16.msra.mxu0 0
      %694 = vmatprep.subr.bf16.mxu0 0
      %695 = vmatpush2.bf16.msra.mxu0 0
      %696 = vmatprep.subr.bf16.mxu0 0
      %697 = vmatpush2.bf16.msra.mxu0 0
      %698 = vmatprep.subr.bf16.mxu0 0
      %699 = vmatpush2.bf16.msra.mxu0 0
      %700 = vmatprep.mubr.bf16.mxu0 0
      %701 = vmatmul.mubr.bf16.gmra.mxu0 %v663
      %v702 = vpop.f32.mrf.mxu0
      %v703 = vadd.f32 0.0, %v702
      %v704 = vpop.f32.mrf.mxu0
      %v705 = vpop.f32.mrf.mxu0
      %v706 = vadd.f32 0.0, %v705
      %v707 = vpop.f32.mrf.mxu0
      %708 = vmatprep.mubr.bf16.mxu0 0
      %709 = vmatmul.mubr.bf16.gmra.mxu0 %v666
      %v710 = vpop.f32.mrf.mxu0
      %v711 = vadd.f32 0.0, %v710
      %v712 = vpop.f32.mrf.mxu0
      %v713 = vpop.f32.mrf.mxu0
      %v714 = vadd.f32 0.0, %v713
      %v715 = vpop.f32.mrf.mxu0
      %716 = vdwg.mxu0
      %v717 = vmax.f32 %v703, 1e-20
      %v718 = vmax.f32 %v706, 1e-20
      %v719 = vmax.f32 %v711, 1e-20
      %v720 = vmax.f32 %v714, 1e-20
      %v721 = vrcp.pop %v717
      %v722 = vrcp.pop %v718
      %v723 = vrcp.pop %v719
      %v724 = vrcp.pop %v720
      %726 = vset.pattern.permute.xlu0 32
      %727 = vperm.xlu0 %726, %v721
      %v728 = vpop.permute.xlu0 %727
      %731 = vset.pattern.permute.xlu0 32
      %732 = vperm.xlu0 %731, %v722
      %v733 = vpop.permute.xlu0 %732
      %736 = vset.pattern.permute.xlu0 32
      %737 = vperm.xlu0 %736, %v723
      %v738 = vpop.permute.xlu0 %737
      %741 = vset.pattern.permute.xlu0 32
      %742 = vperm.xlu0 %741, %v724
      %v743 = vpop.permute.xlu0 %742
      %v745 = vmul.f32 %v703, %v728
      %v746 = vmul.f32 %v706, %v733
      %v747 = vmul.f32 %v711, %v738
      %v748 = vmul.f32 %v714, %v743
      %vm749 = vcmp.gt.f32.partialorder %v745, 0.0
      %vm750 = vcmp.gt.f32.partialorder %v746, 0.0
      %vm751 = vcmp.gt.f32.partialorder %v747, 0.0
      %vm752 = vcmp.gt.f32.partialorder %v748, 0.0
      %v753 = vmul.f32 %v745, 1.442695
      %v754 = vpow.pop %v753
      %v755 = vmul.f32 %v746, 1.442695
      %v756 = vpow.pop %v755
      %v757 = vmul.f32 %v747, 1.442695
      %v758 = vpow.pop %v757
      %v759 = vmul.f32 %v748, 1.442695
      %v760 = vpow.pop %v759
      %v761 = vsub.f32 %v754, 1.0
      %v762 = vsub.f32 %v756, 1.0
      %v763 = vsub.f32 %v758, 1.0
      %v764 = vsub.f32 %v760, 1.0
      %v765 = vsel %vm749, %v745, %v761
      %v766 = vsel %vm750, %v746, %v762
      %v767 = vsel %vm751, %v747, %v763
      %v768 = vsel %vm752, %v748, %v764
      %vm769 = vcmask 195712
      %770 = vst.msk [vmem:[%s216] sm:$0xff] %vm769, %v765
      %771 = vst.msk [vmem:[%s216 + $0x8] sm:$0xff] %vm769, %v766
      %772 = vst.msk [vmem:[%s216 + $0x10] sm:$0xff] %vm769, %v767
      %773 = vst.msk [vmem:[%s216 + $0x18] sm:$0xff] %vm769, %v768
      %774 = vset.pattern.permute.xlu0 3
      %775 = vperm.xlu0 %774, %v223
      %v776 = vpop.permute.xlu0 %775
      %778 = vset.pattern.permute.xlu0 3
      %779 = vperm.xlu0 %778, %v224
      %v780 = vpop.permute.xlu0 %779
      %782 = vset.pattern.permute.xlu0 3
      %783 = vperm.xlu0 %782, %v225
      %v784 = vpop.permute.xlu0 %783
      %786 = vset.pattern.permute.xlu0 3
      %787 = vperm.xlu0 %786, %v226
      %v788 = vpop.permute.xlu0 %787
      %v790 = vlaneseq
      %v791 = vshrl.u32 %v790, 7
      %v792 = vsub.s32 3, %v791
      %v793 = vrot.slane %v227, %v792
      %v794 = vadd.f32 %v776, %v793
      %v795 = vadd.f32 %v780, %v793
      %v796 = vadd.f32 %v784, %v793
      %v797 = vadd.f32 %v788, %v793
      %v798 = vsub.f32 0.0, %v794
      %v799 = vsub.f32 0.0, %v795
      %v800 = vsub.f32 0.0, %v796
      %v801 = vsub.f32 0.0, %v797
      %v802 = vmul.f32 %v794, -0.2
      %v803 = vmul.f32 %v795, -0.2
      %v804 = vmul.f32 %v796, -0.2
      %v805 = vmul.f32 %v797, -0.2
      %v806 = vmin.f32 %v798, %v802
      %v807 = vmin.f32 %v799, %v803
      %v808 = vmin.f32 %v800, %v804
      %v809 = vmin.f32 %v801, %v805
      %v810 = vsel %vm301, %v806, -1e+30
      %v811 = vsel %vm302, %v807, -1e+30
      %v812 = vsel %vm303, %v808, -1e+30
      %v813 = vsel %vm304, %v809, -1e+30
      %v814 = vpack.c.bf16 %v811, %v810
      %v815 = vpack.c.bf16 %v813, %v812
      %v817 = vmul.bf16 %v814, 1069105081
      %v818 = vpow.bf16.pop %v817
      %v820 = vmul.bf16 %v815, 1069105081
      %v821 = vpow.bf16.pop %v820
      %v823 = vsel %vm341, %v818, 0
      %v826 = vsel %vm341, %v821, 0
      %828 = vmatprep.subr.bf16.mxu0 0
      %829 = vmatpush1.bf16.msra.mxu0 0
      %830 = vmatprep.subr.bf16.mxu0 0
      %831 = vmatpush1.bf16.msra.mxu0 0
      %832 = vmatprep.subr.bf16.mxu0 0
      %833 = vmatpush1.bf16.msra.mxu0 0
      %834 = vmatprep.subr.bf16.mxu0 0
      %835 = vmatpush1.bf16.msra.mxu0 0
      %836 = vmatprep.subr.bf16.mxu0 0
      %837 = vmatpush1.bf16.msra.mxu0 %v336
      %838 = vmatprep.subr.bf16.mxu0 0
      %839 = vmatpush1.bf16.msra.mxu0 %v335
      %840 = vmatprep.subr.bf16.mxu0 0
      %841 = vmatpush1.bf16.msra.mxu0 %v334
      %842 = vmatprep.subr.bf16.mxu0 0
      %843 = vmatpush1.bf16.msra.mxu0 %v333
      %844 = vmatprep.subr.bf16.mxu0 0
      %845 = vmatpush2.bf16.msra.mxu0 0
      %846 = vmatprep.subr.bf16.mxu0 0
      %847 = vmatpush2.bf16.msra.mxu0 0
      %848 = vmatprep.subr.bf16.mxu0 0
      %849 = vmatpush2.bf16.msra.mxu0 0
      %850 = vmatprep.subr.bf16.mxu0 0
      %851 = vmatpush2.bf16.msra.mxu0 0
      %852 = vmatprep.subr.bf16.mxu0 0
      %853 = vmatpush2.bf16.msra.mxu0 0
      %854 = vmatprep.subr.bf16.mxu0 0
      %855 = vmatpush2.bf16.msra.mxu0 0
      %856 = vmatprep.subr.bf16.mxu0 0
      %857 = vmatpush2.bf16.msra.mxu0 0
      %858 = vmatprep.subr.bf16.mxu0 0
      %859 = vmatpush2.bf16.msra.mxu0 0
      %860 = vmatprep.mubr.bf16.mxu0 0
      %861 = vmatmul.mubr.bf16.gmra.mxu0 %v823
      %v862 = vpop.f32.mrf.mxu0
      %v863 = vadd.f32 0.0, %v862
      %v864 = vpop.f32.mrf.mxu0
      %v865 = vpop.f32.mrf.mxu0
      %v866 = vadd.f32 0.0, %v865
      %v867 = vpop.f32.mrf.mxu0
      %868 = vmatprep.mubr.bf16.mxu0 0
      %869 = vmatmul.mubr.bf16.gmra.mxu0 %v826
      %v870 = vpop.f32.mrf.mxu0
      %v871 = vadd.f32 0.0, %v870
      %v872 = vpop.f32.mrf.mxu0
      %v873 = vpop.f32.mrf.mxu0
      %v874 = vadd.f32 0.0, %v873
      %v875 = vpop.f32.mrf.mxu0
      %876 = vdwg.mxu0
      %v877 = vmax.f32 %v863, 1e-20
      %v878 = vmax.f32 %v866, 1e-20
      %v879 = vmax.f32 %v871, 1e-20
      %v880 = vmax.f32 %v874, 1e-20
      %v881 = vrcp.pop %v877
      %v882 = vrcp.pop %v878
      %v883 = vrcp.pop %v879
      %v884 = vrcp.pop %v880
      %886 = vset.pattern.permute.xlu0 32
      %887 = vperm.xlu0 %886, %v881
      %v888 = vpop.permute.xlu0 %887
      %891 = vset.pattern.permute.xlu0 32
      %892 = vperm.xlu0 %891, %v882
      %v893 = vpop.permute.xlu0 %892
      %896 = vset.pattern.permute.xlu0 32
      %897 = vperm.xlu0 %896, %v883
      %v898 = vpop.permute.xlu0 %897
      %901 = vset.pattern.permute.xlu0 32
      %902 = vperm.xlu0 %901, %v884
      %v903 = vpop.permute.xlu0 %902
      %v905 = vmul.f32 %v863, %v888
      %v906 = vmul.f32 %v866, %v893
      %v907 = vmul.f32 %v871, %v898
      %v908 = vmul.f32 %v874, %v903
      %vm909 = vcmp.gt.f32.partialorder %v905, 0.0
      %vm910 = vcmp.gt.f32.partialorder %v906, 0.0
      %vm911 = vcmp.gt.f32.partialorder %v907, 0.0
      %vm912 = vcmp.gt.f32.partialorder %v908, 0.0
      %v913 = vmul.f32 %v905, 1.442695
      %v914 = vpow.pop %v913
      %v915 = vmul.f32 %v906, 1.442695
      %v916 = vpow.pop %v915
      %v917 = vmul.f32 %v907, 1.442695
      %v918 = vpow.pop %v917
      %v919 = vmul.f32 %v908, 1.442695
      %v920 = vpow.pop %v919
      %v921 = vsub.f32 %v914, 1.0
      %v922 = vsub.f32 %v916, 1.0
      %v923 = vsub.f32 %v918, 1.0
      %v924 = vsub.f32 %v920, 1.0
      %v925 = vsel %vm909, %v905, %v921
      %v926 = vsel %vm910, %v906, %v922
      %v927 = vsel %vm911, %v907, %v923
      %v928 = vsel %vm912, %v908, %v924
      %vm929 = vcmask 261312
      %930 = vst.msk [vmem:[%s216] sm:$0xff] %vm929, %v925
      %931 = vst.msk [vmem:[%s216 + $0x8] sm:$0xff] %vm929, %v926
      %932 = vst.msk [vmem:[%s216 + $0x10] sm:$0xff] %vm929, %v927
      %933 = vst.msk [vmem:[%s216 + $0x18] sm:$0xff] %vm929, %v928
      %s934 = smul.u32 4, %s15
      %p935 = scmp.lt.s32.totalorder %s934, 7
      %s936 = scalar_select %p935, %s934, 7
      %s937 = smul.addr %s936, 8
      %s938 = scalar_lea.vmem %s4, %s937
      // Predicated region
      $region37: #{daegce_forward.7} parent=35 // pred_check
        %p939 = pneg %p127
      $region38: #{daegce_forward.7} parent=35 // pred_check_branch
        %941 = sbr.rel (%p939) target = $region40
      $region39: #{daegce_forward.7} parent=35 // pred_region
        %s942 = smul.u32 4, %s15
      $region40: #{daegce_forward.7} parent=35 // pred_fallthru
        _
    $region36: #{daegce_forward.7} parent=5 // pred_fallthru
      _
    %p943 = scmp.le.s32.totalorder 2, %s10
    // Predicated region
    $region41: #{daegce_forward.7} parent=5 // pred_check
      %p944 = pneg %p943
    $region42: #{daegce_forward.7} parent=5 // pred_check_branch
      %946 = sbr.rel (%p944) target = $region44
    $region43: #{daegce_forward.7} parent=5 // pred_region
      %s947 = ssub.s32 %s10, 2
      // Predicated region
      $region45: #{daegce_forward.7} parent=43 // pred_check
        %p948 = pneg %p133
      $region46: #{daegce_forward.7} parent=43 // pred_check_branch
        %950 = sbr.rel (%p948) target = $region48
      $region47: #{daegce_forward.7} parent=43 // pred_region
        %s951 = smul.u32 4, %s16
        %p952 = scmp.lt.s32.totalorder %s951, 7
        %s953 = scalar_select %p952, %s951, 7
        %s954 = smul.addr %s953, 8
        %s955 = scalar_lea.vmem %s4, %s954
      $region48: #{daegce_forward.7} parent=43 // pred_fallthru
        _
    $region44: #{daegce_forward.7} parent=5 // pred_fallthru
      _
  $region6: #{daegce_forward.7} parent=0 // loop_footer
    %s14 = sadd.s32 1, %s10
  $region7: #{daegce_forward.7} parent=0 // loop_footer_branch
    %9 = sbr.rel target = $region3
  $region8: #{daegce_forward.7} parent=0 // loop_exit
    _

// kernel: daegce_forward.8
$region0: #{daegce_forward.8}
  #allocation0 [shape = 'u32[]', space=smem, size = 0x4, offset = 0x4, fixed_abs, tag = 'smem constant byte address 0x4 - core index']
  #allocation1 [shape = 'u32[144,128]{1,0:T(1,128)}', space=vmem, size = 0x12000, scoped, tag = 'internal scratch']
  %s0 = inlined_call_operand.vmem [shape: s8[64,64], index: 0, kind: input, shape index: {}]
  %s1 = inlined_call_operand.vmem [shape: f32[64,1], index: 1, kind: input, shape index: {}]
  %s2 = inlined_call_operand.vmem [shape: f32[8,64], index: 2, kind: input, shape index: {}]
  %s3 = inlined_call_operand.vmem [shape: bf16[64,9], index: 3, kind: input, shape index: {}]
  %s4 = inlined_call_operand.vmem [shape: f32[64,8], index: 4, kind: output, shape index: {}]
  %s5 = sld [smem:[#allocation0]]
  $region49: #{daegce_forward.8} parent=0
    _
  %s7 = ssub.s32 1, %s5
  %s8 = scalar_select 0, %s7, %s5
  loop: start=0, step=1, limit=4
  $region2: #{daegce_forward.8} parent=0 // loop_pre_header
    _
  $region3: #{daegce_forward.8} parent=0 // loop_header
    %s10 = sphi 0, %s14
    %p11 = scmp.ge.s32.totalorder %s10, 4
    %s20 = sphi 0, %s22
    %s23 = sphi 0, %s20
    %s24 = sphi 0, %s23
    %s40 = sphi 0, %s24
    %s46 = sphi 0, %s48
    %s49 = sphi 0, %s46
    %s50 = sphi 0, %s49
    %s66 = sphi 0, %s50
    %s70 = sphi 0, %s70
    %s72 = sphi 0, %s70
    %s73 = sphi 0, %s72
    %s87 = sphi 0, %s73
    %s91 = sphi 0, %s91
    %s93 = sphi 0, %s91
    %s94 = sphi 0, %s93
    %s108 = sphi 0, %s94
    %s114 = sphi 0, %s116
    %s117 = sphi 0, %s114
    %s118 = sphi 0, %s117
    %s134 = sphi 0, %s118
  $region4: #{daegce_forward.8} parent=0 // loop_header_branch
    %13 = sbr.rel (%p11) target = $region8
  $region5: #{daegce_forward.8} parent=0 // loop_body
    %s15 = ssub.s32 %s10, 1
    %s16 = ssub.s32 %s10, 2
    %s17 = sadd.s32 %s10, 1
    %s18 = ssub.s32 %s10, %s17
    %p19 = scmp.eq.s32.totalorder %s18, 0
    %s21 = sadd.s32 %s20, 1
    %s22 = scalar_select %p19, %s20, %s21
    %p25 = pneg %p19
    %p26 = scmp.eq.s32.totalorder %s10, 1
    %p27 = por %p25, %p26
    %p28 = scmp.ne.s32.totalorder %s20, %s23
    %p29 = scmp.eq.s32.totalorder %s10, 0
    %p30 = por %p28, %p29
    %p31 = scmp.ne.s32.totalorder %s20, %s23
    %p32 = scmp.eq.s32.totalorder %s15, 1
    %p33 = por %p31, %p32
    %p34 = scmp.ne.s32.totalorder %s23, %s24
    %p35 = scmp.eq.s32.totalorder %s15, 0
    %p36 = por %p34, %p35
    %p37 = scmp.ne.s32.totalorder %s23, %s24
    %p38 = scmp.eq.s32.totalorder %s16, 1
    %p39 = por %p37, %p38
    %p41 = scmp.ne.s32.totalorder %s24, %s40
    %p42 = scmp.eq.s32.totalorder %s16, 0
    %p43 = por %p41, %p42
    %s44 = ssub.s32 %s10, %s17
    %p45 = scmp.eq.s32.totalorder %s44, 0
    %s47 = sadd.s32 %s46, 1
    %s48 = scalar_select %p45, %s46, %s47
    %p51 = pneg %p45
    %p52 = scmp.eq.s32.totalorder %s10, 1
    %p53 = por %p51, %p52
    %p54 = scmp.ne.s32.totalorder %s46, %s49
    %p55 = scmp.eq.s32.totalorder %s10, 0
    %p56 = por %p54, %p55
    %p57 = scmp.ne.s32.totalorder %s46, %s49
    %p58 = scmp.eq.s32.totalorder %s15, 1
    %p59 = por %p57, %p58
    %p60 = scmp.ne.s32.totalorder %s49, %s50
    %p61 = scmp.eq.s32.totalorder %s15, 0
    %p62 = por %p60, %p61
    %p63 = scmp.ne.s32.totalorder %s49, %s50
    %p64 = scmp.eq.s32.totalorder %s16, 1
    %p65 = por %p63, %p64
    %p67 = scmp.ne.s32.totalorder %s50, %s66
    %p68 = scmp.eq.s32.totalorder %s16, 0
    %p69 = por %p67, %p68
    %s71 = sadd.s32 %s70, 1
    %p74 = scmp.eq.s32.totalorder %s10, 1
    %p75 = scmp.ne.s32.totalorder %s70, %s72
    %p76 = scmp.eq.s32.totalorder %s10, 0
    %p77 = por %p75, %p76
    %p78 = scmp.ne.s32.totalorder %s70, %s72
    %p79 = scmp.eq.s32.totalorder %s15, 1
    %p80 = por %p78, %p79
    %p81 = scmp.ne.s32.totalorder %s72, %s73
    %p82 = scmp.eq.s32.totalorder %s15, 0
    %p83 = por %p81, %p82
    %p84 = scmp.ne.s32.totalorder %s72, %s73
    %p85 = scmp.eq.s32.totalorder %s16, 1
    %p86 = por %p84, %p85
    %p88 = scmp.ne.s32.totalorder %s73, %s87
    %p89 = scmp.eq.s32.totalorder %s16, 0
    %p90 = por %p88, %p89
    %s92 = sadd.s32 %s91, 1
    %p95 = scmp.eq.s32.totalorder %s10, 1
    %p96 = scmp.ne.s32.totalorder %s91, %s93
    %p97 = scmp.eq.s32.totalorder %s10, 0
    %p98 = por %p96, %p97
    %p99 = scmp.ne.s32.totalorder %s91, %s93
    %p100 = scmp.eq.s32.totalorder %s15, 1
    %p101 = por %p99, %p100
    %p102 = scmp.ne.s32.totalorder %s93, %s94
    %p103 = scmp.eq.s32.totalorder %s15, 0
    %p104 = por %p102, %p103
    %p105 = scmp.ne.s32.totalorder %s93, %s94
    %p106 = scmp.eq.s32.totalorder %s16, 1
    %p107 = por %p105, %p106
    %p109 = scmp.ne.s32.totalorder %s94, %s108
    %p110 = scmp.eq.s32.totalorder %s16, 0
    %p111 = por %p109, %p110
    %s112 = ssub.s32 %s10, %s17
    %p113 = scmp.eq.s32.totalorder %s112, 0
    %s115 = sadd.s32 %s114, 1
    %s116 = scalar_select %p113, %s114, %s115
    %p119 = pneg %p113
    %p120 = scmp.eq.s32.totalorder %s10, 1
    %p121 = por %p119, %p120
    %p122 = scmp.ne.s32.totalorder %s114, %s117
    %p123 = scmp.eq.s32.totalorder %s10, 0
    %p124 = por %p122, %p123
    %p125 = scmp.ne.s32.totalorder %s114, %s117
    %p126 = scmp.eq.s32.totalorder %s15, 1
    %p127 = por %p125, %p126
    %p128 = scmp.ne.s32.totalorder %s117, %s118
    %p129 = scmp.eq.s32.totalorder %s15, 0
    %p130 = por %p128, %p129
    %p131 = scmp.ne.s32.totalorder %s117, %s118
    %p132 = scmp.eq.s32.totalorder %s16, 1
    %p133 = por %p131, %p132
    %p135 = scmp.ne.s32.totalorder %s118, %s134
    %p136 = scmp.eq.s32.totalorder %s16, 0
    %p137 = por %p135, %p136
    %p138 = scmp.le.s32.totalorder 1, %s10
    %p139 = scmp.lt.s32.totalorder %s10, 3
    %p140 = pnand %p138, %p139
    %p141 = pneg %p140
    // Predicated region
    $region9: #{daegce_forward.8} parent=5 // pred_check
      _
    $region10: #{daegce_forward.8} parent=5 // pred_check_branch
      %143 = sbr.rel (%p140) target = $region12
    $region11: #{daegce_forward.8} parent=5 // pred_region
      %s144 = ssub.s32 %s10, 1
      // Predicated region
      $region13: #{daegce_forward.8} parent=11 // pred_check
        %p145 = pneg %p83
      $region14: #{daegce_forward.8} parent=11 // pred_check_branch
        %147 = sbr.rel (%p145) target = $region16
      $region15: #{daegce_forward.8} parent=11 // pred_region
        _
      $region16: #{daegce_forward.8} parent=11 // pred_fallthru
        _
      // Predicated region
      $region17: #{daegce_forward.8} parent=11 // pred_check
        %p148 = pneg %p104
      $region18: #{daegce_forward.8} parent=11 // pred_check_branch
        %150 = sbr.rel (%p148) target = $region20
      $region19: #{daegce_forward.8} parent=11 // pred_region
        _
      $region20: #{daegce_forward.8} parent=11 // pred_fallthru
        _
    $region12: #{daegce_forward.8} parent=5 // pred_fallthru
      _
    %p151 = scmp.lt.s32.totalorder %s10, 2
    // Predicated region
    $region21: #{daegce_forward.8} parent=5 // pred_check
      %p152 = pneg %p151
    $region22: #{daegce_forward.8} parent=5 // pred_check_branch
      %154 = sbr.rel (%p152) target = $region24
    $region23: #{daegce_forward.8} parent=5 // pred_region
      // Predicated region
      $region25: #{daegce_forward.8} parent=23 // pred_check
        %p155 = pneg %p30
      $region26: #{daegce_forward.8} parent=23 // pred_check_branch
        %157 = sbr.rel (%p155) target = $region28
      $region27: #{daegce_forward.8} parent=23 // pred_region
        %p158 = scmp.lt.s32.totalorder %s10, 1
        %s159 = scalar_select %p158, %s10, 1
        %s160 = smul.addr %s159, 8
        %s161 = scalar_lea.vmem %s0, %s160
      $region28: #{daegce_forward.8} parent=23 // pred_fallthru
        _
      // Predicated region
      $region29: #{daegce_forward.8} parent=23 // pred_check
        %p162 = pneg %p56
      $region30: #{daegce_forward.8} parent=23 // pred_check_branch
        %164 = sbr.rel (%p162) target = $region32
      $region31: #{daegce_forward.8} parent=23 // pred_region
        %s165 = smul.u32 4, %s10
        %p166 = scmp.lt.s32.totalorder %s165, 7
        %s167 = scalar_select %p166, %s165, 7
        %s168 = smul.addr %s167, 8
        %s169 = scalar_lea.vmem %s1, %s168
        %s170 = smul.u32 4, %s10
      $region32: #{daegce_forward.8} parent=23 // pred_fallthru
        _
    $region24: #{daegce_forward.8} parent=5 // pred_fallthru
      _
    %p171 = scmp.le.s32.totalorder 1, %s10
    %p172 = scmp.lt.s32.totalorder %s10, 3
    %p173 = pnand %p171, %p172
    %p174 = pneg %p173
    // Predicated region
    $region33: #{daegce_forward.8} parent=5 // pred_check
      _
    $region34: #{daegce_forward.8} parent=5 // pred_check_branch
      %176 = sbr.rel (%p173) target = $region36
    $region35: #{daegce_forward.8} parent=5 // pred_region
      %s177 = ssub.s32 %s10, 1
      %p178 = scmp.lt.s32.totalorder %s15, 1
      %s179 = scalar_select %p178, %s15, 1
      %s180 = smul.addr %s179, 8
      %s181 = scalar_lea.vmem %s0, %s180
      %p182 = pneg %p36
      %p183 = pneg %p33
      %s184 = smul.u32 4, %s15
      %p185 = scmp.lt.s32.totalorder %s184, 7
      %s186 = scalar_select %p185, %s184, 7
      %s187 = smul.addr %s186, 8
      %s188 = scalar_lea.vmem %s1, %s187
      %p189 = pneg %p62
      %p190 = pneg %p59
      %p191 = pneg %p83
      %p192 = pneg %p80
      %p193 = pneg %p104
      %p194 = pneg %p101
      %p195 = pneg %p130
      %p196 = pneg %p127
      %s197 = smul.u32 4, %s15
      %p198 = scmp.lt.s32.totalorder %s197, 7
      %s199 = scalar_select %p198, %s197, 7
      %s200 = smul.addr %s199, 8
      %s201 = scalar_lea.vmem %s4, %s200
      %p202 = scmp.lt.s32.totalorder %s15, 1
      %s203 = scalar_select %p202, %s15, 1
      %s204 = smul.addr %s203, 8
      %s205 = scalar_lea.vmem %s0, %s204
      %s206 = smul.u32 4, %s15
      %p207 = scmp.lt.s32.totalorder %s206, 7
      %s208 = scalar_select %p207, %s206, 7
      %s209 = smul.addr %s208, 8
      %s210 = scalar_lea.vmem %s1, %s209
      %s211 = smul.u32 4, %s15
      %s212 = smul.u32 4, %s15
      %p213 = scmp.lt.s32.totalorder %s212, 7
      %s214 = scalar_select %p213, %s212, 7
      %s215 = smul.addr %s214, 8
      %s216 = scalar_lea.vmem %s4, %s215
      %s217 = smul.u32 4, %s15
      %v221 = vld [vmem:[%s205] sm:$0xff]
      %vm222 = vnez %v221
      %v223 = vld [vmem:[%s210] sm:$0xff]
      %v224 = vld [vmem:[%s210 + $0x8] sm:$0xff]
      %v225 = vld [vmem:[%s210 + $0x10] sm:$0xff]
      %v226 = vld [vmem:[%s210 + $0x18] sm:$0xff]
      %v227 = vld [vmem:[%s2] sm:$0xff]
      %v228 = vld [vmem:[%s3] sm:$0xf]
      %v229 = vld [vmem:[%s3 + $0x4] sm:$0xf]
      %v230 = vld [vmem:[%s3 + $0x8] sm:$0xf]
      %v231 = vld [vmem:[%s3 + $0xc] sm:$0xf]
      %v232 = vld [vmem:[%s3 + $0x10] sm:$0xf]
      %v233 = vld [vmem:[%s3 + $0x14] sm:$0xf]
      %v234 = vld [vmem:[%s3 + $0x18] sm:$0xf]
      %v235 = vld [vmem:[%s3 + $0x1c] sm:$0xf]
      %237 = vset.pattern.permute.xlu0 0
      %238 = vperm.xlu0 %237, %v223
      %v239 = vpop.permute.xlu0 %238
      %242 = vset.pattern.permute.xlu0 0
      %243 = vperm.xlu0 %242, %v224
      %v244 = vpop.permute.xlu0 %243
      %247 = vset.pattern.permute.xlu0 0
      %248 = vperm.xlu0 %247, %v225
      %v249 = vpop.permute.xlu0 %248
      %252 = vset.pattern.permute.xlu0 0
      %253 = vperm.xlu0 %252, %v226
      %v254 = vpop.permute.xlu0 %253
      %v256 = vlaneseq
      %v257 = vshrl.u32 %v256, 7
      %v258 = vsub.s32 0, %v257
      %v259 = vrot.slane %v227, %v258
      %v260 = vadd.f32 %v239, %v259
      %v261 = vadd.f32 %v244, %v259
      %v262 = vadd.f32 %v249, %v259
      %v263 = vadd.f32 %v254, %v259
      %v264 = vsub.f32 0.0, %v260
      %v265 = vsub.f32 0.0, %v261
      %v266 = vsub.f32 0.0, %v262
      %v267 = vsub.f32 0.0, %v263
      %v268 = vmul.f32 %v260, -0.2
      %v269 = vmul.f32 %v261, -0.2
      %v270 = vmul.f32 %v262, -0.2
      %v271 = vmul.f32 %v263, -0.2
      %v272 = vmin.f32 %v264, %v268
      %v273 = vmin.f32 %v265, %v269
      %v274 = vmin.f32 %v266, %v270
      %v275 = vmin.f32 %v267, %v271
      %v276 = vsel %vm222, 16843009, 0
      %v277 = vunpack.c.0.s8 %v276
      %v278 = vunpack.c.1.s8 %v276
      %v279 = vunpack.c.2.s8 %v276
      %v280 = vunpack.c.3.s8 %v276
      %v281 = vpack.c.b16 %v277, %v277
      %v282 = vpack.c.b8 %v281, %v281
      %v283 = vpack.c.b16 %v278, %v278
      %v284 = vpack.c.b8 %v283, %v283
      %v285 = vpack.c.b16 %v279, %v279
      %v286 = vpack.c.b8 %v285, %v285
      %v287 = vpack.c.b16 %v280, %v280
      %v288 = vpack.c.b8 %v287, %v287
      %vm289 = vnez %v282
      %vm290 = vnez %v284
      %vm291 = vnez %v286
      %vm292 = vnez %v288
      %v293 = vsel %vm289, 16843009, 0
      %v294 = vsel %vm290, 16843009, 0
      %v295 = vsel %vm291, 16843009, 0
      %v296 = vsel %vm292, 16843009, 0
      %v297 = vunpack.c.0.s8 %v293
      %v298 = vunpack.c.0.s8 %v294
      %v299 = vunpack.c.0.s8 %v295
      %v300 = vunpack.c.0.s8 %v296
      %vm301 = vcmp.ne.s32.totalorder %v297, 0
      %vm302 = vcmp.ne.s32.totalorder %v298, 0
      %vm303 = vcmp.ne.s32.totalorder %v299, 0
      %vm304 = vcmp.ne.s32.totalorder %v300, 0
      %v305 = vsel %vm301, %v272, -1e+30
      %v306 = vsel %vm302, %v273, -1e+30
      %v307 = vsel %vm303, %v274, -1e+30
      %v308 = vsel %vm304, %v275, -1e+30
      %v309 = vpack.c.bf16 %v306, %v305
      %v310 = vpack.c.bf16 %v308, %v307
      %v312 = vmul.bf16 %v309, 1069105081
      %v313 = vpow.bf16.pop %v312
      %v315 = vmul.bf16 %v310, 1069105081
      %v316 = vpow.bf16.pop %v315
      %v325 = vunpack.c.l.b16 %v228
      %v326 = vunpack.c.l.b16 %v229
      %v327 = vunpack.c.l.b16 %v230
      %v328 = vunpack.c.l.b16 %v231
      %v329 = vunpack.c.l.b16 %v232
      %v330 = vunpack.c.l.b16 %v233
      %v331 = vunpack.c.l.b16 %v234
      %v332 = vunpack.c.l.b16 %v235
      %v333 = vpack.c.b16 %v326, %v325
      %v334 = vpack.c.b16 %v328, %v327
      %v335 = vpack.c.b16 %v330, %v329
      %v336 = vpack.c.b16 %v332, %v331
      %vm341 = vcmask 523264
      %v343 = vsel %vm341, %v313, 0
      %v346 = vsel %vm341, %v316, 0
      %348 = vmatprep.subr.bf16.mxu0 0
      %349 = vmatpush1.bf16.msra.mxu0 0
      %350 = vmatprep.subr.bf16.mxu0 0
      %351 = vmatpush1.bf16.msra.mxu0 0
      %352 = vmatprep.subr.bf16.mxu0 0
      %353 = vmatpush1.bf16.msra.mxu0 0
      %354 = vmatprep.subr.bf16.mxu0 0
      %355 = vmatpush1.bf16.msra.mxu0 0
      %356 = vmatprep.subr.bf16.mxu0 0
      %357 = vmatpush1.bf16.msra.mxu0 %v336
      %358 = vmatprep.subr.bf16.mxu0 0
      %359 = vmatpush1.bf16.msra.mxu0 %v335
      %360 = vmatprep.subr.bf16.mxu0 0
      %361 = vmatpush1.bf16.msra.mxu0 %v334
      %362 = vmatprep.subr.bf16.mxu0 0
      %363 = vmatpush1.bf16.msra.mxu0 %v333
      %364 = vmatprep.subr.bf16.mxu0 0
      %365 = vmatpush2.bf16.msra.mxu0 0
      %366 = vmatprep.subr.bf16.mxu0 0
      %367 = vmatpush2.bf16.msra.mxu0 0
      %368 = vmatprep.subr.bf16.mxu0 0
      %369 = vmatpush2.bf16.msra.mxu0 0
      %370 = vmatprep.subr.bf16.mxu0 0
      %371 = vmatpush2.bf16.msra.mxu0 0
      %372 = vmatprep.subr.bf16.mxu0 0
      %373 = vmatpush2.bf16.msra.mxu0 0
      %374 = vmatprep.subr.bf16.mxu0 0
      %375 = vmatpush2.bf16.msra.mxu0 0
      %376 = vmatprep.subr.bf16.mxu0 0
      %377 = vmatpush2.bf16.msra.mxu0 0
      %378 = vmatprep.subr.bf16.mxu0 0
      %379 = vmatpush2.bf16.msra.mxu0 0
      %380 = vmatprep.mubr.bf16.mxu0 0
      %381 = vmatmul.mubr.bf16.gmra.mxu0 %v343
      %v382 = vpop.f32.mrf.mxu0
      %v383 = vadd.f32 0.0, %v382
      %v384 = vpop.f32.mrf.mxu0
      %v385 = vpop.f32.mrf.mxu0
      %v386 = vadd.f32 0.0, %v385
      %v387 = vpop.f32.mrf.mxu0
      %388 = vmatprep.mubr.bf16.mxu0 0
      %389 = vmatmul.mubr.bf16.gmra.mxu0 %v346
      %v390 = vpop.f32.mrf.mxu0
      %v391 = vadd.f32 0.0, %v390
      %v392 = vpop.f32.mrf.mxu0
      %v393 = vpop.f32.mrf.mxu0
      %v394 = vadd.f32 0.0, %v393
      %v395 = vpop.f32.mrf.mxu0
      %396 = vdwg.mxu0
      %v397 = vmax.f32 %v383, 1e-20
      %v398 = vmax.f32 %v386, 1e-20
      %v399 = vmax.f32 %v391, 1e-20
      %v400 = vmax.f32 %v394, 1e-20
      %v401 = vrcp.pop %v397
      %v402 = vrcp.pop %v398
      %v403 = vrcp.pop %v399
      %v404 = vrcp.pop %v400
      %406 = vset.pattern.permute.xlu0 8
      %407 = vperm.xlu0 %406, %v401
      %v408 = vpop.permute.xlu0 %407
      %411 = vset.pattern.permute.xlu0 8
      %412 = vperm.xlu0 %411, %v402
      %v413 = vpop.permute.xlu0 %412
      %416 = vset.pattern.permute.xlu0 8
      %417 = vperm.xlu0 %416, %v403
      %v418 = vpop.permute.xlu0 %417
      %421 = vset.pattern.permute.xlu0 8
      %422 = vperm.xlu0 %421, %v404
      %v423 = vpop.permute.xlu0 %422
      %v425 = vmul.f32 %v383, %v408
      %v426 = vmul.f32 %v386, %v413
      %v427 = vmul.f32 %v391, %v418
      %v428 = vmul.f32 %v394, %v423
      %vm429 = vcmp.gt.f32.partialorder %v425, 0.0
      %vm430 = vcmp.gt.f32.partialorder %v426, 0.0
      %vm431 = vcmp.gt.f32.partialorder %v427, 0.0
      %vm432 = vcmp.gt.f32.partialorder %v428, 0.0
      %v433 = vmul.f32 %v425, 1.442695
      %v434 = vpow.pop %v433
      %v435 = vmul.f32 %v426, 1.442695
      %v436 = vpow.pop %v435
      %v437 = vmul.f32 %v427, 1.442695
      %v438 = vpow.pop %v437
      %v439 = vmul.f32 %v428, 1.442695
      %v440 = vpow.pop %v439
      %v441 = vsub.f32 %v434, 1.0
      %v442 = vsub.f32 %v436, 1.0
      %v443 = vsub.f32 %v438, 1.0
      %v444 = vsub.f32 %v440, 1.0
      %v445 = vsel %vm429, %v425, %v441
      %v446 = vsel %vm430, %v426, %v442
      %v447 = vsel %vm431, %v427, %v443
      %v448 = vsel %vm432, %v428, %v444
      %vm449 = vcmask 64512
      %450 = vst.msk [vmem:[%s216] sm:$0xff] %vm449, %v445
      %451 = vst.msk [vmem:[%s216 + $0x8] sm:$0xff] %vm449, %v446
      %452 = vst.msk [vmem:[%s216 + $0x10] sm:$0xff] %vm449, %v447
      %453 = vst.msk [vmem:[%s216 + $0x18] sm:$0xff] %vm449, %v448
      %s454 = smul.u32 4, %s15
      %p455 = scmp.lt.s32.totalorder %s454, 7
      %s456 = scalar_select %p455, %s454, 7
      %s457 = smul.addr %s456, 8
      %s458 = scalar_lea.vmem %s4, %s457
      // Predicated region
      $region37: #{daegce_forward.8} parent=35 // pred_check
        %p459 = pneg %p127
      $region38: #{daegce_forward.8} parent=35 // pred_check_branch
        %461 = sbr.rel (%p459) target = $region40
      $region39: #{daegce_forward.8} parent=35 // pred_region
        %s462 = smul.u32 4, %s15
      $region40: #{daegce_forward.8} parent=35 // pred_fallthru
        _
    $region36: #{daegce_forward.8} parent=5 // pred_fallthru
      _
    %p463 = scmp.le.s32.totalorder 2, %s10
    // Predicated region
    $region41: #{daegce_forward.8} parent=5 // pred_check
      %p464 = pneg %p463
    $region42: #{daegce_forward.8} parent=5 // pred_check_branch
      %466 = sbr.rel (%p464) target = $region44
    $region43: #{daegce_forward.8} parent=5 // pred_region
      %s467 = ssub.s32 %s10, 2
      // Predicated region
      $region45: #{daegce_forward.8} parent=43 // pred_check
        %p468 = pneg %p133
      $region46: #{daegce_forward.8} parent=43 // pred_check_branch
        %470 = sbr.rel (%p468) target = $region48
      $region47: #{daegce_forward.8} parent=43 // pred_region
        %s471 = smul.u32 4, %s16
        %p472 = scmp.lt.s32.totalorder %s471, 7
        %s473 = scalar_select %p472, %s471, 7
        %s474 = smul.addr %s473, 8
        %s475 = scalar_lea.vmem %s4, %s474
      $region48: #{daegce_forward.8} parent=43 // pred_fallthru
        _
    $region44: #{daegce_forward.8} parent=5 // pred_fallthru
      _
  $region6: #{daegce_forward.8} parent=0 // loop_footer
    %s14 = sadd.s32 1, %s10
  $region7: #{daegce_forward.8} parent=0 // loop_footer_branch
    %9 = sbr.rel target = $region3
  $region8: #{daegce_forward.8} parent=0 // loop_exit
    _

// kernel: daegce_forward.9
$region0: #{daegce_forward.9}
  #allocation0 [shape = 'u32[]', space=smem, size = 0x4, offset = 0x4, fixed_abs, tag = 'smem constant byte address 0x4 - core index']
  #allocation1 [shape = 'u32[144,128]{1,0:T(1,128)}', space=vmem, size = 0x12000, scoped, tag = 'internal scratch']
  %s0 = inlined_call_operand.vmem [shape: f32[64,8], index: 0, kind: input, shape index: {}, may-alias: {0,1}]
  %s1 = inlined_call_operand.vmem [shape: f32[64,8], index: 1, kind: input, shape index: {}, may-alias: {0,1}]
  %s2 = inlined_call_operand.hbm [shape: f32[64,64], index: 2, kind: output, shape index: {}]
  %s3 = sld [smem:[#allocation0]]
  $region18: #{daegce_forward.9} parent=0
    _
  %s5 = ssub.s32 1, %s3
  %s6 = scalar_select 0, %s5, %s3
  $region1: #{daegce_forward.9} parent=0
    #allocation2 [shape = 'u8[32768]{0}', space=vmem, size = 0x8000, scoped, tag = 'output window, operand 0, single buffered']
    #allocation3 [shape = 's32[1]{0}', space=sflag, size = 0x4, scoped, tag = 'scoped memory for daegce_forward.9']
    %7 = vsyncpa [#allocation3], 0
    // Predicated region
    $region2: #{daegce_forward.9} parent=1 // pred_check
      _
    $region3: #{daegce_forward.9} parent=1 // pred_check_branch
      %9 = sbr.rel (0) target = $region5
    $region4: #{daegce_forward.9} parent=1 // pred_region
      _
    $region5: #{daegce_forward.9} parent=1 // pred_fallthru
      _
    // Predicated region
    $region6: #{daegce_forward.9} parent=1 // pred_check
      _
    $region7: #{daegce_forward.9} parent=1 // pred_check_branch
      %11 = sbr.rel (0) target = $region9
    $region8: #{daegce_forward.9} parent=1 // pred_region
      _
    $region9: #{daegce_forward.9} parent=1 // pred_fallthru
      _
    %v12 = vld [vmem:[%s0] sm:$0xff]
    %v13 = vld [vmem:[%s0 + $0x8] sm:$0xff]
    %v14 = vld [vmem:[%s0 + $0x10] sm:$0xff]
    %v15 = vld [vmem:[%s0 + $0x18] sm:$0xff]
    %v16 = vld [vmem:[%s0 + $0x20] sm:$0xff]
    %v17 = vld [vmem:[%s0 + $0x28] sm:$0xff]
    %v18 = vld [vmem:[%s0 + $0x30] sm:$0xff]
    %v19 = vld [vmem:[%s0 + $0x38] sm:$0xff]
    %v20 = vld [vmem:[%s1] sm:$0xff]
    %v21 = vld [vmem:[%s1 + $0x8] sm:$0xff]
    %v22 = vld [vmem:[%s1 + $0x10] sm:$0xff]
    %v23 = vld [vmem:[%s1 + $0x18] sm:$0xff]
    %v24 = vld [vmem:[%s1 + $0x20] sm:$0xff]
    %v25 = vld [vmem:[%s1 + $0x28] sm:$0xff]
    %v26 = vld [vmem:[%s1 + $0x30] sm:$0xff]
    %v27 = vld [vmem:[%s1 + $0x38] sm:$0xff]
    %vm28 = vcmask 64512
    %v30 = vsel %vm28, %v12, 0
    %v33 = vsel %vm28, %v13, 0
    %v36 = vsel %vm28, %v14, 0
    %v39 = vsel %vm28, %v15, 0
    %v42 = vsel %vm28, %v16, 0
    %v45 = vsel %vm28, %v17, 0
    %v48 = vsel %vm28, %v18, 0
    %v51 = vsel %vm28, %v19, 0
    %v54 = vsel %vm28, %v20, 0
    %v57 = vsel %vm28, %v21, 0
    %v60 = vsel %vm28, %v22, 0
    %v63 = vsel %vm28, %v23, 0
    %v66 = vsel %vm28, %v24, 0
    %v69 = vsel %vm28, %v25, 0
    %v72 = vsel %vm28, %v26, 0
    %v75 = vsel %vm28, %v27, 0
    %77 = vmatprep.subr.mxu0 0.0
    %78 = vmatpush1.xpose.msra.mxu0 0.0
    %79 = vmatprep.subr.mxu0 0.0
    %80 = vmatpush1.xpose.msra.mxu0 0.0
    %81 = vmatprep.subr.mxu0 0.0
    %82 = vmatpush1.xpose.msra.mxu0 0.0
    %83 = vmatprep.subr.mxu0 0.0
    %84 = vmatpush1.xpose.msra.mxu0 0.0
    %85 = vmatprep.subr.mxu0 0.0
    %86 = vmatpush1.xpose.msra.mxu0 0.0
    %87 = vmatprep.subr.mxu0 0.0
    %88 = vmatpush1.xpose.msra.mxu0 0.0
    %89 = vmatprep.subr.mxu0 0.0
    %90 = vmatpush1.xpose.msra.mxu0 0.0
    %91 = vmatprep.subr.mxu0 0.0
    %92 = vmatpush1.xpose.msra.mxu0 0.0
    %93 = vmatprep.subr.mxu0 0.0
    %94 = vmatpush1.xpose.msra.mxu0 %v75
    %95 = vmatprep.subr.mxu0 0.0
    %96 = vmatpush1.xpose.msra.mxu0 %v72
    %97 = vmatprep.subr.mxu0 0.0
    %98 = vmatpush1.xpose.msra.mxu0 %v69
    %99 = vmatprep.subr.mxu0 0.0
    %100 = vmatpush1.xpose.msra.mxu0 %v66
    %101 = vmatprep.subr.mxu0 0.0
    %102 = vmatpush1.xpose.msra.mxu0 %v63
    %103 = vmatprep.subr.mxu0 0.0
    %104 = vmatpush1.xpose.msra.mxu0 %v60
    %105 = vmatprep.subr.mxu0 0.0
    %106 = vmatpush1.xpose.msra.mxu0 %v57
    %107 = vmatprep.subr.mxu0 0.0
    %108 = vmatpush1.xpose.msra.mxu0 %v54
    %109 = vmatprep.subr.mxu0 0.0
    %110 = vmatpush2.xpose.msra.mxu0 0.0
    %111 = vmatprep.subr.mxu0 0.0
    %112 = vmatpush2.xpose.msra.mxu0 0.0
    %113 = vmatprep.subr.mxu0 0.0
    %114 = vmatpush2.xpose.msra.mxu0 0.0
    %115 = vmatprep.subr.mxu0 0.0
    %116 = vmatpush2.xpose.msra.mxu0 0.0
    %117 = vmatprep.subr.mxu0 0.0
    %118 = vmatpush2.xpose.msra.mxu0 0.0
    %119 = vmatprep.subr.mxu0 0.0
    %120 = vmatpush2.xpose.msra.mxu0 0.0
    %121 = vmatprep.subr.mxu0 0.0
    %122 = vmatpush2.xpose.msra.mxu0 0.0
    %123 = vmatprep.subr.mxu0 0.0
    %124 = vmatpush2.xpose.msra.mxu0 0.0
    %125 = vmatprep.subr.mxu0 0.0
    %126 = vmatpush2.xpose.msra.mxu0 0.0
    %127 = vmatprep.subr.mxu0 0.0
    %128 = vmatpush2.xpose.msra.mxu0 0.0
    %129 = vmatprep.subr.mxu0 0.0
    %130 = vmatpush2.xpose.msra.mxu0 0.0
    %131 = vmatprep.subr.mxu0 0.0
    %132 = vmatpush2.xpose.msra.mxu0 0.0
    %133 = vmatprep.subr.mxu0 0.0
    %134 = vmatpush2.xpose.msra.mxu0 0.0
    %135 = vmatprep.subr.mxu0 0.0
    %136 = vmatpush2.xpose.msra.mxu0 0.0
    %137 = vmatprep.subr.mxu0 0.0
    %138 = vmatpush2.xpose.msra.mxu0 0.0
    %139 = vmatprep.subr.mxu0 0.0
    %140 = vmatpush2.xpose.msra.mxu0 0.0
    %141 = vmatprep.mubr.f32.mxu0 0.0
    %142 = vmatmul.mubr.f32.gmra.mxu0 %v30
    %v143 = vpop.f32.mrf.mxu0
    %v144 = vadd.f32 0.0, %v143
    %v145 = vpop.f32.mrf.mxu0
    %146 = vmatprep.mubr.f32.mxu0 0.0
    %147 = vmatmul.mubr.f32.gmra.mxu0 %v33
    %v148 = vpop.f32.mrf.mxu0
    %v149 = vadd.f32 0.0, %v148
    %v150 = vpop.f32.mrf.mxu0
    %151 = vmatprep.mubr.f32.mxu0 0.0
    %152 = vmatmul.mubr.f32.gmra.mxu0 %v36
    %v153 = vpop.f32.mrf.mxu0
    %v154 = vadd.f32 0.0, %v153
    %v155 = vpop.f32.mrf.mxu0
    %156 = vmatprep.mubr.f32.mxu0 0.0
    %157 = vmatmul.mubr.f32.gmra.mxu0 %v39
    %v158 = vpop.f32.mrf.mxu0
    %v159 = vadd.f32 0.0, %v158
    %v160 = vpop.f32.mrf.mxu0
    %161 = vmatprep.mubr.f32.mxu0 0.0
    %162 = vmatmul.mubr.f32.gmra.mxu0 %v42
    %v163 = vpop.f32.mrf.mxu0
    %v164 = vadd.f32 0.0, %v163
    %v165 = vpop.f32.mrf.mxu0
    %166 = vmatprep.mubr.f32.mxu0 0.0
    %167 = vmatmul.mubr.f32.gmra.mxu0 %v45
    %v168 = vpop.f32.mrf.mxu0
    %v169 = vadd.f32 0.0, %v168
    %v170 = vpop.f32.mrf.mxu0
    %171 = vmatprep.mubr.f32.mxu0 0.0
    %172 = vmatmul.mubr.f32.gmra.mxu0 %v48
    %v173 = vpop.f32.mrf.mxu0
    %v174 = vadd.f32 0.0, %v173
    %v175 = vpop.f32.mrf.mxu0
    %176 = vmatprep.mubr.f32.mxu0 0.0
    %177 = vmatmul.mubr.f32.gmra.mxu0 %v51
    %v178 = vpop.f32.mrf.mxu0
    %v179 = vadd.f32 0.0, %v178
    %v180 = vpop.f32.mrf.mxu0
    %181 = vdwg.mxu0
    %v182 = vxor.u32 %v144, 2147483648
    %v183 = vxor.u32 %v149, 2147483648
    %v184 = vxor.u32 %v154, 2147483648
    %v185 = vxor.u32 %v159, 2147483648
    %v186 = vxor.u32 %v164, 2147483648
    %v187 = vxor.u32 %v169, 2147483648
    %v188 = vxor.u32 %v174, 2147483648
    %v189 = vxor.u32 %v179, 2147483648
    %v190 = vmul.f32 %v182, 1.442695
    %v191 = vpow.pop %v190
    %v192 = vmul.f32 %v183, 1.442695
    %v193 = vpow.pop %v192
    %v194 = vmul.f32 %v184, 1.442695
    %v195 = vpow.pop %v194
    %v196 = vmul.f32 %v185, 1.442695
    %v197 = vpow.pop %v196
    %v198 = vmul.f32 %v186, 1.442695
    %v199 = vpow.pop %v198
    %v200 = vmul.f32 %v187, 1.442695
    %v201 = vpow.pop %v200
    %v202 = vmul.f32 %v188, 1.442695
    %v203 = vpow.pop %v202
    %v204 = vmul.f32 %v189, 1.442695
    %v205 = vpow.pop %v204
    %v206 = vadd.f32 %v191, 1.0
    %v207 = vadd.f32 %v193, 1.0
    %v208 = vadd.f32 %v195, 1.0
    %v209 = vadd.f32 %v197, 1.0
    %v210 = vadd.f32 %v199, 1.0
    %v211 = vadd.f32 %v201, 1.0
    %v212 = vadd.f32 %v203, 1.0
    %v213 = vadd.f32 %v205, 1.0
    %v214 = vrcp.pop %v206
    %v215 = vmul.f32 1.0, %v214
    %v216 = vrcp.pop %v207
    %v217 = vmul.f32 1.0, %v216
    %v218 = vrcp.pop %v208
    %v219 = vmul.f32 1.0, %v218
    %v220 = vrcp.pop %v209
    %v221 = vmul.f32 1.0, %v220
    %v222 = vrcp.pop %v210
    %v223 = vmul.f32 1.0, %v222
    %v224 = vrcp.pop %v211
    %v225 = vmul.f32 1.0, %v224
    %v226 = vrcp.pop %v212
    %v227 = vmul.f32 1.0, %v226
    %v228 = vrcp.pop %v213
    %v229 = vmul.f32 1.0, %v228
    %vm230 = vcmask 523264
    %231 = vst.msk [vmem:[#allocation2] sm:$0xff] %vm230, %v215
    %232 = vst.msk [vmem:[#allocation2 + $0x8] sm:$0xff] %vm230, %v217
    %233 = vst.msk [vmem:[#allocation2 + $0x10] sm:$0xff] %vm230, %v219
    %234 = vst.msk [vmem:[#allocation2 + $0x18] sm:$0xff] %vm230, %v221
    %235 = vst.msk [vmem:[#allocation2 + $0x20] sm:$0xff] %vm230, %v223
    %236 = vst.msk [vmem:[#allocation2 + $0x28] sm:$0xff] %vm230, %v225
    %237 = vst.msk [vmem:[#allocation2 + $0x30] sm:$0xff] %vm230, %v227
    %238 = vst.msk [vmem:[#allocation2 + $0x38] sm:$0xff] %vm230, %v229
    // Predicated region
    $region10: #{daegce_forward.9} parent=1 // pred_check
      _
    $region11: #{daegce_forward.9} parent=1 // pred_check_branch
      %240 = sbr.rel (0) target = $region13
    $region12: #{daegce_forward.9} parent=1 // pred_region
      %s242 = ssub.s32 1024, 1024
      %243 = vsyncadd [#allocation3], %s242
      %s244 = sshll.u32 [#allocation2], 4
      %s245 = int_to_ptr.vmem [resolvable:$true] %s244
      %250 = dma.vmem_to_hbm [thread:$0]  %s245, 1024, %s2, [#allocation3], 128, 128, 8
    $region13: #{daegce_forward.9} parent=1 // pred_fallthru
      _
    // Predicated region
    $region14: #{daegce_forward.9} parent=1 // pred_check
      _
    $region15: #{daegce_forward.9} parent=1 // pred_check_branch
      %252 = sbr.rel (0) target = $region17
    $region16: #{daegce_forward.9} parent=1 // pred_region
      %253 = dma.done [#allocation3], 1024
    $region17: #{daegce_forward.9} parent=1 // pred_fallthru
      _
    %254 = vsyncpa [#allocation3], 1

</llo_original>
